<compile_context>
chip_gen: v7x
topology: tpu7x:2x2x1
jax: 0.10.0
libtpu: 0.0.40
codegen_flags: <defaults>
</compile_context>

<pallas_src>
import functools
import math

import jax
import jax.numpy as jnp
from jax.experimental import pallas as pl
from jax.experimental.pallas import tpu as pltpu

_NEG_BIG = -1.0e30  # finite "minus infinity": keeps exp()/where() NaN-free


def _round_up(x, m):
    return (x + m - 1) // m * m


def _lcm(a, b):
    return a * b // math.gcd(a, b)


# --------------------------------------------------------------------------------------
# supcon kernel: 2-D grid, online (flash-style) log-sum-exp over column tiles
# --------------------------------------------------------------------------------------
def _supcon_kernel(lab_col_ref, lab_row_ref, col_ids_ref, f_row_ref, f_cols_ref,
                   loss_ref, m_sc, l_sc, sp_sc, spa_sc, *, loss_scale, n_actual, tm):
    i = pl.program_id(0)
    j = pl.program_id(1)

    @pl.when(j == 0)
    def _init():
        m_sc[...] = jnp.full_like(m_sc, _NEG_BIG)
        l_sc[...] = jnp.zeros_like(l_sc)
        sp_sc[...] = jnp.zeros_like(sp_sc)
        spa_sc[...] = jnp.zeros_like(spa_sc)

    # [tm, tn] block of (anchor . contrast) / temperature  (1/temperature folded into the
    # anchor rows wrapper-side).  Pre-transposed resident operand -> plain (1,0) MXU
    # contraction with f32 accumulate; the current column tile is picked on the cheap
    # leading axis of the resident slab.
    adc = jax.lax.dot_general(
        f_row_ref[...], f_cols_ref[j],
        dimension_numbers=(((1,), (0,)), ((), ())),
        preferred_element_type=jnp.float32)

    row_ids = i * tm + jax.lax.broadcasted_iota(jnp.int32, (tm, 1), 0)      # [tm, 1]
    col_ids = col_ids_ref[...]                                              # [1, tn]
    valid = jnp.logical_and(col_ids != row_ids, col_ids < n_actual)         # off-diag & real
    pos = jnp.logical_and(lab_row_ref[...] == lab_col_ref[...], valid)      # positives

    # Online log-sum-exp across column tiles (uniformity denominator).
    adc_m = jnp.where(valid, adc, _NEG_BIG)
    m_new = jnp.maximum(m_sc[...], jnp.max(adc_m, axis=1, keepdims=True))
    l_sc[...] = (jnp.exp(m_sc[...] - m_new) * l_sc[...]
                 + jnp.sum(jnp.exp(adc_m - m_new), axis=1, keepdims=True))
    m_sc[...] = m_new
    # The supcon loss is shift-invariant in the row max, so the positive-side sums can be
    # accumulated on the raw adc values.
    sp_sc[...] += jnp.sum(jnp.where(pos, 1.0, 0.0), axis=1, keepdims=True)
    spa_sc[...] += jnp.sum(jnp.where(pos, adc, 0.0), axis=1, keepdims=True)

    @pl.when(j == pl.num_programs(1) - 1)
    def _finalize():
        sp = sp_sc[...]
        lse = m_sc[...] + jnp.log(l_sc[...])
        lp_num = spa_sc[...] - lse * sp                      # sum(pos*(logits - lse))
        safe = jnp.where(sp > 0.0, sp, 1.0)
        inv = pl.reciprocal(safe, approx=True)
        inv = inv * (2.0 - safe * inv)                       # one Newton step
        loss = (-loss_scale) * lp_num * inv
        ok = jnp.logical_and(sp > 0.0, row_ids < n_actual)   # drop padded / singleton rows
        loss_ref[...] = jnp.where(ok, loss, 0.0).astype(loss_ref.dtype)


# --------------------------------------------------------------------------------------
# expw kernels: row-tiled, full-width columns (exponent is not shift-invariant)
# --------------------------------------------------------------------------------------
def _expw_body(mask, col_ids, f_row_ref, f_allT_ref, loss_ref, *, loss_scale, n_actual, tm):
    i = pl.program_id(0)
    adc = jax.lax.dot_general(
        f_row_ref[...], f_allT_ref[...],
        dimension_numbers=(((1,), (0,)), ((), ())),
        preferred_element_type=jnp.float32)                                 # [tm, n_pad]

    row_ids = i * tm + jax.lax.broadcasted_iota(jnp.int32, (tm, 1), 0)
    valid = jnp.logical_and(col_ids != row_ids, col_ids < n_actual)

    # Reference semantics: row max over the full row (incl. diagonal).  Padded columns
    # dot zero rows -> 0, which never exceeds the non-negative self-similarity, so the
    # plain full-width max is exact.
    logits = adc - jnp.max(adc, axis=1, keepdims=True)

    uni_arg = jnp.where(valid, logits * (1.0 - mask), _NEG_BIG)
    lse = jnp.log(jnp.sum(jnp.exp(uni_arg), axis=1, keepdims=True))         # [tm, 1]

    pos = jnp.where(valid, mask, 0.0)
    sp = jnp.sum(pos, axis=1, keepdims=True)
    lp_num = jnp.sum(pos * logits, axis=1, keepdims=True) - lse * sp

    safe = jnp.where(sp > 0.0, sp, 1.0)
    inv = pl.reciprocal(safe, approx=True)
    inv = inv * (2.0 - safe * inv)
    loss = (-loss_scale) * lp_num * inv
    ok = jnp.logical_and(sp > 0.0, row_ids < n_actual)
    loss_ref[...] = jnp.where(ok, loss, 0.0).astype(loss_ref.dtype)


def _expw_mask_kernel(mask_ref, col_ids_ref, f_row_ref, f_allT_ref, loss_ref, **kw):
    _expw_body(mask_ref[...].astype(jnp.float32), col_ids_ref[...],
               f_row_ref, f_allT_ref, loss_ref, **kw)


def _expw_pair_kernel(lab_col_ref, lab_row_ref, col_ids_ref, f_row_ref, f_allT_ref,
                      loss_ref, *, pairwise_kernel, krnl_sigma, **kw):
    # Mask evaluated in-kernel (EUP/VALU work with slack) -> no [N, N] mask in HBM/VMEM.
    mask = pairwise_kernel(lab_col_ref[...], lab_row_ref[...], krnl_sigma)
    _expw_body(mask.astype(jnp.float32), col_ids_ref[...],
               f_row_ref, f_allT_ref, loss_ref, **kw)


# --------------------------------------------------------------------------------------
# Wrapper
# --------------------------------------------------------------------------------------
def kernelized_supcon_loss(features, labels=None, *, method="supcon",
                           temperature=0.07, base_temperature=0.07,
                           contrast_mode="all", delta_reduction="sum",
                           kernel=None, pairwise_kernel=None, krnl_sigma=1.0,
                           tm=128, tn=None, precision="fp32",
                           vmem_limit_bytes=None):
    """features: [bsz, n_views, n_feats]; labels: [bsz] or None.  Returns scalar loss.

    tm: row-tile size (multiple of 8; 16 for precision='bf16').
    tn: column-tile size for method='supcon' (multiple of 128).  None -> full width for
        N_pad <= 4096, else 2048 (keeps live temporaries bounded on v7x's 64 MiB/TC).
    precision: 'fp32' (exact) or 'bf16' (bf16-fed MXU; halves the resident operand,
        recommended on v7x; introduces ~% level softmax error since 1/temperature is
        folded before the cast).
    Rows with zero positives (singleton classes) contribute 0 instead of NaN (deliberate
    divergence from the PyTorch reference, which divides 0/0).
    """
    if features.ndim != 3:
        raise ValueError("`features` needs to be [bsz, n_views, n_feats]")
    if method == "supcon" and (kernel is not None or pairwise_kernel is not None):
        raise ValueError("Kernel must be none if method=supcon")
    if method != "supcon" and kernel is None and pairwise_kernel is None:
        raise ValueError("Kernel must not be none if method != supcon")
    if delta_reduction not in ("mean", "sum"):
        raise ValueError(f"Invalid reduction {delta_reduction}")
    if method == "threshold":
        # TODO(synk): 'threshold' needs the [N, N, N] delta cube; not implemented.
        raise NotImplementedError("method='threshold' is not implemented in Pallas")
    if contrast_mode != "all":
        # TODO(synk): contrast_mode='one' (anchor = view 0 only) not implemented.
        raise NotImplementedError("only contrast_mode='all' is implemented")

    bsz, n_views, dim = features.shape
    n = bsz * n_views

    mm_dtype = jnp.bfloat16 if precision == "bf16" else jnp.float32
    itemsize = jnp.dtype(mm_dtype).itemsize
    tm = int(tm)
    row_align = 16 if mm_dtype == jnp.bfloat16 else 8
    if tm < row_align or tm % row_align != 0:
        raise ValueError(f"tm must be a positive multiple of {row_align}")

    d_pad = _round_up(dim, 128)
    n_pad0 = _round_up(n, _lcm(tm, 128))
    if method == "supcon":
        if tn is None:
            tn = n_pad0 if n_pad0 <= 4096 else 2048
        tn = int(tn)
        if tn % 128 != 0:
            raise ValueError("tn must be a multiple of 128")
        n_pad = _round_up(n, _lcm(tm, tn))
    else:
        tn = None
        n_pad = n_pad0

    inv_temp = float(1.0 / temperature)
    loss_scale = float(temperature / base_temperature)
    grid_rows = n_pad // tm

    # Batch-major flatten (row permutation of torch's view-major cat; the loss is
    # permutation invariant and this avoids an HBM transpose of the feature tensor).
    feats = features.reshape(n, dim).astype(jnp.float32)
    # Anchor rows carry the 1/temperature fold; the contrast operand is pre-transposed to
    # [d_pad, n_pad] so the in-kernel contraction is (1,0) with no per-tile transposes.
    f_rows = jnp.zeros((n_pad, d_pad), mm_dtype).at[:n, :dim].set(
        (feats * inv_temp).astype(mm_dtype))
    f_colsT = jnp.zeros((d_pad, n_pad), mm_dtype).at[:dim, :n].set(
        feats.T.astype(mm_dtype))

    col_ids = jnp.arange(n_pad, dtype=jnp.int32).reshape(1, n_pad)
    out_shape = jax.ShapeDtypeStruct((n_pad, 1), jnp.float32)

    cost = pl.CostEstimate(
        flops=int(2 * n_pad * n_pad * d_pad),
        transcendentals=int(n_pad * n_pad),
        bytes_accessed=int((f_rows.size + f_colsT.size) * itemsize + n_pad * 12))

    def _vmem_budget(resident_bytes, stream_bytes, live_bytes):
        est = int(resident_bytes + stream_bytes + live_bytes) + (2 << 20)
        try:
            cap = int(pltpu.get_tpu_info().vmem_capacity_bytes * 0.85)
        except Exception:
            cap = 56 << 20  # safe on every current chip (v7x: 64 MiB per TensorCore)
        return int(min(max(est, 32 << 20), cap))

    # ------------------------------------------------------------------ supcon ---------
    if method == "supcon":
        if labels is None:
            lab = jnp.arange(bsz, dtype=jnp.int32)        # SimCLR: sample id as pseudo-label
        else:
            lab = jnp.asarray(labels).reshape(-1)
            if lab.shape[0] != bsz:
                raise ValueError("labels must have shape [bsz]")
            if jnp.issubdtype(lab.dtype, jnp.floating):
                lab = lab.astype(jnp.float32)
            else:
                lab = lab.astype(jnp.int32)               # exact integer compare
        lab_flat = jnp.repeat(lab, n_views)               # batch-major flattening order
        lab_pad = jnp.zeros((n_pad,), lab_flat.dtype).at[:n].set(lab_flat)
        lab_col = lab_pad.reshape(n_pad, 1)
        lab_row = lab_pad.reshape(1, n_pad)

        n_col_tiles = n_pad // tn
        # Per-column-tile slabs: the current tile is indexed on the leading axis in-kernel.
        f_cols3 = f_colsT.reshape(d_pad, n_col_tiles, tn).transpose(1, 0, 2)

        kern = functools.partial(_supcon_kernel, loss_scale=loss_scale, n_actual=n, tm=tm)
        grid = (grid_rows, n_col_tiles)
        args = (lab_col, lab_row, col_ids, f_rows, f_cols3)

        vmem_limit = vmem_limit_bytes or _vmem_budget(
            resident_bytes=f_cols3.size * itemsize,                 # single-buffered resident
            stream_bytes=2 * (tm * d_pad * itemsize + 2 * tm * 128 * 4 + 2 * 8 * tn * 4),
            live_bytes=8 * tm * tn * 4 + 4 * tm * 128 * 4)

        def _run(single_buffer):
            res_kw = {"pipeline_mode": pl.Buffered(1)} if single_buffer else {}
            in_specs = [
                pl.BlockSpec((tm, 1), lambda i, j: (i, 0)),              # anchor labels
                pl.BlockSpec((1, tn), lambda i, j: (0, j)),              # contrast labels
                pl.BlockSpec((1, tn), lambda i, j: (0, j)),              # column ids
                pl.BlockSpec((tm, d_pad), lambda i, j: (i, 0)),          # anchor feature tile
                pl.BlockSpec((n_col_tiles, d_pad, tn),
                             lambda i, j: (0, 0, 0), **res_kw),          # resident contrast
            ]
            return pl.pallas_call(
                kern,
                out_shape=out_shape,
                grid=grid,
                in_specs=in_specs,
                out_specs=pl.BlockSpec((tm, 1), lambda i, j: (i, 0)),
                scratch_shapes=[pltpu.VMEM((tm, 1), jnp.float32)] * 4,
                compiler_params=pltpu.CompilerParams(
                    dimension_semantics=("parallel", "arbitrary"),
                    vmem_limit_bytes=vmem_limit),
                cost_estimate=cost,
            )(*args)

    # ------------------------------------------------------------------ expw -----------
    else:
        common_kw = dict(loss_scale=loss_scale, n_actual=n, tm=tm)
        tail_args = (col_ids, f_rows, f_colsT)

        if pairwise_kernel is not None and labels is not None:
            # In-kernel mask evaluation: no [N, N] mask materialised or streamed.
            lab = jnp.asarray(labels).reshape(-1).astype(jnp.float32)
            lab_flat = jnp.repeat(lab, n_views)
            lab_pad = jnp.zeros((n_pad,), jnp.float32).at[:n].set(lab_flat)
            kern = functools.partial(_expw_pair_kernel, pairwise_kernel=pairwise_kernel,
                                     krnl_sigma=krnl_sigma, **common_kw)
            lead_args = (lab_pad.reshape(n_pad, 1), lab_pad.reshape(1, n_pad))

            def lead_specs(res_kw):
                return [pl.BlockSpec((tm, 1), lambda i: (i, 0)),
                        pl.BlockSpec((1, n_pad), lambda i: (0, 0), **res_kw)]

            stream_bytes = 2 * (tm * d_pad * itemsize + tm * 128 * 4 * 2)
        else:
            # Original-API path: precomputed [bsz, bsz] kernel mask, repeated to the
            # batch-major [N, N] layout and streamed one (tm, n_pad) strip per step.
            # (On v5e, consider pipeline_mode=pl.Buffered(3) on this spec if DMA-bound.)
            if labels is None:
                mask_small = jnp.eye(bsz, dtype=jnp.float32)
            else:
                mask_small = kernel(labels, krnl_sigma=krnl_sigma).astype(jnp.float32)
            mask_big = jnp.repeat(jnp.repeat(mask_small, n_views, axis=0), n_views, axis=1)
            mask_big = jnp.zeros((n_pad, n_pad), jnp.float32).at[:n, :n].set(mask_big)
            kern = functools.partial(_expw_mask_kernel, **common_kw)
            lead_args = (mask_big,)

            def lead_specs(res_kw):
                return [pl.BlockSpec((tm, n_pad), lambda i: (i, 0))]

            stream_bytes = 2 * (tm * n_pad * 4 + tm * d_pad * itemsize + tm * 128 * 4)

        vmem_limit = vmem_limit_bytes or _vmem_budget(
            resident_bytes=f_colsT.size * itemsize + 2 * 8 * n_pad * 4,
            stream_bytes=stream_bytes,
            live_bytes=9 * tm * n_pad * 4)

        def _run(single_buffer):
            res_kw = {"pipeline_mode": pl.Buffered(1)} if single_buffer else {}
            in_specs = lead_specs(res_kw) + [
                pl.BlockSpec((1, n_pad), lambda i: (0, 0), **res_kw),       # column ids
                pl.BlockSpec((tm, d_pad), lambda i: (i, 0)),                # anchor tile
                pl.BlockSpec((d_pad, n_pad), lambda i: (0, 0), **res_kw),   # resident contrast
            ]
            return pl.pallas_call(
                kern,
                out_shape=out_shape,
                grid=(grid_rows,),
                in_specs=in_specs,
                out_specs=pl.BlockSpec((tm, 1), lambda i: (i, 0)),
                compiler_params=pltpu.CompilerParams(
                    dimension_semantics=("parallel",),
                    vmem_limit_bytes=vmem_limit),
                cost_estimate=cost,
            )(*lead_args, *tail_args)

    # Single-buffer the grid-invariant residents when supported; otherwise fall back to
    # Pallas' default buffering (correct, just 2x the resident VMEM).
    try:
        loss_rows = _run(True)
    except Exception:
        loss_rows = _run(False)

    # Mean over the N real anchors (padded / zero-positive rows contribute exactly 0).
    return jnp.sum(loss_rows) / n


# --------------------------------------------------------------------------------------
# Label kernels and a pure-JAX reference mirroring the PyTorch forward
# --------------------------------------------------------------------------------------
def gaussian_kernel(labels, krnl_sigma=1.0):
    lab = labels.reshape(-1, 1).astype(jnp.float32)
    d = lab - lab.T
    return jnp.exp(-(d * d) / (2.0 * krnl_sigma ** 2)) / (math.sqrt(2.0 * math.pi) * krnl_sigma)


def gaussian_kernel_pairwise(a, b, krnl_sigma=1.0):
    # Same Gaussian as gaussian_kernel, written so [tm,1] x [1,N] broadcasts in-kernel.
    d = a - b
    return jnp.exp(-(d * d) / (2.0 * krnl_sigma ** 2)) / (math.sqrt(2.0 * math.pi) * krnl_sigma)


def _reference_loss(features, labels=None, *, method="supcon", temperature=0.07,
                    base_temperature=0.07, kernel=None, krnl_sigma=1.0):
    bsz, n_views, _ = features.shape
    n = bsz * n_views
    # torch.cat(torch.unbind(features, dim=1), dim=0): view-major flatten
    feats = jnp.concatenate([features[:, v, :] for v in range(n_views)], axis=0)
    feats = feats.astype(jnp.float32)
    if labels is None:
        mask_small = jnp.eye(bsz, dtype=jnp.float32)
    elif kernel is None:
        lab = labels.reshape(-1, 1)
        mask_small = (lab == lab.T).astype(jnp.float32)
    else:
        mask_small = kernel(labels, krnl_sigma=krnl_sigma).astype(jnp.float32)
    mask = jnp.tile(mask_small, (n_views, n_views))
    invd = 1.0 - jnp.eye(n, dtype=jnp.float32)
    adc = jnp.matmul(feats, feats.T, precision=jax.lax.Precision.HIGHEST) / temperature
    logits = adc - jnp.max(adc, axis=1, keepdims=True)
    if method == "expw":
        uni = jnp.exp(logits * (1.0 - mask)) * invd
    else:
        uni = jnp.exp(logits) * invd
    lse = jnp.log(jnp.sum(uni, axis=1, keepdims=True))
    pos = mask * invd
    lp = jnp.sum(pos * (logits - lse), axis=1) / jnp.sum(pos, axis=1)
    return jnp.mean(-(temperature / base_temperature) * lp)


# --------------------------------------------------------------------------------------
if __name__ == "__main__":
    key = jax.random.PRNGKey(0)
    k_feat, k_lab, k_feat2, k_lab2 = jax.random.split(key, 4)

    bsz, n_views, dim = 8, 2, 32
    features = jax.random.normal(k_feat, (bsz, n_views, dim), dtype=jnp.float32)
    features = features / jnp.linalg.norm(features, axis=-1, keepdims=True)
    labels = jax.random.randint(k_lab, (bsz,), 0, 3)

    # Tolerance accommodates possible MXU f32-decomposition differences vs the XLA
    # reference (real masking/scale bugs are orders of magnitude larger).
    tol = dict(rtol=2e-2, atol=2e-2)

    # 1) supcon, fp32, single row/column tile (exercises row & column padding + guards)
    ref = _reference_loss(features, labels, method="supcon")
    out = jax.block_until_ready(kernelized_supcon_loss(features, labels, method="supcon"))
    assert jnp.allclose(out, ref, **tol), (out, ref)

    # 2) supcon, many row tiles on the "parallel" axis (tm=8 -> 16 row tiles)
    out2 = jax.block_until_ready(
        kernelized_supcon_loss(features, labels, method="supcon", tm=8))
    assert jnp.allclose(out2, ref, **tol), (out2, ref)

    # 3) SimCLR degenerate case (labels=None)
    ref3 = _reference_loss(features, None, method="supcon")
    out3 = jax.block_until_ready(kernelized_supcon_loss(features, None, method="supcon"))
    assert jnp.allclose(out3, ref3, **tol), (out3, ref3)

    # 4) supcon with column tiling (online LSE across 2 column tiles; n=144 -> n_pad=256)
    bsz4 = 72
    feats4 = jax.random.normal(k_feat2, (bsz4, n_views, dim), dtype=jnp.float32)
    feats4 = feats4 / jnp.linalg.norm(feats4, axis=-1, keepdims=True)
    labels4 = jax.random.randint(k_lab2, (bsz4,), 0, 5)
    ref4 = _reference_loss(feats4, labels4, method="supcon")
    out4 = jax.block_until_ready(
        kernelized_supcon_loss(feats4, labels4, method="supcon", tm=128, tn=128))
    assert jnp.allclose(out4, ref4, **tol), (out4, ref4)

    # 5) expw, streamed precomputed Gaussian kernel mask (original-API path)
    cont_labels = jax.random.normal(k_lab, (bsz,), dtype=jnp.float32)
    ref5 = _reference_loss(features, cont_labels, method="expw",
                           kernel=gaussian_kernel, krnl_sigma=1.0)
    out5 = jax.block_until_ready(kernelized_supcon_loss(
        features, cont_labels, method="expw", kernel=gaussian_kernel, krnl_sigma=1.0))
    assert jnp.allclose(out5, ref5, **tol), (out5, ref5)

    # 6) expw, mask evaluated in-kernel from the label row (no [N,N] mask materialised)
    out6 = jax.block_until_ready(kernelized_supcon_loss(
        features, cont_labels, method="expw",
        pairwise_kernel=gaussian_kernel_pairwise, krnl_sigma=1.0))
    assert jnp.allclose(out6, ref5, **tol), (out6, ref5)

    # 7) bf16-fed MXU variant (resident operand + anchor tile in bf16; loose tolerance)
    out7 = jax.block_until_ready(kernelized_supcon_loss(
        features, labels, method="supcon", precision="bf16"))
    assert jnp.allclose(out7, ref, rtol=1.5e-1, atol=1.5e-1), (out7, ref)

    print("KERNEL_OK")
</pallas_src>

<mosaic_0001>
module attributes {stable_mosaic.version = 11 : i64} {
  func.func @_supcon_kernel(%arg0: i32, %arg1: i32, %arg2: memref<128x1xi32, #tpu.memory_space<vmem>>, %arg3: memref<1x128xi32, #tpu.memory_space<vmem>>, %arg4: memref<1x128xi32, #tpu.memory_space<vmem>>, %arg5: memref<128x128xf32, #tpu.memory_space<vmem>>, %arg6: memref<1x128x128xf32, #tpu.memory_space<vmem>>, %arg7: memref<128x1xf32, #tpu.memory_space<vmem>>, %arg8: memref<128x1xf32, #tpu.memory_space<vmem>>, %arg9: memref<128x1xf32, #tpu.memory_space<vmem>>, %arg10: memref<128x1xf32, #tpu.memory_space<vmem>>, %arg11: memref<128x1xf32, #tpu.memory_space<vmem>>) attributes {dimension_semantics = [#tpu.dimension_semantics<parallel>, #tpu.dimension_semantics<arbitrary>], iteration_bounds = array<i64: 1, 1>, scalar_prefetch = 0 : i64, scratch_operands = 4 : i64, tpu.core_type = #tpu.core_type<tc>, window_params = [{transform_indices = @transform_0, window_bounds = array<i64: 128, 1>}, {transform_indices = @transform_1, window_bounds = array<i64: 1, 128>}, {transform_indices = @transform_2, window_bounds = array<i64: 1, 128>}, {transform_indices = @transform_3, window_bounds = array<i64: 128, 128>}, {pipeline_mode = #tpu.pipeline_mode<synchronous>, transform_indices = @transform_4, window_bounds = array<i64: 1, 128, 128>}, {transform_indices = @transform_5, window_bounds = array<i64: 128, 1>}]} {
    %c0_i32 = arith.constant 0 : i32
    %0 = arith.cmpi eq, %arg1, %c0_i32 : i32
    %1 = arith.extui %0 : i1 to i32
    %c0_i32_0 = arith.constant 0 : i32
    %2 = arith.cmpi ne, %1, %c0_i32_0 : i32
    scf.if %2 {
      %cst_38 = arith.constant -1.000000e+30 : f32
      %63 = vector.broadcast %cst_38 : f32 to vector<128x1xf32>
      %c0_39 = arith.constant 0 : index
      %c0_40 = arith.constant 0 : index
      %64 = vector.load %arg8[%c0_39, %c0_40] : memref<128x1xf32, #tpu.memory_space<vmem>>, vector<128x1xf32>
      tpu.vector_store %arg8[%c0_39, %c0_40], %63 {strides = array<i32>} : memref<128x1xf32, #tpu.memory_space<vmem>>, vector<128x1xf32>,
      %cst_41 = arith.constant 0.000000e+00 : f32
      %65 = vector.broadcast %cst_41 : f32 to vector<128x1xf32>
      %c0_42 = arith.constant 0 : index
      %c0_43 = arith.constant 0 : index
      %66 = vector.load %arg9[%c0_42, %c0_43] : memref<128x1xf32, #tpu.memory_space<vmem>>, vector<128x1xf32>
      tpu.vector_store %arg9[%c0_42, %c0_43], %65 {strides = array<i32>} : memref<128x1xf32, #tpu.memory_space<vmem>>, vector<128x1xf32>,
      %cst_44 = arith.constant 0.000000e+00 : f32
      %67 = vector.broadcast %cst_44 : f32 to vector<128x1xf32>
      %c0_45 = arith.constant 0 : index
      %c0_46 = arith.constant 0 : index
      %68 = vector.load %arg10[%c0_45, %c0_46] : memref<128x1xf32, #tpu.memory_space<vmem>>, vector<128x1xf32>
      tpu.vector_store %arg10[%c0_45, %c0_46], %67 {strides = array<i32>} : memref<128x1xf32, #tpu.memory_space<vmem>>, vector<128x1xf32>,
      %cst_47 = arith.constant 0.000000e+00 : f32
      %69 = vector.broadcast %cst_47 : f32 to vector<128x1xf32>
      %c0_48 = arith.constant 0 : index
      %c0_49 = arith.constant 0 : index
      %70 = vector.load %arg11[%c0_48, %c0_49] : memref<128x1xf32, #tpu.memory_space<vmem>>, vector<128x1xf32>
      tpu.vector_store %arg11[%c0_48, %c0_49], %69 {strides = array<i32>} : memref<128x1xf32, #tpu.memory_space<vmem>>, vector<128x1xf32>,
    } else {
    }
    %c0 = arith.constant 0 : index
    %c0_1 = arith.constant 0 : index
    %3 = vector.load %arg5[%c0, %c0_1] : memref<128x128xf32, #tpu.memory_space<vmem>>, vector<128x128xf32>
    %4 = arith.index_cast %arg1 : i32 to index
    %c0_2 = arith.constant 0 : index
    %c0_3 = arith.constant 0 : index
    %5 = vector.load %arg6[%4, %c0_2, %c0_3] : memref<1x128x128xf32, #tpu.memory_space<vmem>>, vector<1x128x128xf32>
    %6 = vector.shape_cast %5 : vector<1x128x128xf32> to vector<128x128xf32>
    %cst = arith.constant dense<0.000000e+00> : vector<128x128xf32>
    %7 = tpu.matmul %3, %6, %cst {dimension_numbers = #tpu.dot_dimension_numbers<[1], [0], [0], [1], [0, 0, 1, 1], [], []>} : vector<128x128xf32>, vector<128x128xf32>, vector<128x128xf32> -> vector<128x128xf32>
    %c128_i32 = arith.constant 128 : i32
    %8 = arith.muli %arg0, %c128_i32 : i32
    %9 = tpu.iota {dimensions = array<i32: 0>} : vector<128x1xi32>
    %10 = vector.broadcast %8 : i32 to vector<128x1xi32>
    %11 = arith.addi %10, %9 : vector<128x1xi32>
    %c0_4 = arith.constant 0 : index
    %c0_5 = arith.constant 0 : index
    %12 = vector.load %arg4[%c0_4, %c0_5] : memref<1x128xi32, #tpu.memory_space<vmem>>, vector<1x128xi32>
    %13 = vector.broadcast %12 : vector<1x128xi32> to vector<128x128xi32>
    %14 = vector.broadcast %11 : vector<128x1xi32> to vector<128x128xi32>
    %15 = arith.cmpi ne, %13, %14 : vector<128x128xi32>
    %c16_i32 = arith.constant 16 : i32
    %16 = vector.broadcast %c16_i32 : i32 to vector<1x128xi32>
    %17 = arith.cmpi slt, %12, %16 : vector<1x128xi32>
    %18 = vector.broadcast %17 : vector<1x128xi1> to vector<128x128xi1>
    %19 = arith.andi %15, %18 : vector<128x128xi1>
    %c0_6 = arith.constant 0 : index
    %c0_7 = arith.constant 0 : index
    %20 = vector.load %arg3[%c0_6, %c0_7] : memref<1x128xi32, #tpu.memory_space<vmem>>, vector<1x128xi32>
    %c0_8 = arith.constant 0 : index
    %c0_9 = arith.constant 0 : index
    %21 = vector.load %arg2[%c0_8, %c0_9] : memref<128x1xi32, #tpu.memory_space<vmem>>, vector<128x1xi32>
    %22 = vector.broadcast %20 : vector<1x128xi32> to vector<128x128xi32>
    %23 = vector.broadcast %21 : vector<128x1xi32> to vector<128x128xi32>
    %24 = arith.cmpi eq, %22, %23 : vector<128x128xi32>
    %25 = arith.andi %24, %19 : vector<128x128xi1>
    %cst_10 = arith.constant -1.000000e+30 : f32
    %26 = vector.broadcast %cst_10 : f32 to vector<128x128xf32>
    %27 = arith.select %19, %7, %26 : vector<128x128xi1>, vector<128x128xf32>
    %c0_11 = arith.constant 0 : index
    %c0_12 = arith.constant 0 : index
    %28 = vector.load %arg8[%c0_11, %c0_12] : memref<128x1xf32, #tpu.memory_space<vmem>>, vector<128x1xf32>
    %cst_13 = arith.constant dense<0xFF800000> : vector<128xf32>
    %29 = vector.multi_reduction <maximumf>, %27, %cst_13 [1] : vector<128x128xf32> to vector<128xf32>
    %30 = vector.shape_cast %29 : vector<128xf32> to vector<128x1xf32>
    %31 = arith.maximumf %28, %30 : vector<128x1xf32>
    %c0_14 = arith.constant 0 : index
    %c0_15 = arith.constant 0 : index
    %32 = vector.load %arg8[%c0_14, %c0_15] : memref<128x1xf32, #tpu.memory_space<vmem>>, vector<128x1xf32>
    %33 = arith.subf %32, %31 : vector<128x1xf32>
    %34 = math.exp %33 : vector<128x1xf32>
    %c0_16 = arith.constant 0 : index
    %c0_17 = arith.constant 0 : index
    %35 = vector.load %arg9[%c0_16, %c0_17] : memref<128x1xf32, #tpu.memory_space<vmem>>, vector<128x1xf32>
    %36 = arith.mulf %34, %35 : vector<128x1xf32>
    %37 = vector.broadcast %31 : vector<128x1xf32> to vector<128x128xf32>
    %38 = arith.subf %27, %37 : vector<128x128xf32>
    %39 = math.exp %38 : vector<128x128xf32>
    %cst_18 = arith.constant dense<0.000000e+00> : vector<128xf32>
    %40 = vector.multi_reduction <add>, %39, %cst_18 [1] : vector<128x128xf32> to vector<128xf32>
    %41 = vector.shape_cast %40 : vector<128xf32> to vector<128x1xf32>
    %42 = arith.addf %36, %41 : vector<128x1xf32>
    %c0_19 = arith.constant 0 : index
    %c0_20 = arith.constant 0 : index
    %43 = vector.load %arg9[%c0_19, %c0_20] : memref<128x1xf32, #tpu.memory_space<vmem>>, vector<128x1xf32>
    tpu.vector_store %arg9[%c0_19, %c0_20], %42 {strides = array<i32>} : memref<128x1xf32, #tpu.memory_space<vmem>>, vector<128x1xf32>,
    %c0_21 = arith.constant 0 : index
    %c0_22 = arith.constant 0 : index
    %44 = vector.load %arg8[%c0_21, %c0_22] : memref<128x1xf32, #tpu.memory_space<vmem>>, vector<128x1xf32>
    tpu.vector_store %arg8[%c0_21, %c0_22], %31 {strides = array<i32>} : memref<128x1xf32, #tpu.memory_space<vmem>>, vector<128x1xf32>,
    %c0_23 = arith.constant 0 : index
    %c0_24 = arith.constant 0 : index
    %45 = vector.load %arg10[%c0_23, %c0_24] : memref<128x1xf32, #tpu.memory_space<vmem>>, vector<128x1xf32>
    %cst_25 = arith.constant 1.000000e+00 : f32
    %cst_26 = arith.constant 0.000000e+00 : f32
    %46 = vector.broadcast %cst_25 : f32 to vector<128x128xf32>
    %47 = vector.broadcast %cst_26 : f32 to vector<128x128xf32>
    %48 = arith.select %25, %46, %47 : vector<128x128xi1>, vector<128x128xf32>
    %cst_27 = arith.constant dense<0.000000e+00> : vector<128xf32>
    %49 = vector.multi_reduction <add>, %48, %cst_27 [1] : vector<128x128xf32> to vector<128xf32>
    %50 = vector.shape_cast %49 : vector<128xf32> to vector<128x1xf32>
    %51 = arith.addf %45, %50 : vector<128x1xf32>
    %c0_28 = arith.constant 0 : index
    %c0_29 = arith.constant 0 : index
    %52 = vector.load %arg10[%c0_28, %c0_29] : memref<128x1xf32, #tpu.memory_space<vmem>>, vector<128x1xf32>
    tpu.vector_store %arg10[%c0_28, %c0_29], %51 {strides = array<i32>} : memref<128x1xf32, #tpu.memory_space<vmem>>, vector<128x1xf32>,
    %c0_30 = arith.constant 0 : index
    %c0_31 = arith.constant 0 : index
    %53 = vector.load %arg11[%c0_30, %c0_31] : memref<128x1xf32, #tpu.memory_space<vmem>>, vector<128x1xf32>
    %cst_32 = arith.constant 0.000000e+00 : f32
    %54 = vector.broadcast %cst_32 : f32 to vector<128x128xf32>
    %55 = arith.select %25, %7, %54 : vector<128x128xi1>, vector<128x128xf32>
    %cst_33 = arith.constant dense<0.000000e+00> : vector<128xf32>
    %56 = vector.multi_reduction <add>, %55, %cst_33 [1] : vector<128x128xf32> to vector<128xf32>
    %57 = vector.shape_cast %56 : vector<128xf32> to vector<128x1xf32>
    %58 = arith.addf %53, %57 : vector<128x1xf32>
    %c0_34 = arith.constant 0 : index
    %c0_35 = arith.constant 0 : index
    %59 = vector.load %arg11[%c0_34, %c0_35] : memref<128x1xf32, #tpu.memory_space<vmem>>, vector<128x1xf32>
    tpu.vector_store %arg11[%c0_34, %c0_35], %58 {strides = array<i32>} : memref<128x1xf32, #tpu.memory_space<vmem>>, vector<128x1xf32>,
    %c0_i32_36 = arith.constant 0 : i32
    %60 = arith.cmpi eq, %arg1, %c0_i32_36 : i32
    %61 = arith.extui %60 : i1 to i32
    %c0_i32_37 = arith.constant 0 : i32
    %62 = arith.cmpi ne, %61, %c0_i32_37 : i32
    scf.if %62 {
      %c0_38 = arith.constant 0 : index
      %c0_39 = arith.constant 0 : index
      %63 = vector.load %arg10[%c0_38, %c0_39] : memref<128x1xf32, #tpu.memory_space<vmem>>, vector<128x1xf32>
      %c0_40 = arith.constant 0 : index
      %c0_41 = arith.constant 0 : index
      %64 = vector.load %arg8[%c0_40, %c0_41] : memref<128x1xf32, #tpu.memory_space<vmem>>, vector<128x1xf32>
      %c0_42 = arith.constant 0 : index
      %c0_43 = arith.constant 0 : index
      %65 = vector.load %arg9[%c0_42, %c0_43] : memref<128x1xf32, #tpu.memory_space<vmem>>, vector<128x1xf32>
      %66 = math.log %65 : vector<128x1xf32>
      %67 = arith.addf %64, %66 : vector<128x1xf32>
      %c0_44 = arith.constant 0 : index
      %c0_45 = arith.constant 0 : index
      %68 = vector.load %arg11[%c0_44, %c0_45] : memref<128x1xf32, #tpu.memory_space<vmem>>, vector<128x1xf32>
      %69 = arith.mulf %67, %63 : vector<128x1xf32>
      %70 = arith.subf %68, %69 : vector<128x1xf32>
      %cst_46 = arith.constant 0.000000e+00 : f32
      %71 = vector.broadcast %cst_46 : f32 to vector<128x1xf32>
      %72 = arith.cmpf ogt, %63, %71 : vector<128x1xf32>
      %cst_47 = arith.constant 1.000000e+00 : f32
      %73 = vector.broadcast %cst_47 : f32 to vector<128x1xf32>
      %74 = arith.select %72, %63, %73 : vector<128x1xi1>, vector<128x1xf32>
      %75 = tpu.reciprocal %74 {approx = true} : vector<128x1xf32> -> vector<128x1xf32>
      %76 = arith.mulf %74, %75 : vector<128x1xf32>
      %cst_48 = arith.constant 2.000000e+00 : f32
      %77 = vector.broadcast %cst_48 : f32 to vector<128x1xf32>
      %78 = arith.subf %77, %76 : vector<128x1xf32>
      %79 = arith.mulf %75, %78 : vector<128x1xf32>
      %cst_49 = arith.constant -1.000000e+00 : f32
      %80 = vector.broadcast %cst_49 : f32 to vector<128x1xf32>
      %81 = arith.mulf %80, %70 : vector<128x1xf32>
      %82 = arith.mulf %81, %79 : vector<128x1xf32>
      %cst_50 = arith.constant 0.000000e+00 : f32
      %83 = vector.broadcast %cst_50 : f32 to vector<128x1xf32>
      %84 = arith.cmpf ogt, %63, %83 : vector<128x1xf32>
      %c16_i32_51 = arith.constant 16 : i32
      %85 = vector.broadcast %c16_i32_51 : i32 to vector<128x1xi32>
      %86 = arith.cmpi slt, %11, %85 : vector<128x1xi32>
      %87 = arith.andi %84, %86 : vector<128x1xi1>
      %cst_52 = arith.constant 0.000000e+00 : f32
      %88 = vector.broadcast %cst_52 : f32 to vector<128x1xf32>
      %89 = arith.select %87, %82, %88 : vector<128x1xi1>, vector<128x1xf32>
      %c0_53 = arith.constant 0 : index
      %c0_54 = arith.constant 0 : index
      %90 = vector.load %arg7[%c0_53, %c0_54] : memref<128x1xf32, #tpu.memory_space<vmem>>, vector<128x1xf32>
      tpu.vector_store %arg7[%c0_53, %c0_54], %89 {strides = array<i32>} : memref<128x1xf32, #tpu.memory_space<vmem>>, vector<128x1xf32>,
    } else {
    }
    return
  }
  func.func @transform_0(%arg0: i32, %arg1: i32) -> (i32, i32) {
    %c0_i32 = arith.constant 0 : i32
    %c0_i32_0 = arith.constant 0 : i32
    return %arg0, %c0_i32 : i32, i32
  }
  func.func @transform_1(%arg0: i32, %arg1: i32) -> (i32, i32) {
    %c0_i32 = arith.constant 0 : i32
    %c0_i32_0 = arith.constant 0 : i32
    return %c0_i32, %arg1 : i32, i32
  }
  func.func @transform_2(%arg0: i32, %arg1: i32) -> (i32, i32) {
    %c0_i32 = arith.constant 0 : i32
    %c0_i32_0 = arith.constant 0 : i32
    return %c0_i32, %arg1 : i32, i32
  }
  func.func @transform_3(%arg0: i32, %arg1: i32) -> (i32, i32) {
    %c0_i32 = arith.constant 0 : i32
    %c0_i32_0 = arith.constant 0 : i32
    return %arg0, %c0_i32 : i32, i32
  }
  func.func @transform_4(%arg0: i32, %arg1: i32) -> (i32, i32, i32) {
    %c0_i32 = arith.constant 0 : i32
    %c0_i32_0 = arith.constant 0 : i32
    %c0_i32_1 = arith.constant 0 : i32
    %c0_i32_2 = arith.constant 0 : i32
    return %c0_i32, %c0_i32_0, %c0_i32_1 : i32, i32, i32
  }
  func.func @transform_5(%arg0: i32, %arg1: i32) -> (i32, i32) {
    %c0_i32 = arith.constant 0 : i32
    %c0_i32_0 = arith.constant 0 : i32
    return %arg0, %c0_i32 : i32, i32
  }
}

module attributes {stable_mosaic.version = 11 : i64} {
  func.func @_supcon_kernel(%arg0: i32, %arg1: i32, %arg2: memref<128x1xi32, #tpu.memory_space<vmem>>, %arg3: memref<1x128xi32, #tpu.memory_space<vmem>>, %arg4: memref<1x128xi32, #tpu.memory_space<vmem>>, %arg5: memref<128x128xf32, #tpu.memory_space<vmem>>, %arg6: memref<1x128x128xf32, #tpu.memory_space<vmem>>, %arg7: memref<128x1xf32, #tpu.memory_space<vmem>>, %arg8: memref<128x1xf32, #tpu.memory_space<vmem>>, %arg9: memref<128x1xf32, #tpu.memory_space<vmem>>, %arg10: memref<128x1xf32, #tpu.memory_space<vmem>>, %arg11: memref<128x1xf32, #tpu.memory_space<vmem>>) attributes {dimension_semantics = [#tpu.dimension_semantics<parallel>, #tpu.dimension_semantics<arbitrary>], iteration_bounds = array<i64: 1, 1>, scalar_prefetch = 0 : i64, scratch_operands = 4 : i64, tpu.core_type = #tpu.core_type<tc>, window_params = [{transform_indices = @transform_0, window_bounds = array<i64: 128, 1>}, {transform_indices = @transform_1, window_bounds = array<i64: 1, 128>}, {transform_indices = @transform_2, window_bounds = array<i64: 1, 128>}, {transform_indices = @transform_3, window_bounds = array<i64: 128, 128>}, {pipeline_mode = #tpu.pipeline_mode<synchronous>, transform_indices = @transform_4, window_bounds = array<i64: 1, 128, 128>}, {transform_indices = @transform_5, window_bounds = array<i64: 128, 1>}]} {
    %c0_i32 = arith.constant 0 : i32
    %0 = arith.cmpi eq, %arg1, %c0_i32 : i32
    %1 = arith.extui %0 : i1 to i32
    %c0_i32_0 = arith.constant 0 : i32
    %2 = arith.cmpi ne, %1, %c0_i32_0 : i32
    scf.if %2 {
      %cst_38 = arith.constant -1.000000e+30 : f32
      %63 = vector.broadcast %cst_38 : f32 to vector<128x1xf32>
      %c0_39 = arith.constant 0 : index
      %c0_40 = arith.constant 0 : index
      %64 = vector.load %arg8[%c0_39, %c0_40] : memref<128x1xf32, #tpu.memory_space<vmem>>, vector<128x1xf32>
      tpu.vector_store %arg8[%c0_39, %c0_40], %63 {strides = array<i32>} : memref<128x1xf32, #tpu.memory_space<vmem>>, vector<128x1xf32>,
      %cst_41 = arith.constant 0.000000e+00 : f32
      %65 = vector.broadcast %cst_41 : f32 to vector<128x1xf32>
      %c0_42 = arith.constant 0 : index
      %c0_43 = arith.constant 0 : index
      %66 = vector.load %arg9[%c0_42, %c0_43] : memref<128x1xf32, #tpu.memory_space<vmem>>, vector<128x1xf32>
      tpu.vector_store %arg9[%c0_42, %c0_43], %65 {strides = array<i32>} : memref<128x1xf32, #tpu.memory_space<vmem>>, vector<128x1xf32>,
      %cst_44 = arith.constant 0.000000e+00 : f32
      %67 = vector.broadcast %cst_44 : f32 to vector<128x1xf32>
      %c0_45 = arith.constant 0 : index
      %c0_46 = arith.constant 0 : index
      %68 = vector.load %arg10[%c0_45, %c0_46] : memref<128x1xf32, #tpu.memory_space<vmem>>, vector<128x1xf32>
      tpu.vector_store %arg10[%c0_45, %c0_46], %67 {strides = array<i32>} : memref<128x1xf32, #tpu.memory_space<vmem>>, vector<128x1xf32>,
      %cst_47 = arith.constant 0.000000e+00 : f32
      %69 = vector.broadcast %cst_47 : f32 to vector<128x1xf32>
      %c0_48 = arith.constant 0 : index
      %c0_49 = arith.constant 0 : index
      %70 = vector.load %arg11[%c0_48, %c0_49] : memref<128x1xf32, #tpu.memory_space<vmem>>, vector<128x1xf32>
      tpu.vector_store %arg11[%c0_48, %c0_49], %69 {strides = array<i32>} : memref<128x1xf32, #tpu.memory_space<vmem>>, vector<128x1xf32>,
    } else {
    }
    %c0 = arith.constant 0 : index
    %c0_1 = arith.constant 0 : index
    %3 = vector.load %arg5[%c0, %c0_1] : memref<128x128xf32, #tpu.memory_space<vmem>>, vector<128x128xf32>
    %4 = arith.index_cast %arg1 : i32 to index
    %c0_2 = arith.constant 0 : index
    %c0_3 = arith.constant 0 : index
    %5 = vector.load %arg6[%4, %c0_2, %c0_3] : memref<1x128x128xf32, #tpu.memory_space<vmem>>, vector<1x128x128xf32>
    %6 = vector.shape_cast %5 : vector<1x128x128xf32> to vector<128x128xf32>
    %cst = arith.constant dense<0.000000e+00> : vector<128x128xf32>
    %7 = tpu.matmul %3, %6, %cst {dimension_numbers = #tpu.dot_dimension_numbers<[1], [0], [0], [1], [0, 0, 1, 1], [], []>} : vector<128x128xf32>, vector<128x128xf32>, vector<128x128xf32> -> vector<128x128xf32>
    %c128_i32 = arith.constant 128 : i32
    %8 = arith.muli %arg0, %c128_i32 : i32
    %9 = tpu.iota {dimensions = array<i32: 0>} : vector<128x1xi32>
    %10 = vector.broadcast %8 : i32 to vector<128x1xi32>
    %11 = arith.addi %10, %9 : vector<128x1xi32>
    %c0_4 = arith.constant 0 : index
    %c0_5 = arith.constant 0 : index
    %12 = vector.load %arg4[%c0_4, %c0_5] : memref<1x128xi32, #tpu.memory_space<vmem>>, vector<1x128xi32>
    %13 = vector.broadcast %12 : vector<1x128xi32> to vector<128x128xi32>
    %14 = vector.broadcast %11 : vector<128x1xi32> to vector<128x128xi32>
    %15 = arith.cmpi ne, %13, %14 : vector<128x128xi32>
    %c16_i32 = arith.constant 16 : i32
    %16 = vector.broadcast %c16_i32 : i32 to vector<1x128xi32>
    %17 = arith.cmpi slt, %12, %16 : vector<1x128xi32>
    %18 = vector.broadcast %17 : vector<1x128xi1> to vector<128x128xi1>
    %19 = arith.andi %15, %18 : vector<128x128xi1>
    %c0_6 = arith.constant 0 : index
    %c0_7 = arith.constant 0 : index
    %20 = vector.load %arg3[%c0_6, %c0_7] : memref<1x128xi32, #tpu.memory_space<vmem>>, vector<1x128xi32>
    %c0_8 = arith.constant 0 : index
    %c0_9 = arith.constant 0 : index
    %21 = vector.load %arg2[%c0_8, %c0_9] : memref<128x1xi32, #tpu.memory_space<vmem>>, vector<128x1xi32>
    %22 = vector.broadcast %20 : vector<1x128xi32> to vector<128x128xi32>
    %23 = vector.broadcast %21 : vector<128x1xi32> to vector<128x128xi32>
    %24 = arith.cmpi eq, %22, %23 : vector<128x128xi32>
    %25 = arith.andi %24, %19 : vector<128x128xi1>
    %cst_10 = arith.constant -1.000000e+30 : f32
    %26 = vector.broadcast %cst_10 : f32 to vector<128x128xf32>
    %27 = arith.select %19, %7, %26 : vector<128x128xi1>, vector<128x128xf32>
    %c0_11 = arith.constant 0 : index
    %c0_12 = arith.constant 0 : index
    %28 = vector.load %arg8[%c0_11, %c0_12] : memref<128x1xf32, #tpu.memory_space<vmem>>, vector<128x1xf32>
    %cst_13 = arith.constant dense<0xFF800000> : vector<128xf32>
    %29 = vector.multi_reduction <maximumf>, %27, %cst_13 [1] : vector<128x128xf32> to vector<128xf32>
    %30 = vector.shape_cast %29 : vector<128xf32> to vector<128x1xf32>
    %31 = arith.maximumf %28, %30 : vector<128x1xf32>
    %c0_14 = arith.constant 0 : index
    %c0_15 = arith.constant 0 : index
    %32 = vector.load %arg8[%c0_14, %c0_15] : memref<128x1xf32, #tpu.memory_space<vmem>>, vector<128x1xf32>
    %33 = arith.subf %32, %31 : vector<128x1xf32>
    %34 = math.exp %33 : vector<128x1xf32>
    %c0_16 = arith.constant 0 : index
    %c0_17 = arith.constant 0 : index
    %35 = vector.load %arg9[%c0_16, %c0_17] : memref<128x1xf32, #tpu.memory_space<vmem>>, vector<128x1xf32>
    %36 = arith.mulf %34, %35 : vector<128x1xf32>
    %37 = vector.broadcast %31 : vector<128x1xf32> to vector<128x128xf32>
    %38 = arith.subf %27, %37 : vector<128x128xf32>
    %39 = math.exp %38 : vector<128x128xf32>
    %cst_18 = arith.constant dense<0.000000e+00> : vector<128xf32>
    %40 = vector.multi_reduction <add>, %39, %cst_18 [1] : vector<128x128xf32> to vector<128xf32>
    %41 = vector.shape_cast %40 : vector<128xf32> to vector<128x1xf32>
    %42 = arith.addf %36, %41 : vector<128x1xf32>
    %c0_19 = arith.constant 0 : index
    %c0_20 = arith.constant 0 : index
    %43 = vector.load %arg9[%c0_19, %c0_20] : memref<128x1xf32, #tpu.memory_space<vmem>>, vector<128x1xf32>
    tpu.vector_store %arg9[%c0_19, %c0_20], %42 {strides = array<i32>} : memref<128x1xf32, #tpu.memory_space<vmem>>, vector<128x1xf32>,
    %c0_21 = arith.constant 0 : index
    %c0_22 = arith.constant 0 : index
    %44 = vector.load %arg8[%c0_21, %c0_22] : memref<128x1xf32, #tpu.memory_space<vmem>>, vector<128x1xf32>
    tpu.vector_store %arg8[%c0_21, %c0_22], %31 {strides = array<i32>} : memref<128x1xf32, #tpu.memory_space<vmem>>, vector<128x1xf32>,
    %c0_23 = arith.constant 0 : index
    %c0_24 = arith.constant 0 : index
    %45 = vector.load %arg10[%c0_23, %c0_24] : memref<128x1xf32, #tpu.memory_space<vmem>>, vector<128x1xf32>
    %cst_25 = arith.constant 1.000000e+00 : f32
    %cst_26 = arith.constant 0.000000e+00 : f32
    %46 = vector.broadcast %cst_25 : f32 to vector<128x128xf32>
    %47 = vector.broadcast %cst_26 : f32 to vector<128x128xf32>
    %48 = arith.select %25, %46, %47 : vector<128x128xi1>, vector<128x128xf32>
    %cst_27 = arith.constant dense<0.000000e+00> : vector<128xf32>
    %49 = vector.multi_reduction <add>, %48, %cst_27 [1] : vector<128x128xf32> to vector<128xf32>
    %50 = vector.shape_cast %49 : vector<128xf32> to vector<128x1xf32>
    %51 = arith.addf %45, %50 : vector<128x1xf32>
    %c0_28 = arith.constant 0 : index
    %c0_29 = arith.constant 0 : index
    %52 = vector.load %arg10[%c0_28, %c0_29] : memref<128x1xf32, #tpu.memory_space<vmem>>, vector<128x1xf32>
    tpu.vector_store %arg10[%c0_28, %c0_29], %51 {strides = array<i32>} : memref<128x1xf32, #tpu.memory_space<vmem>>, vector<128x1xf32>,
    %c0_30 = arith.constant 0 : index
    %c0_31 = arith.constant 0 : index
    %53 = vector.load %arg11[%c0_30, %c0_31] : memref<128x1xf32, #tpu.memory_space<vmem>>, vector<128x1xf32>
    %cst_32 = arith.constant 0.000000e+00 : f32
    %54 = vector.broadcast %cst_32 : f32 to vector<128x128xf32>
    %55 = arith.select %25, %7, %54 : vector<128x128xi1>, vector<128x128xf32>
    %cst_33 = arith.constant dense<0.000000e+00> : vector<128xf32>
    %56 = vector.multi_reduction <add>, %55, %cst_33 [1] : vector<128x128xf32> to vector<128xf32>
    %57 = vector.shape_cast %56 : vector<128xf32> to vector<128x1xf32>
    %58 = arith.addf %53, %57 : vector<128x1xf32>
    %c0_34 = arith.constant 0 : index
    %c0_35 = arith.constant 0 : index
    %59 = vector.load %arg11[%c0_34, %c0_35] : memref<128x1xf32, #tpu.memory_space<vmem>>, vector<128x1xf32>
    tpu.vector_store %arg11[%c0_34, %c0_35], %58 {strides = array<i32>} : memref<128x1xf32, #tpu.memory_space<vmem>>, vector<128x1xf32>,
    %c0_i32_36 = arith.constant 0 : i32
    %60 = arith.cmpi eq, %arg1, %c0_i32_36 : i32
    %61 = arith.extui %60 : i1 to i32
    %c0_i32_37 = arith.constant 0 : i32
    %62 = arith.cmpi ne, %61, %c0_i32_37 : i32
    scf.if %62 {
      %c0_38 = arith.constant 0 : index
      %c0_39 = arith.constant 0 : index
      %63 = vector.load %arg10[%c0_38, %c0_39] : memref<128x1xf32, #tpu.memory_space<vmem>>, vector<128x1xf32>
      %c0_40 = arith.constant 0 : index
      %c0_41 = arith.constant 0 : index
      %64 = vector.load %arg8[%c0_40, %c0_41] : memref<128x1xf32, #tpu.memory_space<vmem>>, vector<128x1xf32>
      %c0_42 = arith.constant 0 : index
      %c0_43 = arith.constant 0 : index
      %65 = vector.load %arg9[%c0_42, %c0_43] : memref<128x1xf32, #tpu.memory_space<vmem>>, vector<128x1xf32>
      %66 = math.log %65 : vector<128x1xf32>
      %67 = arith.addf %64, %66 : vector<128x1xf32>
      %c0_44 = arith.constant 0 : index
      %c0_45 = arith.constant 0 : index
      %68 = vector.load %arg11[%c0_44, %c0_45] : memref<128x1xf32, #tpu.memory_space<vmem>>, vector<128x1xf32>
      %69 = arith.mulf %67, %63 : vector<128x1xf32>
      %70 = arith.subf %68, %69 : vector<128x1xf32>
      %cst_46 = arith.constant 0.000000e+00 : f32
      %71 = vector.broadcast %cst_46 : f32 to vector<128x1xf32>
      %72 = arith.cmpf ogt, %63, %71 : vector<128x1xf32>
      %cst_47 = arith.constant 1.000000e+00 : f32
      %73 = vector.broadcast %cst_47 : f32 to vector<128x1xf32>
      %74 = arith.select %72, %63, %73 : vector<128x1xi1>, vector<128x1xf32>
      %75 = tpu.reciprocal %74 {approx = true} : vector<128x1xf32> -> vector<128x1xf32>
      %76 = arith.mulf %74, %75 : vector<128x1xf32>
      %cst_48 = arith.constant 2.000000e+00 : f32
      %77 = vector.broadcast %cst_48 : f32 to vector<128x1xf32>
      %78 = arith.subf %77, %76 : vector<128x1xf32>
      %79 = arith.mulf %75, %78 : vector<128x1xf32>
      %cst_49 = arith.constant -1.000000e+00 : f32
      %80 = vector.broadcast %cst_49 : f32 to vector<128x1xf32>
      %81 = arith.mulf %80, %70 : vector<128x1xf32>
      %82 = arith.mulf %81, %79 : vector<128x1xf32>
      %cst_50 = arith.constant 0.000000e+00 : f32
      %83 = vector.broadcast %cst_50 : f32 to vector<128x1xf32>
      %84 = arith.cmpf ogt, %63, %83 : vector<128x1xf32>
      %c16_i32_51 = arith.constant 16 : i32
      %85 = vector.broadcast %c16_i32_51 : i32 to vector<128x1xi32>
      %86 = arith.cmpi slt, %11, %85 : vector<128x1xi32>
      %87 = arith.andi %84, %86 : vector<128x1xi1>
      %cst_52 = arith.constant 0.000000e+00 : f32
      %88 = vector.broadcast %cst_52 : f32 to vector<128x1xf32>
      %89 = arith.select %87, %82, %88 : vector<128x1xi1>, vector<128x1xf32>
      %c0_53 = arith.constant 0 : index
      %c0_54 = arith.constant 0 : index
      %90 = vector.load %arg7[%c0_53, %c0_54] : memref<128x1xf32, #tpu.memory_space<vmem>>, vector<128x1xf32>
      tpu.vector_store %arg7[%c0_53, %c0_54], %89 {strides = array<i32>} : memref<128x1xf32, #tpu.memory_space<vmem>>, vector<128x1xf32>,
    } else {
    }
    return
  }
  func.func @transform_0(%arg0: i32, %arg1: i32) -> (i32, i32) {
    %c0_i32 = arith.constant 0 : i32
    %c0_i32_0 = arith.constant 0 : i32
    return %arg0, %c0_i32 : i32, i32
  }
  func.func @transform_1(%arg0: i32, %arg1: i32) -> (i32, i32) {
    %c0_i32 = arith.constant 0 : i32
    %c0_i32_0 = arith.constant 0 : i32
    return %c0_i32, %arg1 : i32, i32
  }
  func.func @transform_2(%arg0: i32, %arg1: i32) -> (i32, i32) {
    %c0_i32 = arith.constant 0 : i32
    %c0_i32_0 = arith.constant 0 : i32
    return %c0_i32, %arg1 : i32, i32
  }
  func.func @transform_3(%arg0: i32, %arg1: i32) -> (i32, i32) {
    %c0_i32 = arith.constant 0 : i32
    %c0_i32_0 = arith.constant 0 : i32
    return %arg0, %c0_i32 : i32, i32
  }
  func.func @transform_4(%arg0: i32, %arg1: i32) -> (i32, i32, i32) {
    %c0_i32 = arith.constant 0 : i32
    %c0_i32_0 = arith.constant 0 : i32
    %c0_i32_1 = arith.constant 0 : i32
    %c0_i32_2 = arith.constant 0 : i32
    return %c0_i32, %c0_i32_0, %c0_i32_1 : i32, i32, i32
  }
  func.func @transform_5(%arg0: i32, %arg1: i32) -> (i32, i32) {
    %c0_i32 = arith.constant 0 : i32
    %c0_i32_0 = arith.constant 0 : i32
    return %arg0, %c0_i32 : i32, i32
  }
}

</mosaic_0001>

<llo_original>
// kernel: tpu_custom_call.1
$region0: #{tpu_custom_call.1}
  #allocation0 [shape = 'u32[]', space=smem, size = 0x4, offset = 0x4, fixed_abs, tag = 'smem constant byte address 0x4 - core index']
  #allocation1 [shape = 'u32[144,128]{1,0:T(1,128)}', space=vmem, size = 0x12000, scoped, tag = 'internal scratch']
  #allocation2 [shape = 'f32[128,1]{1,0:T(8,128)}', space=vmem, size = 0x10000, scoped, tag = 'scratch operand']
  #allocation3 [shape = 'f32[128,1]{1,0:T(8,128)}', space=vmem, size = 0x10000, scoped, tag = 'scratch operand']
  #allocation4 [shape = 'f32[128,1]{1,0:T(8,128)}', space=vmem, size = 0x10000, scoped, tag = 'scratch operand']
  #allocation5 [shape = 'f32[128,1]{1,0:T(8,128)}', space=vmem, size = 0x10000, scoped, tag = 'scratch operand']
  %s0 = inlined_call_operand.vmem [shape: s32[128,1], index: 0, kind: input, shape index: {}]
  %s1 = inlined_call_operand.vmem [shape: s32[1,128], index: 1, kind: input, shape index: {}]
  %s2 = inlined_call_operand.vmem [shape: s32[1,128], index: 2, kind: input, shape index: {}]
  %s3 = inlined_call_operand.vmem [shape: f32[128,128], index: 3, kind: input, shape index: {}]
  %s4 = inlined_call_operand.hbm [shape: f32[1,128,128], index: 4, kind: input, shape index: {}]
  %s5 = inlined_call_operand.vmem [shape: f32[128,1], index: 5, kind: output, shape index: {}]
  %s6 = sld [smem:[#allocation0]]
  $region42: #{tpu_custom_call.1} parent=0
    _
  %s8 = ssub.s32 1, %s6
  %s9 = scalar_select 0, %s8, %s6
  $region1: #{tpu_custom_call.1} parent=0
    #allocation6 [shape = 'u8[65536]{0}', space=vmem, size = 0x10000, scoped, tag = 'input window, operand 4, single buffered']
    #allocation7 [shape = 's32[1]{0}', space=sflag, size = 0x4, scoped, tag = 'scoped memory for tpu_custom_call.1']
    %10 = vsyncpa [#allocation7], 0
    // Predicated region
    $region2: #{tpu_custom_call.1} parent=1 // pred_check
      _
    $region3: #{tpu_custom_call.1} parent=1 // pred_check_branch
      %12 = sbr.rel (0) target = $region5
    $region4: #{tpu_custom_call.1} parent=1 // pred_region
      _
    $region5: #{tpu_custom_call.1} parent=1 // pred_fallthru
      _
    // Predicated region
    $region6: #{tpu_custom_call.1} parent=1 // pred_check
      _
    $region7: #{tpu_custom_call.1} parent=1 // pred_check_branch
      %14 = sbr.rel (0) target = $region9
    $region8: #{tpu_custom_call.1} parent=1 // pred_region
      _
    $region9: #{tpu_custom_call.1} parent=1 // pred_fallthru
      _
    // Predicated region
    $region10: #{tpu_custom_call.1} parent=1 // pred_check
      _
    $region11: #{tpu_custom_call.1} parent=1 // pred_check_branch
      %16 = sbr.rel (0) target = $region13
    $region12: #{tpu_custom_call.1} parent=1 // pred_region
      _
    $region13: #{tpu_custom_call.1} parent=1 // pred_fallthru
      _
    // Predicated region
    $region14: #{tpu_custom_call.1} parent=1 // pred_check
      _
    $region15: #{tpu_custom_call.1} parent=1 // pred_check_branch
      %18 = sbr.rel (0) target = $region17
    $region16: #{tpu_custom_call.1} parent=1 // pred_region
      _
    $region17: #{tpu_custom_call.1} parent=1 // pred_fallthru
      _
    // Predicated region
    $region18: #{tpu_custom_call.1} parent=1 // pred_check
      _
    $region19: #{tpu_custom_call.1} parent=1 // pred_check_branch
      %20 = sbr.rel (0) target = $region21
    $region20: #{tpu_custom_call.1} parent=1 // pred_region
      %s22 = ssub.s32 2048, 2048
      %23 = vsyncadd [#allocation7], %s22
      %s24 = sshll.u32 [#allocation6], 4
      %s25 = int_to_ptr.vmem [resolvable:$true] %s24
      %30 = dma.hbm_to_vmem [thread:$0]  %s4, 2048, %s25, [#allocation7], 128, 128, 8
    $region21: #{tpu_custom_call.1} parent=1 // pred_fallthru
      _
    // Predicated region
    $region22: #{tpu_custom_call.1} parent=1 // pred_check
      _
    $region23: #{tpu_custom_call.1} parent=1 // pred_check_branch
      %32 = sbr.rel (0) target = $region25
    $region24: #{tpu_custom_call.1} parent=1 // pred_region
      %33 = dma.done [#allocation7], 2048
    $region25: #{tpu_custom_call.1} parent=1 // pred_fallthru
      _
    %p34 = scmp.eq.s32.totalorder 0, 0
    // Predicated region
    $region26: #{tpu_custom_call.1} parent=1 // pred_check
      %p35 = pneg %p34
    $region27: #{tpu_custom_call.1} parent=1 // pred_check_branch
      %37 = sbr.rel (%p35) target = $region29
    $region28: #{tpu_custom_call.1} parent=1 // pred_region
      %vm38 = vcmask 7168
      %39 = vst.msk [vmem:[#allocation2] sm:$0xff] %vm38, -1e+30
      %40 = vst.msk [vmem:[#allocation2 + $0x8] sm:$0xff] %vm38, -1e+30
      %41 = vst.msk [vmem:[#allocation2 + $0x10] sm:$0xff] %vm38, -1e+30
      %42 = vst.msk [vmem:[#allocation2 + $0x18] sm:$0xff] %vm38, -1e+30
      %43 = vst.msk [vmem:[#allocation2 + $0x20] sm:$0xff] %vm38, -1e+30
      %44 = vst.msk [vmem:[#allocation2 + $0x28] sm:$0xff] %vm38, -1e+30
      %45 = vst.msk [vmem:[#allocation2 + $0x30] sm:$0xff] %vm38, -1e+30
      %46 = vst.msk [vmem:[#allocation2 + $0x38] sm:$0xff] %vm38, -1e+30
      %47 = vst.msk [vmem:[#allocation2 + $0x40] sm:$0xff] %vm38, -1e+30
      %48 = vst.msk [vmem:[#allocation2 + $0x48] sm:$0xff] %vm38, -1e+30
      %49 = vst.msk [vmem:[#allocation2 + $0x50] sm:$0xff] %vm38, -1e+30
      %50 = vst.msk [vmem:[#allocation2 + $0x58] sm:$0xff] %vm38, -1e+30
      %51 = vst.msk [vmem:[#allocation2 + $0x60] sm:$0xff] %vm38, -1e+30
      %52 = vst.msk [vmem:[#allocation2 + $0x68] sm:$0xff] %vm38, -1e+30
      %53 = vst.msk [vmem:[#allocation2 + $0x70] sm:$0xff] %vm38, -1e+30
      %54 = vst.msk [vmem:[#allocation2 + $0x78] sm:$0xff] %vm38, -1e+30
      %55 = vst.msk [vmem:[#allocation3] sm:$0xff] %vm38, 0.0
      %56 = vst.msk [vmem:[#allocation3 + $0x8] sm:$0xff] %vm38, 0.0
      %57 = vst.msk [vmem:[#allocation3 + $0x10] sm:$0xff] %vm38, 0.0
      %58 = vst.msk [vmem:[#allocation3 + $0x18] sm:$0xff] %vm38, 0.0
      %59 = vst.msk [vmem:[#allocation3 + $0x20] sm:$0xff] %vm38, 0.0
      %60 = vst.msk [vmem:[#allocation3 + $0x28] sm:$0xff] %vm38, 0.0
      %61 = vst.msk [vmem:[#allocation3 + $0x30] sm:$0xff] %vm38, 0.0
      %62 = vst.msk [vmem:[#allocation3 + $0x38] sm:$0xff] %vm38, 0.0
      %63 = vst.msk [vmem:[#allocation3 + $0x40] sm:$0xff] %vm38, 0.0
      %64 = vst.msk [vmem:[#allocation3 + $0x48] sm:$0xff] %vm38, 0.0
      %65 = vst.msk [vmem:[#allocation3 + $0x50] sm:$0xff] %vm38, 0.0
      %66 = vst.msk [vmem:[#allocation3 + $0x58] sm:$0xff] %vm38, 0.0
      %67 = vst.msk [vmem:[#allocation3 + $0x60] sm:$0xff] %vm38, 0.0
      %68 = vst.msk [vmem:[#allocation3 + $0x68] sm:$0xff] %vm38, 0.0
      %69 = vst.msk [vmem:[#allocation3 + $0x70] sm:$0xff] %vm38, 0.0
      %70 = vst.msk [vmem:[#allocation3 + $0x78] sm:$0xff] %vm38, 0.0
      %71 = vst.msk [vmem:[#allocation4] sm:$0xff] %vm38, 0.0
      %72 = vst.msk [vmem:[#allocation4 + $0x8] sm:$0xff] %vm38, 0.0
      %73 = vst.msk [vmem:[#allocation4 + $0x10] sm:$0xff] %vm38, 0.0
      %74 = vst.msk [vmem:[#allocation4 + $0x18] sm:$0xff] %vm38, 0.0
      %75 = vst.msk [vmem:[#allocation4 + $0x20] sm:$0xff] %vm38, 0.0
      %76 = vst.msk [vmem:[#allocation4 + $0x28] sm:$0xff] %vm38, 0.0
      %77 = vst.msk [vmem:[#allocation4 + $0x30] sm:$0xff] %vm38, 0.0
      %78 = vst.msk [vmem:[#allocation4 + $0x38] sm:$0xff] %vm38, 0.0
      %79 = vst.msk [vmem:[#allocation4 + $0x40] sm:$0xff] %vm38, 0.0
      %80 = vst.msk [vmem:[#allocation4 + $0x48] sm:$0xff] %vm38, 0.0
      %81 = vst.msk [vmem:[#allocation4 + $0x50] sm:$0xff] %vm38, 0.0
      %82 = vst.msk [vmem:[#allocation4 + $0x58] sm:$0xff] %vm38, 0.0
      %83 = vst.msk [vmem:[#allocation4 + $0x60] sm:$0xff] %vm38, 0.0
      %84 = vst.msk [vmem:[#allocation4 + $0x68] sm:$0xff] %vm38, 0.0
      %85 = vst.msk [vmem:[#allocation4 + $0x70] sm:$0xff] %vm38, 0.0
      %86 = vst.msk [vmem:[#allocation4 + $0x78] sm:$0xff] %vm38, 0.0
      %87 = vst.msk [vmem:[#allocation5] sm:$0xff] %vm38, 0.0
      %88 = vst.msk [vmem:[#allocation5 + $0x8] sm:$0xff] %vm38, 0.0
      %89 = vst.msk [vmem:[#allocation5 + $0x10] sm:$0xff] %vm38, 0.0
      %90 = vst.msk [vmem:[#allocation5 + $0x18] sm:$0xff] %vm38, 0.0
      %91 = vst.msk [vmem:[#allocation5 + $0x20] sm:$0xff] %vm38, 0.0
      %92 = vst.msk [vmem:[#allocation5 + $0x28] sm:$0xff] %vm38, 0.0
      %93 = vst.msk [vmem:[#allocation5 + $0x30] sm:$0xff] %vm38, 0.0
      %94 = vst.msk [vmem:[#allocation5 + $0x38] sm:$0xff] %vm38, 0.0
      %95 = vst.msk [vmem:[#allocation5 + $0x40] sm:$0xff] %vm38, 0.0
      %96 = vst.msk [vmem:[#allocation5 + $0x48] sm:$0xff] %vm38, 0.0
      %97 = vst.msk [vmem:[#allocation5 + $0x50] sm:$0xff] %vm38, 0.0
      %98 = vst.msk [vmem:[#allocation5 + $0x58] sm:$0xff] %vm38, 0.0
      %99 = vst.msk [vmem:[#allocation5 + $0x60] sm:$0xff] %vm38, 0.0
      %100 = vst.msk [vmem:[#allocation5 + $0x68] sm:$0xff] %vm38, 0.0
      %101 = vst.msk [vmem:[#allocation5 + $0x70] sm:$0xff] %vm38, 0.0
      %102 = vst.msk [vmem:[#allocation5 + $0x78] sm:$0xff] %vm38, 0.0
    $region29: #{tpu_custom_call.1} parent=1 // pred_fallthru
      _
    %v103 = vld [vmem:[%s3] sm:$0xff]
    %v104 = vld [vmem:[%s3 + $0x8] sm:$0xff]
    %v105 = vld [vmem:[%s3 + $0x10] sm:$0xff]
    %v106 = vld [vmem:[%s3 + $0x18] sm:$0xff]
    %v107 = vld [vmem:[%s3 + $0x20] sm:$0xff]
    %v108 = vld [vmem:[%s3 + $0x28] sm:$0xff]
    %v109 = vld [vmem:[%s3 + $0x30] sm:$0xff]
    %v110 = vld [vmem:[%s3 + $0x38] sm:$0xff]
    %v111 = vld [vmem:[%s3 + $0x40] sm:$0xff]
    %v112 = vld [vmem:[%s3 + $0x48] sm:$0xff]
    %v113 = vld [vmem:[%s3 + $0x50] sm:$0xff]
    %v114 = vld [vmem:[%s3 + $0x58] sm:$0xff]
    %v115 = vld [vmem:[%s3 + $0x60] sm:$0xff]
    %v116 = vld [vmem:[%s3 + $0x68] sm:$0xff]
    %v117 = vld [vmem:[%s3 + $0x70] sm:$0xff]
    %v118 = vld [vmem:[%s3 + $0x78] sm:$0xff]
    %s119 = smul.u32 0, 128
    %s120 = scalar_lea.vmem [#allocation6], %s119
    %v121 = vld [vmem:[%s120] sm:$0xff]
    %v122 = vld [vmem:[%s120 + $0x8] sm:$0xff]
    %v123 = vld [vmem:[%s120 + $0x10] sm:$0xff]
    %v124 = vld [vmem:[%s120 + $0x18] sm:$0xff]
    %v125 = vld [vmem:[%s120 + $0x20] sm:$0xff]
    %v126 = vld [vmem:[%s120 + $0x28] sm:$0xff]
    %v127 = vld [vmem:[%s120 + $0x30] sm:$0xff]
    %v128 = vld [vmem:[%s120 + $0x38] sm:$0xff]
    %v129 = vld [vmem:[%s120 + $0x40] sm:$0xff]
    %v130 = vld [vmem:[%s120 + $0x48] sm:$0xff]
    %v131 = vld [vmem:[%s120 + $0x50] sm:$0xff]
    %v132 = vld [vmem:[%s120 + $0x58] sm:$0xff]
    %v133 = vld [vmem:[%s120 + $0x60] sm:$0xff]
    %v134 = vld [vmem:[%s120 + $0x68] sm:$0xff]
    %v135 = vld [vmem:[%s120 + $0x70] sm:$0xff]
    %v136 = vld [vmem:[%s120 + $0x78] sm:$0xff]
    %137 = vmatprep.subr.mxu0 0.0
    %138 = vmatpush1.msra.mxu0 %v121
    %139 = vmatprep.subr.mxu0 0.0
    %140 = vmatpush1.msra.mxu0 %v122
    %141 = vmatprep.subr.mxu0 0.0
    %142 = vmatpush1.msra.mxu0 %v123
    %143 = vmatprep.subr.mxu0 0.0
    %144 = vmatpush1.msra.mxu0 %v124
    %145 = vmatprep.subr.mxu0 0.0
    %146 = vmatpush1.msra.mxu0 %v125
    %147 = vmatprep.subr.mxu0 0.0
    %148 = vmatpush1.msra.mxu0 %v126
    %149 = vmatprep.subr.mxu0 0.0
    %150 = vmatpush1.msra.mxu0 %v127
    %151 = vmatprep.subr.mxu0 0.0
    %152 = vmatpush1.msra.mxu0 %v128
    %153 = vmatprep.subr.mxu0 0.0
    %154 = vmatpush1.msra.mxu0 %v129
    %155 = vmatprep.subr.mxu0 0.0
    %156 = vmatpush1.msra.mxu0 %v130
    %157 = vmatprep.subr.mxu0 0.0
    %158 = vmatpush1.msra.mxu0 %v131
    %159 = vmatprep.subr.mxu0 0.0
    %160 = vmatpush1.msra.mxu0 %v132
    %161 = vmatprep.subr.mxu0 0.0
    %162 = vmatpush1.msra.mxu0 %v133
    %163 = vmatprep.subr.mxu0 0.0
    %164 = vmatpush1.msra.mxu0 %v134
    %165 = vmatprep.subr.mxu0 0.0
    %166 = vmatpush1.msra.mxu0 %v135
    %167 = vmatprep.subr.mxu0 0.0
    %168 = vmatpush1.msra.mxu0 %v136
    %169 = vmatprep.subr.mxu0 0.0
    %170 = vmatpush1.msra.mxu0 0.0
    %171 = vmatprep.subr.mxu0 0.0
    %172 = vmatpush1.msra.mxu0 0.0
    %173 = vmatprep.subr.mxu0 0.0
    %174 = vmatpush1.msra.mxu0 0.0
    %175 = vmatprep.subr.mxu0 0.0
    %176 = vmatpush1.msra.mxu0 0.0
    %177 = vmatprep.subr.mxu0 0.0
    %178 = vmatpush1.msra.mxu0 0.0
    %179 = vmatprep.subr.mxu0 0.0
    %180 = vmatpush1.msra.mxu0 0.0
    %181 = vmatprep.subr.mxu0 0.0
    %182 = vmatpush1.msra.mxu0 0.0
    %183 = vmatprep.subr.mxu0 0.0
    %184 = vmatpush1.msra.mxu0 0.0
    %185 = vmatprep.subr.mxu0 0.0
    %186 = vmatpush1.msra.mxu0 0.0
    %187 = vmatprep.subr.mxu0 0.0
    %188 = vmatpush1.msra.mxu0 0.0
    %189 = vmatprep.subr.mxu0 0.0
    %190 = vmatpush1.msra.mxu0 0.0
    %191 = vmatprep.subr.mxu0 0.0
    %192 = vmatpush1.msra.mxu0 0.0
    %193 = vmatprep.subr.mxu0 0.0
    %194 = vmatpush1.msra.mxu0 0.0
    %195 = vmatprep.subr.mxu0 0.0
    %196 = vmatpush1.msra.mxu0 0.0
    %197 = vmatprep.subr.mxu0 0.0
    %198 = vmatpush1.msra.mxu0 0.0
    %199 = vmatprep.subr.mxu0 0.0
    %200 = vmatpush1.msra.mxu0 0.0
    %201 = vmatprep.mubr.f32.mxu0 0.0
    %202 = vmatmul.mubr.f32.gmra.mrb[0].mxu0 %v103
    %v203 = vpop.f32.mrb[0].mxu0
    %v204 = vadd.f32 0.0, %v203
    %v205 = vpop.f32.mrb[0].mxu0
    %206 = vmatprep.mubr.f32.mxu0 0.0
    %207 = vmatmul.mubr.f32.gmra.mrb[0].mxu0 %v104
    %v208 = vpop.f32.mrb[0].mxu0
    %v209 = vadd.f32 0.0, %v208
    %v210 = vpop.f32.mrb[0].mxu0
    %211 = vmatprep.mubr.f32.mxu0 0.0
    %212 = vmatmul.mubr.f32.gmra.mrb[0].mxu0 %v105
    %v213 = vpop.f32.mrb[0].mxu0
    %v214 = vadd.f32 0.0, %v213
    %v215 = vpop.f32.mrb[0].mxu0
    %216 = vmatprep.mubr.f32.mxu0 0.0
    %217 = vmatmul.mubr.f32.gmra.mrb[0].mxu0 %v106
    %v218 = vpop.f32.mrb[0].mxu0
    %v219 = vadd.f32 0.0, %v218
    %v220 = vpop.f32.mrb[0].mxu0
    %221 = vmatprep.mubr.f32.mxu0 0.0
    %222 = vmatmul.mubr.f32.gmra.mrb[0].mxu0 %v107
    %v223 = vpop.f32.mrb[0].mxu0
    %v224 = vadd.f32 0.0, %v223
    %v225 = vpop.f32.mrb[0].mxu0
    %226 = vmatprep.mubr.f32.mxu0 0.0
    %227 = vmatmul.mubr.f32.gmra.mrb[0].mxu0 %v108
    %v228 = vpop.f32.mrb[0].mxu0
    %v229 = vadd.f32 0.0, %v228
    %v230 = vpop.f32.mrb[0].mxu0
    %231 = vmatprep.mubr.f32.mxu0 0.0
    %232 = vmatmul.mubr.f32.gmra.mrb[0].mxu0 %v109
    %v233 = vpop.f32.mrb[0].mxu0
    %v234 = vadd.f32 0.0, %v233
    %v235 = vpop.f32.mrb[0].mxu0
    %236 = vmatprep.mubr.f32.mxu0 0.0
    %237 = vmatmul.mubr.f32.gmra.mrb[0].mxu0 %v110
    %v238 = vpop.f32.mrb[0].mxu0
    %v239 = vadd.f32 0.0, %v238
    %v240 = vpop.f32.mrb[0].mxu0
    %241 = vmatprep.mubr.f32.mxu0 0.0
    %242 = vmatmul.mubr.f32.gmra.mrb[0].mxu0 %v111
    %v243 = vpop.f32.mrb[0].mxu0
    %v244 = vadd.f32 0.0, %v243
    %v245 = vpop.f32.mrb[0].mxu0
    %246 = vmatprep.mubr.f32.mxu0 0.0
    %247 = vmatmul.mubr.f32.gmra.mrb[0].mxu0 %v112
    %v248 = vpop.f32.mrb[0].mxu0
    %v249 = vadd.f32 0.0, %v248
    %v250 = vpop.f32.mrb[0].mxu0
    %251 = vmatprep.mubr.f32.mxu0 0.0
    %252 = vmatmul.mubr.f32.gmra.mrb[0].mxu0 %v113
    %v253 = vpop.f32.mrb[0].mxu0
    %v254 = vadd.f32 0.0, %v253
    %v255 = vpop.f32.mrb[0].mxu0
    %256 = vmatprep.mubr.f32.mxu0 0.0
    %257 = vmatmul.mubr.f32.gmra.mrb[0].mxu0 %v114
    %v258 = vpop.f32.mrb[0].mxu0
    %v259 = vadd.f32 0.0, %v258
    %v260 = vpop.f32.mrb[0].mxu0
    %261 = vmatprep.mubr.f32.mxu0 0.0
    %262 = vmatmul.mubr.f32.gmra.mrb[0].mxu0 %v115
    %v263 = vpop.f32.mrb[0].mxu0
    %v264 = vadd.f32 0.0, %v263
    %v265 = vpop.f32.mrb[0].mxu0
    %266 = vmatprep.mubr.f32.mxu0 0.0
    %267 = vmatmul.mubr.f32.gmra.mrb[0].mxu0 %v116
    %v268 = vpop.f32.mrb[0].mxu0
    %v269 = vadd.f32 0.0, %v268
    %v270 = vpop.f32.mrb[0].mxu0
    %271 = vmatprep.mubr.f32.mxu0 0.0
    %272 = vmatmul.mubr.f32.gmra.mrb[0].mxu0 %v117
    %v273 = vpop.f32.mrb[0].mxu0
    %v274 = vadd.f32 0.0, %v273
    %v275 = vpop.f32.mrb[0].mxu0
    %276 = vmatprep.mubr.f32.mxu0 0.0
    %277 = vmatmul.mubr.f32.gmra.mrb[0].mxu0 %v118
    %v278 = vpop.f32.mrb[0].mxu0
    %v279 = vadd.f32 0.0, %v278
    %v280 = vpop.f32.mrb[0].mxu0
    %281 = vdwg.mxu0
    %s282 = smul.u32 0, 128
    %v283 = vlaneseq
    %v284 = vshrl.u32 %v283, 7
    %v285 = vadd.s32 %v284, 8
    %v286 = vadd.s32 %v284, 16
    %v287 = vadd.s32 %v284, 24
    %v288 = vadd.s32 %v284, 32
    %v289 = vadd.s32 %v284, 40
    %v290 = vadd.s32 %v284, 48
    %v291 = vadd.s32 %v284, 56
    %v292 = vadd.s32 %v284, 64
    %v293 = vadd.s32 %v284, 72
    %v294 = vadd.s32 %v284, 80
    %v295 = vadd.s32 %v284, 88
    %v296 = vadd.s32 %v284, 96
    %v297 = vadd.s32 %v284, 104
    %v298 = vadd.s32 %v284, 112
    %v299 = vadd.s32 %v284, 120
    %v300 = vstv %s282
    %v301 = vadd.s32 %v300, %v284
    %v302 = vadd.s32 %v300, %v285
    %v303 = vadd.s32 %v300, %v286
    %v304 = vadd.s32 %v300, %v287
    %v305 = vadd.s32 %v300, %v288
    %v306 = vadd.s32 %v300, %v289
    %v307 = vadd.s32 %v300, %v290
    %v308 = vadd.s32 %v300, %v291
    %v309 = vadd.s32 %v300, %v292
    %v310 = vadd.s32 %v300, %v293
    %v311 = vadd.s32 %v300, %v294
    %v312 = vadd.s32 %v300, %v295
    %v313 = vadd.s32 %v300, %v296
    %v314 = vadd.s32 %v300, %v297
    %v315 = vadd.s32 %v300, %v298
    %v316 = vadd.s32 %v300, %v299
    %v317 = vld [vmem:[%s2] sm:$0x1]
    %v318 = vlaneseq
    %v319 = vshrl.u32 %v318, 7
    %v320 = vsub.s32 0, %v319
    %v321 = vrot.slane %v317, %v320
    %vm322 = vcmp.ne.s32.totalorder %v321, %v301
    %vm323 = vcmp.ne.s32.totalorder %v321, %v302
    %vm324 = vcmp.ne.s32.totalorder %v321, %v303
    %vm325 = vcmp.ne.s32.totalorder %v321, %v304
    %vm326 = vcmp.ne.s32.totalorder %v321, %v305
    %vm327 = vcmp.ne.s32.totalorder %v321, %v306
    %vm328 = vcmp.ne.s32.totalorder %v321, %v307
    %vm329 = vcmp.ne.s32.totalorder %v321, %v308
    %vm330 = vcmp.ne.s32.totalorder %v321, %v309
    %vm331 = vcmp.ne.s32.totalorder %v321, %v310
    %vm332 = vcmp.ne.s32.totalorder %v321, %v311
    %vm333 = vcmp.ne.s32.totalorder %v321, %v312
    %vm334 = vcmp.ne.s32.totalorder %v321, %v313
    %vm335 = vcmp.ne.s32.totalorder %v321, %v314
    %vm336 = vcmp.ne.s32.totalorder %v321, %v315
    %vm337 = vcmp.ne.s32.totalorder %v321, %v316
    %vm338 = vcmp.lt.s32.totalorder %v317, 16
    %v339 = vsel %vm338, 1, 0
    %v340 = vlaneseq
    %v341 = vshrl.u32 %v340, 7
    %v342 = vsub.s32 0, %v341
    %v343 = vrot.slane %v339, %v342
    %vm344 = vcmp.eq.s32.totalorder %v343, 1
    %vm345 = vmand %vm322, %vm344
    %vm346 = vmand %vm323, %vm344
    %vm347 = vmand %vm324, %vm344
    %vm348 = vmand %vm325, %vm344
    %vm349 = vmand %vm326, %vm344
    %vm350 = vmand %vm327, %vm344
    %vm351 = vmand %vm328, %vm344
    %vm352 = vmand %vm329, %vm344
    %vm353 = vmand %vm330, %vm344
    %vm354 = vmand %vm331, %vm344
    %vm355 = vmand %vm332, %vm344
    %vm356 = vmand %vm333, %vm344
    %vm357 = vmand %vm334, %vm344
    %vm358 = vmand %vm335, %vm344
    %vm359 = vmand %vm336, %vm344
    %vm360 = vmand %vm337, %vm344
    %v361 = vld [vmem:[%s1] sm:$0x1]
    %v362 = vld [vmem:[%s0] sm:$0xff]
    %v363 = vld [vmem:[%s0 + $0x8] sm:$0xff]
    %v364 = vld [vmem:[%s0 + $0x10] sm:$0xff]
    %v365 = vld [vmem:[%s0 + $0x18] sm:$0xff]
    %v366 = vld [vmem:[%s0 + $0x20] sm:$0xff]
    %v367 = vld [vmem:[%s0 + $0x28] sm:$0xff]
    %v368 = vld [vmem:[%s0 + $0x30] sm:$0xff]
    %v369 = vld [vmem:[%s0 + $0x38] sm:$0xff]
    %v370 = vld [vmem:[%s0 + $0x40] sm:$0xff]
    %v371 = vld [vmem:[%s0 + $0x48] sm:$0xff]
    %v372 = vld [vmem:[%s0 + $0x50] sm:$0xff]
    %v373 = vld [vmem:[%s0 + $0x58] sm:$0xff]
    %v374 = vld [vmem:[%s0 + $0x60] sm:$0xff]
    %v375 = vld [vmem:[%s0 + $0x68] sm:$0xff]
    %v376 = vld [vmem:[%s0 + $0x70] sm:$0xff]
    %v377 = vld [vmem:[%s0 + $0x78] sm:$0xff]
    %v378 = vlaneseq
    %v379 = vshrl.u32 %v378, 7
    %v380 = vsub.s32 0, %v379
    %v381 = vrot.slane %v361, %v380
    %382 = vset.pattern.permute.xlu0 0
    %383 = vperm.xlu0 %382, %v362
    %v384 = vpop.permute.xlu0 %383
    %385 = vset.pattern.permute.xlu0 0
    %386 = vperm.xlu0 %385, %v363
    %v387 = vpop.permute.xlu0 %386
    %388 = vset.pattern.permute.xlu0 0
    %389 = vperm.xlu0 %388, %v364
    %v390 = vpop.permute.xlu0 %389
    %391 = vset.pattern.permute.xlu0 0
    %392 = vperm.xlu0 %391, %v365
    %v393 = vpop.permute.xlu0 %392
    %394 = vset.pattern.permute.xlu0 0
    %395 = vperm.xlu0 %394, %v366
    %v396 = vpop.permute.xlu0 %395
    %397 = vset.pattern.permute.xlu0 0
    %398 = vperm.xlu0 %397, %v367
    %v399 = vpop.permute.xlu0 %398
    %400 = vset.pattern.permute.xlu0 0
    %401 = vperm.xlu0 %400, %v368
    %v402 = vpop.permute.xlu0 %401
    %403 = vset.pattern.permute.xlu0 0
    %404 = vperm.xlu0 %403, %v369
    %v405 = vpop.permute.xlu0 %404
    %406 = vset.pattern.permute.xlu0 0
    %407 = vperm.xlu0 %406, %v370
    %v408 = vpop.permute.xlu0 %407
    %409 = vset.pattern.permute.xlu0 0
    %410 = vperm.xlu0 %409, %v371
    %v411 = vpop.permute.xlu0 %410
    %412 = vset.pattern.permute.xlu0 0
    %413 = vperm.xlu0 %412, %v372
    %v414 = vpop.permute.xlu0 %413
    %415 = vset.pattern.permute.xlu0 0
    %416 = vperm.xlu0 %415, %v373
    %v417 = vpop.permute.xlu0 %416
    %418 = vset.pattern.permute.xlu0 0
    %419 = vperm.xlu0 %418, %v374
    %v420 = vpop.permute.xlu0 %419
    %421 = vset.pattern.permute.xlu0 0
    %422 = vperm.xlu0 %421, %v375
    %v423 = vpop.permute.xlu0 %422
    %424 = vset.pattern.permute.xlu0 0
    %425 = vperm.xlu0 %424, %v376
    %v426 = vpop.permute.xlu0 %425
    %427 = vset.pattern.permute.xlu0 0
    %428 = vperm.xlu0 %427, %v377
    %v429 = vpop.permute.xlu0 %428
    %vm430 = vcmp.eq.s32.totalorder %v381, %v384
    %vm431 = vcmp.eq.s32.totalorder %v381, %v387
    %vm432 = vcmp.eq.s32.totalorder %v381, %v390
    %vm433 = vcmp.eq.s32.totalorder %v381, %v393
    %vm434 = vcmp.eq.s32.totalorder %v381, %v396
    %vm435 = vcmp.eq.s32.totalorder %v381, %v399
    %vm436 = vcmp.eq.s32.totalorder %v381, %v402
    %vm437 = vcmp.eq.s32.totalorder %v381, %v405
    %vm438 = vcmp.eq.s32.totalorder %v381, %v408
    %vm439 = vcmp.eq.s32.totalorder %v381, %v411
    %vm440 = vcmp.eq.s32.totalorder %v381, %v414
    %vm441 = vcmp.eq.s32.totalorder %v381, %v417
    %vm442 = vcmp.eq.s32.totalorder %v381, %v420
    %vm443 = vcmp.eq.s32.totalorder %v381, %v423
    %vm444 = vcmp.eq.s32.totalorder %v381, %v426
    %vm445 = vcmp.eq.s32.totalorder %v381, %v429
    %vm446 = vmand %vm430, %vm345
    %vm447 = vmand %vm431, %vm346
    %vm448 = vmand %vm432, %vm347
    %vm449 = vmand %vm433, %vm348
    %vm450 = vmand %vm434, %vm349
    %vm451 = vmand %vm435, %vm350
    %vm452 = vmand %vm436, %vm351
    %vm453 = vmand %vm437, %vm352
    %vm454 = vmand %vm438, %vm353
    %vm455 = vmand %vm439, %vm354
    %vm456 = vmand %vm440, %vm355
    %vm457 = vmand %vm441, %vm356
    %vm458 = vmand %vm442, %vm357
    %vm459 = vmand %vm443, %vm358
    %vm460 = vmand %vm444, %vm359
    %vm461 = vmand %vm445, %vm360
    %v462 = vsel %vm345, %v204, -1e+30
    %v463 = vsel %vm346, %v209, -1e+30
    %v464 = vsel %vm347, %v214, -1e+30
    %v465 = vsel %vm348, %v219, -1e+30
    %v466 = vsel %vm349, %v224, -1e+30
    %v467 = vsel %vm350, %v229, -1e+30
    %v468 = vsel %vm351, %v234, -1e+30
    %v469 = vsel %vm352, %v239, -1e+30
    %v470 = vsel %vm353, %v244, -1e+30
    %v471 = vsel %vm354, %v249, -1e+30
    %v472 = vsel %vm355, %v254, -1e+30
    %v473 = vsel %vm356, %v259, -1e+30
    %v474 = vsel %vm357, %v264, -1e+30
    %v475 = vsel %vm358, %v269, -1e+30
    %v476 = vsel %vm359, %v274, -1e+30
    %v477 = vsel %vm360, %v279, -1e+30
    %v478 = vld [vmem:[#allocation2] sm:$0xff]
    %v479 = vld [vmem:[#allocation2 + $0x8] sm:$0xff]
    %v480 = vld [vmem:[#allocation2 + $0x10] sm:$0xff]
    %v481 = vld [vmem:[#allocation2 + $0x18] sm:$0xff]
    %v482 = vld [vmem:[#allocation2 + $0x20] sm:$0xff]
    %v483 = vld [vmem:[#allocation2 + $0x28] sm:$0xff]
    %v484 = vld [vmem:[#allocation2 + $0x30] sm:$0xff]
    %v485 = vld [vmem:[#allocation2 + $0x38] sm:$0xff]
    %v486 = vld [vmem:[#allocation2 + $0x40] sm:$0xff]
    %v487 = vld [vmem:[#allocation2 + $0x48] sm:$0xff]
    %v488 = vld [vmem:[#allocation2 + $0x50] sm:$0xff]
    %v489 = vld [vmem:[#allocation2 + $0x58] sm:$0xff]
    %v490 = vld [vmem:[#allocation2 + $0x60] sm:$0xff]
    %v491 = vld [vmem:[#allocation2 + $0x68] sm:$0xff]
    %v492 = vld [vmem:[#allocation2 + $0x70] sm:$0xff]
    %v493 = vld [vmem:[#allocation2 + $0x78] sm:$0xff]
    %494 = vmax.xlane.f32.xlu0 %v462
    %v495 = vpop.xlane.xlu0 %494
    %496 = vmax.xlane.f32.xlu0 %v463
    %v497 = vpop.xlane.xlu0 %496
    %498 = vmax.xlane.f32.xlu0 %v464
    %v499 = vpop.xlane.xlu0 %498
    %500 = vmax.xlane.f32.xlu0 %v465
    %v501 = vpop.xlane.xlu0 %500
    %502 = vmax.xlane.f32.xlu0 %v466
    %v503 = vpop.xlane.xlu0 %502
    %504 = vmax.xlane.f32.xlu0 %v467
    %v505 = vpop.xlane.xlu0 %504
    %506 = vmax.xlane.f32.xlu0 %v468
    %v507 = vpop.xlane.xlu0 %506
    %508 = vmax.xlane.f32.xlu0 %v469
    %v509 = vpop.xlane.xlu0 %508
    %510 = vmax.xlane.f32.xlu0 %v470
    %v511 = vpop.xlane.xlu0 %510
    %512 = vmax.xlane.f32.xlu0 %v471
    %v513 = vpop.xlane.xlu0 %512
    %514 = vmax.xlane.f32.xlu0 %v472
    %v515 = vpop.xlane.xlu0 %514
    %516 = vmax.xlane.f32.xlu0 %v473
    %v517 = vpop.xlane.xlu0 %516
    %518 = vmax.xlane.f32.xlu0 %v474
    %v519 = vpop.xlane.xlu0 %518
    %520 = vmax.xlane.f32.xlu0 %v475
    %v521 = vpop.xlane.xlu0 %520
    %522 = vmax.xlane.f32.xlu0 %v476
    %v523 = vpop.xlane.xlu0 %522
    %524 = vmax.xlane.f32.xlu0 %v477
    %v525 = vpop.xlane.xlu0 %524
    %v526 = vmax.f32 %v478, %v495
    %v527 = vmax.f32 %v479, %v497
    %v528 = vmax.f32 %v480, %v499
    %v529 = vmax.f32 %v481, %v501
    %v530 = vmax.f32 %v482, %v503
    %v531 = vmax.f32 %v483, %v505
    %v532 = vmax.f32 %v484, %v507
    %v533 = vmax.f32 %v485, %v509
    %v534 = vmax.f32 %v486, %v511
    %v535 = vmax.f32 %v487, %v513
    %v536 = vmax.f32 %v488, %v515
    %v537 = vmax.f32 %v489, %v517
    %v538 = vmax.f32 %v490, %v519
    %v539 = vmax.f32 %v491, %v521
    %v540 = vmax.f32 %v492, %v523
    %v541 = vmax.f32 %v493, %v525
    %v542 = vsub.f32 %v478, %v526
    %v543 = vsub.f32 %v479, %v527
    %v544 = vsub.f32 %v480, %v528
    %v545 = vsub.f32 %v481, %v529
    %v546 = vsub.f32 %v482, %v530
    %v547 = vsub.f32 %v483, %v531
    %v548 = vsub.f32 %v484, %v532
    %v549 = vsub.f32 %v485, %v533
    %v550 = vsub.f32 %v486, %v534
    %v551 = vsub.f32 %v487, %v535
    %v552 = vsub.f32 %v488, %v536
    %v553 = vsub.f32 %v489, %v537
    %v554 = vsub.f32 %v490, %v538
    %v555 = vsub.f32 %v491, %v539
    %v556 = vsub.f32 %v492, %v540
    %v557 = vsub.f32 %v493, %v541
    %v558 = vmul.f32 %v542, 1.442695
    %v559 = vpow.pop %v558
    %v560 = vmul.f32 %v543, 1.442695
    %v561 = vpow.pop %v560
    %v562 = vmul.f32 %v544, 1.442695
    %v563 = vpow.pop %v562
    %v564 = vmul.f32 %v545, 1.442695
    %v565 = vpow.pop %v564
    %v566 = vmul.f32 %v546, 1.442695
    %v567 = vpow.pop %v566
    %v568 = vmul.f32 %v547, 1.442695
    %v569 = vpow.pop %v568
    %v570 = vmul.f32 %v548, 1.442695
    %v571 = vpow.pop %v570
    %v572 = vmul.f32 %v549, 1.442695
    %v573 = vpow.pop %v572
    %v574 = vmul.f32 %v550, 1.442695
    %v575 = vpow.pop %v574
    %v576 = vmul.f32 %v551, 1.442695
    %v577 = vpow.pop %v576
    %v578 = vmul.f32 %v552, 1.442695
    %v579 = vpow.pop %v578
    %v580 = vmul.f32 %v553, 1.442695
    %v581 = vpow.pop %v580
    %v582 = vmul.f32 %v554, 1.442695
    %v583 = vpow.pop %v582
    %v584 = vmul.f32 %v555, 1.442695
    %v585 = vpow.pop %v584
    %v586 = vmul.f32 %v556, 1.442695
    %v587 = vpow.pop %v586
    %v588 = vmul.f32 %v557, 1.442695
    %v589 = vpow.pop %v588
    %v590 = vld [vmem:[#allocation3] sm:$0xff]
    %v591 = vld [vmem:[#allocation3 + $0x8] sm:$0xff]
    %v592 = vld [vmem:[#allocation3 + $0x10] sm:$0xff]
    %v593 = vld [vmem:[#allocation3 + $0x18] sm:$0xff]
    %v594 = vld [vmem:[#allocation3 + $0x20] sm:$0xff]
    %v595 = vld [vmem:[#allocation3 + $0x28] sm:$0xff]
    %v596 = vld [vmem:[#allocation3 + $0x30] sm:$0xff]
    %v597 = vld [vmem:[#allocation3 + $0x38] sm:$0xff]
    %v598 = vld [vmem:[#allocation3 + $0x40] sm:$0xff]
    %v599 = vld [vmem:[#allocation3 + $0x48] sm:$0xff]
    %v600 = vld [vmem:[#allocation3 + $0x50] sm:$0xff]
    %v601 = vld [vmem:[#allocation3 + $0x58] sm:$0xff]
    %v602 = vld [vmem:[#allocation3 + $0x60] sm:$0xff]
    %v603 = vld [vmem:[#allocation3 + $0x68] sm:$0xff]
    %v604 = vld [vmem:[#allocation3 + $0x70] sm:$0xff]
    %v605 = vld [vmem:[#allocation3 + $0x78] sm:$0xff]
    %v606 = vmul.f32 %v559, %v590
    %v607 = vmul.f32 %v561, %v591
    %v608 = vmul.f32 %v563, %v592
    %v609 = vmul.f32 %v565, %v593
    %v610 = vmul.f32 %v567, %v594
    %v611 = vmul.f32 %v569, %v595
    %v612 = vmul.f32 %v571, %v596
    %v613 = vmul.f32 %v573, %v597
    %v614 = vmul.f32 %v575, %v598
    %v615 = vmul.f32 %v577, %v599
    %v616 = vmul.f32 %v579, %v600
    %v617 = vmul.f32 %v581, %v601
    %v618 = vmul.f32 %v583, %v602
    %v619 = vmul.f32 %v585, %v603
    %v620 = vmul.f32 %v587, %v604
    %v621 = vmul.f32 %v589, %v605
    %623 = vset.pattern.permute.xlu0 0
    %624 = vperm.xlu0 %623, %v526
    %v625 = vpop.permute.xlu0 %624
    %628 = vset.pattern.permute.xlu0 0
    %629 = vperm.xlu0 %628, %v527
    %v630 = vpop.permute.xlu0 %629
    %633 = vset.pattern.permute.xlu0 0
    %634 = vperm.xlu0 %633, %v528
    %v635 = vpop.permute.xlu0 %634
    %638 = vset.pattern.permute.xlu0 0
    %639 = vperm.xlu0 %638, %v529
    %v640 = vpop.permute.xlu0 %639
    %643 = vset.pattern.permute.xlu0 0
    %644 = vperm.xlu0 %643, %v530
    %v645 = vpop.permute.xlu0 %644
    %648 = vset.pattern.permute.xlu0 0
    %649 = vperm.xlu0 %648, %v531
    %v650 = vpop.permute.xlu0 %649
    %653 = vset.pattern.permute.xlu0 0
    %654 = vperm.xlu0 %653, %v532
    %v655 = vpop.permute.xlu0 %654
    %658 = vset.pattern.permute.xlu0 0
    %659 = vperm.xlu0 %658, %v533
    %v660 = vpop.permute.xlu0 %659
    %663 = vset.pattern.permute.xlu0 0
    %664 = vperm.xlu0 %663, %v534
    %v665 = vpop.permute.xlu0 %664
    %668 = vset.pattern.permute.xlu0 0
    %669 = vperm.xlu0 %668, %v535
    %v670 = vpop.permute.xlu0 %669
    %673 = vset.pattern.permute.xlu0 0
    %674 = vperm.xlu0 %673, %v536
    %v675 = vpop.permute.xlu0 %674
    %678 = vset.pattern.permute.xlu0 0
    %679 = vperm.xlu0 %678, %v537
    %v680 = vpop.permute.xlu0 %679
    %683 = vset.pattern.permute.xlu0 0
    %684 = vperm.xlu0 %683, %v538
    %v685 = vpop.permute.xlu0 %684
    %688 = vset.pattern.permute.xlu0 0
    %689 = vperm.xlu0 %688, %v539
    %v690 = vpop.permute.xlu0 %689
    %693 = vset.pattern.permute.xlu0 0
    %694 = vperm.xlu0 %693, %v540
    %v695 = vpop.permute.xlu0 %694
    %698 = vset.pattern.permute.xlu0 0
    %699 = vperm.xlu0 %698, %v541
    %v700 = vpop.permute.xlu0 %699
    %v702 = vsub.f32 %v462, %v625
    %v703 = vsub.f32 %v463, %v630
    %v704 = vsub.f32 %v464, %v635
    %v705 = vsub.f32 %v465, %v640
    %v706 = vsub.f32 %v466, %v645
    %v707 = vsub.f32 %v467, %v650
    %v708 = vsub.f32 %v468, %v655
    %v709 = vsub.f32 %v469, %v660
    %v710 = vsub.f32 %v470, %v665
    %v711 = vsub.f32 %v471, %v670
    %v712 = vsub.f32 %v472, %v675
    %v713 = vsub.f32 %v473, %v680
    %v714 = vsub.f32 %v474, %v685
    %v715 = vsub.f32 %v475, %v690
    %v716 = vsub.f32 %v476, %v695
    %v717 = vsub.f32 %v477, %v700
    %v718 = vmul.f32 %v702, 1.442695
    %v719 = vpow.pop %v718
    %v720 = vmul.f32 %v703, 1.442695
    %v721 = vpow.pop %v720
    %v722 = vmul.f32 %v704, 1.442695
    %v723 = vpow.pop %v722
    %v724 = vmul.f32 %v705, 1.442695
    %v725 = vpow.pop %v724
    %v726 = vmul.f32 %v706, 1.442695
    %v727 = vpow.pop %v726
    %v728 = vmul.f32 %v707, 1.442695
    %v729 = vpow.pop %v728
    %v730 = vmul.f32 %v708, 1.442695
    %v731 = vpow.pop %v730
    %v732 = vmul.f32 %v709, 1.442695
    %v733 = vpow.pop %v732
    %v734 = vmul.f32 %v710, 1.442695
    %v735 = vpow.pop %v734
    %v736 = vmul.f32 %v711, 1.442695
    %v737 = vpow.pop %v736
    %v738 = vmul.f32 %v712, 1.442695
    %v739 = vpow.pop %v738
    %v740 = vmul.f32 %v713, 1.442695
    %v741 = vpow.pop %v740
    %v742 = vmul.f32 %v714, 1.442695
    %v743 = vpow.pop %v742
    %v744 = vmul.f32 %v715, 1.442695
    %v745 = vpow.pop %v744
    %v746 = vmul.f32 %v716, 1.442695
    %v747 = vpow.pop %v746
    %v748 = vmul.f32 %v717, 1.442695
    %v749 = vpow.pop %v748
    %750 = vadd.xlane.f32.xlu0 %v719
    %v751 = vpop.xlane.xlu0 %750
    %752 = vadd.xlane.f32.xlu0 %v721
    %v753 = vpop.xlane.xlu0 %752
    %754 = vadd.xlane.f32.xlu0 %v723
    %v755 = vpop.xlane.xlu0 %754
    %756 = vadd.xlane.f32.xlu0 %v725
    %v757 = vpop.xlane.xlu0 %756
    %758 = vadd.xlane.f32.xlu0 %v727
    %v759 = vpop.xlane.xlu0 %758
    %760 = vadd.xlane.f32.xlu0 %v729
    %v761 = vpop.xlane.xlu0 %760
    %762 = vadd.xlane.f32.xlu0 %v731
    %v763 = vpop.xlane.xlu0 %762
    %764 = vadd.xlane.f32.xlu0 %v733
    %v765 = vpop.xlane.xlu0 %764
    %766 = vadd.xlane.f32.xlu0 %v735
    %v767 = vpop.xlane.xlu0 %766
    %768 = vadd.xlane.f32.xlu0 %v737
    %v769 = vpop.xlane.xlu0 %768
    %770 = vadd.xlane.f32.xlu0 %v739
    %v771 = vpop.xlane.xlu0 %770
    %772 = vadd.xlane.f32.xlu0 %v741
    %v773 = vpop.xlane.xlu0 %772
    %774 = vadd.xlane.f32.xlu0 %v743
    %v775 = vpop.xlane.xlu0 %774
    %776 = vadd.xlane.f32.xlu0 %v745
    %v777 = vpop.xlane.xlu0 %776
    %778 = vadd.xlane.f32.xlu0 %v747
    %v779 = vpop.xlane.xlu0 %778
    %780 = vadd.xlane.f32.xlu0 %v749
    %v781 = vpop.xlane.xlu0 %780
    %v782 = vadd.f32 %v606, %v751
    %v783 = vadd.f32 %v607, %v753
    %v784 = vadd.f32 %v608, %v755
    %v785 = vadd.f32 %v609, %v757
    %v786 = vadd.f32 %v610, %v759
    %v787 = vadd.f32 %v611, %v761
    %v788 = vadd.f32 %v612, %v763
    %v789 = vadd.f32 %v613, %v765
    %v790 = vadd.f32 %v614, %v767
    %v791 = vadd.f32 %v615, %v769
    %v792 = vadd.f32 %v616, %v771
    %v793 = vadd.f32 %v617, %v773
    %v794 = vadd.f32 %v618, %v775
    %v795 = vadd.f32 %v619, %v777
    %v796 = vadd.f32 %v620, %v779
    %v797 = vadd.f32 %v621, %v781
    %vm798 = vcmask 7168
    %799 = vst.msk [vmem:[#allocation3] sm:$0xff] %vm798, %v782
    %800 = vst.msk [vmem:[#allocation3 + $0x8] sm:$0xff] %vm798, %v783
    %801 = vst.msk [vmem:[#allocation3 + $0x10] sm:$0xff] %vm798, %v784
    %802 = vst.msk [vmem:[#allocation3 + $0x18] sm:$0xff] %vm798, %v785
    %803 = vst.msk [vmem:[#allocation3 + $0x20] sm:$0xff] %vm798, %v786
    %804 = vst.msk [vmem:[#allocation3 + $0x28] sm:$0xff] %vm798, %v787
    %805 = vst.msk [vmem:[#allocation3 + $0x30] sm:$0xff] %vm798, %v788
    %806 = vst.msk [vmem:[#allocation3 + $0x38] sm:$0xff] %vm798, %v789
    %807 = vst.msk [vmem:[#allocation3 + $0x40] sm:$0xff] %vm798, %v790
    %808 = vst.msk [vmem:[#allocation3 + $0x48] sm:$0xff] %vm798, %v791
    %809 = vst.msk [vmem:[#allocation3 + $0x50] sm:$0xff] %vm798, %v792
    %810 = vst.msk [vmem:[#allocation3 + $0x58] sm:$0xff] %vm798, %v793
    %811 = vst.msk [vmem:[#allocation3 + $0x60] sm:$0xff] %vm798, %v794
    %812 = vst.msk [vmem:[#allocation3 + $0x68] sm:$0xff] %vm798, %v795
    %813 = vst.msk [vmem:[#allocation3 + $0x70] sm:$0xff] %vm798, %v796
    %814 = vst.msk [vmem:[#allocation3 + $0x78] sm:$0xff] %vm798, %v797
    %815 = vst.msk [vmem:[#allocation2] sm:$0xff] %vm798, %v526
    %816 = vst.msk [vmem:[#allocation2 + $0x8] sm:$0xff] %vm798, %v527
    %817 = vst.msk [vmem:[#allocation2 + $0x10] sm:$0xff] %vm798, %v528
    %818 = vst.msk [vmem:[#allocation2 + $0x18] sm:$0xff] %vm798, %v529
    %819 = vst.msk [vmem:[#allocation2 + $0x20] sm:$0xff] %vm798, %v530
    %820 = vst.msk [vmem:[#allocation2 + $0x28] sm:$0xff] %vm798, %v531
    %821 = vst.msk [vmem:[#allocation2 + $0x30] sm:$0xff] %vm798, %v532
    %822 = vst.msk [vmem:[#allocation2 + $0x38] sm:$0xff] %vm798, %v533
    %823 = vst.msk [vmem:[#allocation2 + $0x40] sm:$0xff] %vm798, %v534
    %824 = vst.msk [vmem:[#allocation2 + $0x48] sm:$0xff] %vm798, %v535
    %825 = vst.msk [vmem:[#allocation2 + $0x50] sm:$0xff] %vm798, %v536
    %826 = vst.msk [vmem:[#allocation2 + $0x58] sm:$0xff] %vm798, %v537
    %827 = vst.msk [vmem:[#allocation2 + $0x60] sm:$0xff] %vm798, %v538
    %828 = vst.msk [vmem:[#allocation2 + $0x68] sm:$0xff] %vm798, %v539
    %829 = vst.msk [vmem:[#allocation2 + $0x70] sm:$0xff] %vm798, %v540
    %830 = vst.msk [vmem:[#allocation2 + $0x78] sm:$0xff] %vm798, %v541
    %v831 = vld [vmem:[#allocation4] sm:$0xff]
    %v832 = vld [vmem:[#allocation4 + $0x8] sm:$0xff]
    %v833 = vld [vmem:[#allocation4 + $0x10] sm:$0xff]
    %v834 = vld [vmem:[#allocation4 + $0x18] sm:$0xff]
    %v835 = vld [vmem:[#allocation4 + $0x20] sm:$0xff]
    %v836 = vld [vmem:[#allocation4 + $0x28] sm:$0xff]
    %v837 = vld [vmem:[#allocation4 + $0x30] sm:$0xff]
    %v838 = vld [vmem:[#allocation4 + $0x38] sm:$0xff]
    %v839 = vld [vmem:[#allocation4 + $0x40] sm:$0xff]
    %v840 = vld [vmem:[#allocation4 + $0x48] sm:$0xff]
    %v841 = vld [vmem:[#allocation4 + $0x50] sm:$0xff]
    %v842 = vld [vmem:[#allocation4 + $0x58] sm:$0xff]
    %v843 = vld [vmem:[#allocation4 + $0x60] sm:$0xff]
    %v844 = vld [vmem:[#allocation4 + $0x68] sm:$0xff]
    %v845 = vld [vmem:[#allocation4 + $0x70] sm:$0xff]
    %v846 = vld [vmem:[#allocation4 + $0x78] sm:$0xff]
    %v847 = vsel %vm446, 1.0, 0.0
    %v848 = vsel %vm447, 1.0, 0.0
    %v849 = vsel %vm448, 1.0, 0.0
    %v850 = vsel %vm449, 1.0, 0.0
    %v851 = vsel %vm450, 1.0, 0.0
    %v852 = vsel %vm451, 1.0, 0.0
    %v853 = vsel %vm452, 1.0, 0.0
    %v854 = vsel %vm453, 1.0, 0.0
    %v855 = vsel %vm454, 1.0, 0.0
    %v856 = vsel %vm455, 1.0, 0.0
    %v857 = vsel %vm456, 1.0, 0.0
    %v858 = vsel %vm457, 1.0, 0.0
    %v859 = vsel %vm458, 1.0, 0.0
    %v860 = vsel %vm459, 1.0, 0.0
    %v861 = vsel %vm460, 1.0, 0.0
    %v862 = vsel %vm461, 1.0, 0.0
    %863 = vadd.xlane.f32.xlu0 %v847
    %v864 = vpop.xlane.xlu0 %863
    %865 = vadd.xlane.f32.xlu0 %v848
    %v866 = vpop.xlane.xlu0 %865
    %867 = vadd.xlane.f32.xlu0 %v849
    %v868 = vpop.xlane.xlu0 %867
    %869 = vadd.xlane.f32.xlu0 %v850
    %v870 = vpop.xlane.xlu0 %869
    %871 = vadd.xlane.f32.xlu0 %v851
    %v872 = vpop.xlane.xlu0 %871
    %873 = vadd.xlane.f32.xlu0 %v852
    %v874 = vpop.xlane.xlu0 %873
    %875 = vadd.xlane.f32.xlu0 %v853
    %v876 = vpop.xlane.xlu0 %875
    %877 = vadd.xlane.f32.xlu0 %v854
    %v878 = vpop.xlane.xlu0 %877
    %879 = vadd.xlane.f32.xlu0 %v855
    %v880 = vpop.xlane.xlu0 %879
    %881 = vadd.xlane.f32.xlu0 %v856
    %v882 = vpop.xlane.xlu0 %881
    %883 = vadd.xlane.f32.xlu0 %v857
    %v884 = vpop.xlane.xlu0 %883
    %885 = vadd.xlane.f32.xlu0 %v858
    %v886 = vpop.xlane.xlu0 %885
    %887 = vadd.xlane.f32.xlu0 %v859
    %v888 = vpop.xlane.xlu0 %887
    %889 = vadd.xlane.f32.xlu0 %v860
    %v890 = vpop.xlane.xlu0 %889
    %891 = vadd.xlane.f32.xlu0 %v861
    %v892 = vpop.xlane.xlu0 %891
    %893 = vadd.xlane.f32.xlu0 %v862
    %v894 = vpop.xlane.xlu0 %893
    %v895 = vadd.f32 %v831, %v864
    %v896 = vadd.f32 %v832, %v866
    %v897 = vadd.f32 %v833, %v868
    %v898 = vadd.f32 %v834, %v870
    %v899 = vadd.f32 %v835, %v872
    %v900 = vadd.f32 %v836, %v874
    %v901 = vadd.f32 %v837, %v876
    %v902 = vadd.f32 %v838, %v878
    %v903 = vadd.f32 %v839, %v880
    %v904 = vadd.f32 %v840, %v882
    %v905 = vadd.f32 %v841, %v884
    %v906 = vadd.f32 %v842, %v886
    %v907 = vadd.f32 %v843, %v888
    %v908 = vadd.f32 %v844, %v890
    %v909 = vadd.f32 %v845, %v892
    %v910 = vadd.f32 %v846, %v894
    %911 = vst.msk [vmem:[#allocation4] sm:$0xff] %vm798, %v895
    %912 = vst.msk [vmem:[#allocation4 + $0x8] sm:$0xff] %vm798, %v896
    %913 = vst.msk [vmem:[#allocation4 + $0x10] sm:$0xff] %vm798, %v897
    %914 = vst.msk [vmem:[#allocation4 + $0x18] sm:$0xff] %vm798, %v898
    %915 = vst.msk [vmem:[#allocation4 + $0x20] sm:$0xff] %vm798, %v899
    %916 = vst.msk [vmem:[#allocation4 + $0x28] sm:$0xff] %vm798, %v900
    %917 = vst.msk [vmem:[#allocation4 + $0x30] sm:$0xff] %vm798, %v901
    %918 = vst.msk [vmem:[#allocation4 + $0x38] sm:$0xff] %vm798, %v902
    %919 = vst.msk [vmem:[#allocation4 + $0x40] sm:$0xff] %vm798, %v903
    %920 = vst.msk [vmem:[#allocation4 + $0x48] sm:$0xff] %vm798, %v904
    %921 = vst.msk [vmem:[#allocation4 + $0x50] sm:$0xff] %vm798, %v905
    %922 = vst.msk [vmem:[#allocation4 + $0x58] sm:$0xff] %vm798, %v906
    %923 = vst.msk [vmem:[#allocation4 + $0x60] sm:$0xff] %vm798, %v907
    %924 = vst.msk [vmem:[#allocation4 + $0x68] sm:$0xff] %vm798, %v908
    %925 = vst.msk [vmem:[#allocation4 + $0x70] sm:$0xff] %vm798, %v909
    %926 = vst.msk [vmem:[#allocation4 + $0x78] sm:$0xff] %vm798, %v910
    %v927 = vld [vmem:[#allocation5] sm:$0xff]
    %v928 = vld [vmem:[#allocation5 + $0x8] sm:$0xff]
    %v929 = vld [vmem:[#allocation5 + $0x10] sm:$0xff]
    %v930 = vld [vmem:[#allocation5 + $0x18] sm:$0xff]
    %v931 = vld [vmem:[#allocation5 + $0x20] sm:$0xff]
    %v932 = vld [vmem:[#allocation5 + $0x28] sm:$0xff]
    %v933 = vld [vmem:[#allocation5 + $0x30] sm:$0xff]
    %v934 = vld [vmem:[#allocation5 + $0x38] sm:$0xff]
    %v935 = vld [vmem:[#allocation5 + $0x40] sm:$0xff]
    %v936 = vld [vmem:[#allocation5 + $0x48] sm:$0xff]
    %v937 = vld [vmem:[#allocation5 + $0x50] sm:$0xff]
    %v938 = vld [vmem:[#allocation5 + $0x58] sm:$0xff]
    %v939 = vld [vmem:[#allocation5 + $0x60] sm:$0xff]
    %v940 = vld [vmem:[#allocation5 + $0x68] sm:$0xff]
    %v941 = vld [vmem:[#allocation5 + $0x70] sm:$0xff]
    %v942 = vld [vmem:[#allocation5 + $0x78] sm:$0xff]
    %v943 = vsel %vm446, %v204, 0.0
    %v944 = vsel %vm447, %v209, 0.0
    %v945 = vsel %vm448, %v214, 0.0
    %v946 = vsel %vm449, %v219, 0.0
    %v947 = vsel %vm450, %v224, 0.0
    %v948 = vsel %vm451, %v229, 0.0
    %v949 = vsel %vm452, %v234, 0.0
    %v950 = vsel %vm453, %v239, 0.0
    %v951 = vsel %vm454, %v244, 0.0
    %v952 = vsel %vm455, %v249, 0.0
    %v953 = vsel %vm456, %v254, 0.0
    %v954 = vsel %vm457, %v259, 0.0
    %v955 = vsel %vm458, %v264, 0.0
    %v956 = vsel %vm459, %v269, 0.0
    %v957 = vsel %vm460, %v274, 0.0
    %v958 = vsel %vm461, %v279, 0.0
    %959 = vadd.xlane.f32.xlu0 %v943
    %v960 = vpop.xlane.xlu0 %959
    %961 = vadd.xlane.f32.xlu0 %v944
    %v962 = vpop.xlane.xlu0 %961
    %963 = vadd.xlane.f32.xlu0 %v945
    %v964 = vpop.xlane.xlu0 %963
    %965 = vadd.xlane.f32.xlu0 %v946
    %v966 = vpop.xlane.xlu0 %965
    %967 = vadd.xlane.f32.xlu0 %v947
    %v968 = vpop.xlane.xlu0 %967
    %969 = vadd.xlane.f32.xlu0 %v948
    %v970 = vpop.xlane.xlu0 %969
    %971 = vadd.xlane.f32.xlu0 %v949
    %v972 = vpop.xlane.xlu0 %971
    %973 = vadd.xlane.f32.xlu0 %v950
    %v974 = vpop.xlane.xlu0 %973
    %975 = vadd.xlane.f32.xlu0 %v951
    %v976 = vpop.xlane.xlu0 %975
    %977 = vadd.xlane.f32.xlu0 %v952
    %v978 = vpop.xlane.xlu0 %977
    %979 = vadd.xlane.f32.xlu0 %v953
    %v980 = vpop.xlane.xlu0 %979
    %981 = vadd.xlane.f32.xlu0 %v954
    %v982 = vpop.xlane.xlu0 %981
    %983 = vadd.xlane.f32.xlu0 %v955
    %v984 = vpop.xlane.xlu0 %983
    %985 = vadd.xlane.f32.xlu0 %v956
    %v986 = vpop.xlane.xlu0 %985
    %987 = vadd.xlane.f32.xlu0 %v957
    %v988 = vpop.xlane.xlu0 %987
    %989 = vadd.xlane.f32.xlu0 %v958
    %v990 = vpop.xlane.xlu0 %989
    %v991 = vadd.f32 %v927, %v960
    %v992 = vadd.f32 %v928, %v962
    %v993 = vadd.f32 %v929, %v964
    %v994 = vadd.f32 %v930, %v966
    %v995 = vadd.f32 %v931, %v968
    %v996 = vadd.f32 %v932, %v970
    %v997 = vadd.f32 %v933, %v972
    %v998 = vadd.f32 %v934, %v974
    %v999 = vadd.f32 %v935, %v976
    %v1000 = vadd.f32 %v936, %v978
    %v1001 = vadd.f32 %v937, %v980
    %v1002 = vadd.f32 %v938, %v982
    %v1003 = vadd.f32 %v939, %v984
    %v1004 = vadd.f32 %v940, %v986
    %v1005 = vadd.f32 %v941, %v988
    %v1006 = vadd.f32 %v942, %v990
    %1007 = vst.msk [vmem:[#allocation5] sm:$0xff] %vm798, %v991
    %1008 = vst.msk [vmem:[#allocation5 + $0x8] sm:$0xff] %vm798, %v992
    %1009 = vst.msk [vmem:[#allocation5 + $0x10] sm:$0xff] %vm798, %v993
    %1010 = vst.msk [vmem:[#allocation5 + $0x18] sm:$0xff] %vm798, %v994
    %1011 = vst.msk [vmem:[#allocation5 + $0x20] sm:$0xff] %vm798, %v995
    %1012 = vst.msk [vmem:[#allocation5 + $0x28] sm:$0xff] %vm798, %v996
    %1013 = vst.msk [vmem:[#allocation5 + $0x30] sm:$0xff] %vm798, %v997
    %1014 = vst.msk [vmem:[#allocation5 + $0x38] sm:$0xff] %vm798, %v998
    %1015 = vst.msk [vmem:[#allocation5 + $0x40] sm:$0xff] %vm798, %v999
    %1016 = vst.msk [vmem:[#allocation5 + $0x48] sm:$0xff] %vm798, %v1000
    %1017 = vst.msk [vmem:[#allocation5 + $0x50] sm:$0xff] %vm798, %v1001
    %1018 = vst.msk [vmem:[#allocation5 + $0x58] sm:$0xff] %vm798, %v1002
    %1019 = vst.msk [vmem:[#allocation5 + $0x60] sm:$0xff] %vm798, %v1003
    %1020 = vst.msk [vmem:[#allocation5 + $0x68] sm:$0xff] %vm798, %v1004
    %1021 = vst.msk [vmem:[#allocation5 + $0x70] sm:$0xff] %vm798, %v1005
    %1022 = vst.msk [vmem:[#allocation5 + $0x78] sm:$0xff] %vm798, %v1006
    // Predicated region
    $region30: #{tpu_custom_call.1} parent=1 // pred_check
      %p1023 = pneg %p34
    $region31: #{tpu_custom_call.1} parent=1 // pred_check_branch
      %1025 = sbr.rel (%p1023) target = $region33
    $region32: #{tpu_custom_call.1} parent=1 // pred_region
      %v1026 = vld [vmem:[#allocation4] sm:$0xff]
      %v1027 = vld [vmem:[#allocation4 + $0x8] sm:$0xff]
      %v1028 = vld [vmem:[#allocation4 + $0x10] sm:$0xff]
      %v1029 = vld [vmem:[#allocation4 + $0x18] sm:$0xff]
      %v1030 = vld [vmem:[#allocation4 + $0x20] sm:$0xff]
      %v1031 = vld [vmem:[#allocation4 + $0x28] sm:$0xff]
      %v1032 = vld [vmem:[#allocation4 + $0x30] sm:$0xff]
      %v1033 = vld [vmem:[#allocation4 + $0x38] sm:$0xff]
      %v1034 = vld [vmem:[#allocation4 + $0x40] sm:$0xff]
      %v1035 = vld [vmem:[#allocation4 + $0x48] sm:$0xff]
      %v1036 = vld [vmem:[#allocation4 + $0x50] sm:$0xff]
      %v1037 = vld [vmem:[#allocation4 + $0x58] sm:$0xff]
      %v1038 = vld [vmem:[#allocation4 + $0x60] sm:$0xff]
      %v1039 = vld [vmem:[#allocation4 + $0x68] sm:$0xff]
      %v1040 = vld [vmem:[#allocation4 + $0x70] sm:$0xff]
      %v1041 = vld [vmem:[#allocation4 + $0x78] sm:$0xff]
      %v1042 = vld [vmem:[#allocation2] sm:$0xff]
      %v1043 = vld [vmem:[#allocation2 + $0x8] sm:$0xff]
      %v1044 = vld [vmem:[#allocation2 + $0x10] sm:$0xff]
      %v1045 = vld [vmem:[#allocation2 + $0x18] sm:$0xff]
      %v1046 = vld [vmem:[#allocation2 + $0x20] sm:$0xff]
      %v1047 = vld [vmem:[#allocation2 + $0x28] sm:$0xff]
      %v1048 = vld [vmem:[#allocation2 + $0x30] sm:$0xff]
      %v1049 = vld [vmem:[#allocation2 + $0x38] sm:$0xff]
      %v1050 = vld [vmem:[#allocation2 + $0x40] sm:$0xff]
      %v1051 = vld [vmem:[#allocation2 + $0x48] sm:$0xff]
      %v1052 = vld [vmem:[#allocation2 + $0x50] sm:$0xff]
      %v1053 = vld [vmem:[#allocation2 + $0x58] sm:$0xff]
      %v1054 = vld [vmem:[#allocation2 + $0x60] sm:$0xff]
      %v1055 = vld [vmem:[#allocation2 + $0x68] sm:$0xff]
      %v1056 = vld [vmem:[#allocation2 + $0x70] sm:$0xff]
      %v1057 = vld [vmem:[#allocation2 + $0x78] sm:$0xff]
      %v1058 = vld [vmem:[#allocation3] sm:$0xff]
      %v1059 = vld [vmem:[#allocation3 + $0x8] sm:$0xff]
      %v1060 = vld [vmem:[#allocation3 + $0x10] sm:$0xff]
      %v1061 = vld [vmem:[#allocation3 + $0x18] sm:$0xff]
      %v1062 = vld [vmem:[#allocation3 + $0x20] sm:$0xff]
      %v1063 = vld [vmem:[#allocation3 + $0x28] sm:$0xff]
      %v1064 = vld [vmem:[#allocation3 + $0x30] sm:$0xff]
      %v1065 = vld [vmem:[#allocation3 + $0x38] sm:$0xff]
      %v1066 = vld [vmem:[#allocation3 + $0x40] sm:$0xff]
      %v1067 = vld [vmem:[#allocation3 + $0x48] sm:$0xff]
      %v1068 = vld [vmem:[#allocation3 + $0x50] sm:$0xff]
      %v1069 = vld [vmem:[#allocation3 + $0x58] sm:$0xff]
      %v1070 = vld [vmem:[#allocation3 + $0x60] sm:$0xff]
      %v1071 = vld [vmem:[#allocation3 + $0x68] sm:$0xff]
      %v1072 = vld [vmem:[#allocation3 + $0x70] sm:$0xff]
      %v1073 = vld [vmem:[#allocation3 + $0x78] sm:$0xff]
      %v1074 = vlog2.pop %v1058
      %v1075 = vmul.f32 %v1074, 0.6931472
      %v1076 = vlog2.pop %v1059
      %v1077 = vmul.f32 %v1076, 0.6931472
      %v1078 = vlog2.pop %v1060
      %v1079 = vmul.f32 %v1078, 0.6931472
      %v1080 = vlog2.pop %v1061
      %v1081 = vmul.f32 %v1080, 0.6931472
      %v1082 = vlog2.pop %v1062
      %v1083 = vmul.f32 %v1082, 0.6931472
      %v1084 = vlog2.pop %v1063
      %v1085 = vmul.f32 %v1084, 0.6931472
      %v1086 = vlog2.pop %v1064
      %v1087 = vmul.f32 %v1086, 0.6931472
      %v1088 = vlog2.pop %v1065
      %v1089 = vmul.f32 %v1088, 0.6931472
      %v1090 = vlog2.pop %v1066
      %v1091 = vmul.f32 %v1090, 0.6931472
      %v1092 = vlog2.pop %v1067
      %v1093 = vmul.f32 %v1092, 0.6931472
      %v1094 = vlog2.pop %v1068
      %v1095 = vmul.f32 %v1094, 0.6931472
      %v1096 = vlog2.pop %v1069
      %v1097 = vmul.f32 %v1096, 0.6931472
      %v1098 = vlog2.pop %v1070
      %v1099 = vmul.f32 %v1098, 0.6931472
      %v1100 = vlog2.pop %v1071
      %v1101 = vmul.f32 %v1100, 0.6931472
      %v1102 = vlog2.pop %v1072
      %v1103 = vmul.f32 %v1102, 0.6931472
      %v1104 = vlog2.pop %v1073
      %v1105 = vmul.f32 %v1104, 0.6931472
      %v1106 = vadd.f32 %v1042, %v1075
      %v1107 = vadd.f32 %v1043, %v1077
      %v1108 = vadd.f32 %v1044, %v1079
      %v1109 = vadd.f32 %v1045, %v1081
      %v1110 = vadd.f32 %v1046, %v1083
      %v1111 = vadd.f32 %v1047, %v1085
      %v1112 = vadd.f32 %v1048, %v1087
      %v1113 = vadd.f32 %v1049, %v1089
      %v1114 = vadd.f32 %v1050, %v1091
      %v1115 = vadd.f32 %v1051, %v1093
      %v1116 = vadd.f32 %v1052, %v1095
      %v1117 = vadd.f32 %v1053, %v1097
      %v1118 = vadd.f32 %v1054, %v1099
      %v1119 = vadd.f32 %v1055, %v1101
      %v1120 = vadd.f32 %v1056, %v1103
      %v1121 = vadd.f32 %v1057, %v1105
      %v1122 = vld [vmem:[#allocation5] sm:$0xff]
      %v1123 = vld [vmem:[#allocation5 + $0x8] sm:$0xff]
      %v1124 = vld [vmem:[#allocation5 + $0x10] sm:$0xff]
      %v1125 = vld [vmem:[#allocation5 + $0x18] sm:$0xff]
      %v1126 = vld [vmem:[#allocation5 + $0x20] sm:$0xff]
      %v1127 = vld [vmem:[#allocation5 + $0x28] sm:$0xff]
      %v1128 = vld [vmem:[#allocation5 + $0x30] sm:$0xff]
      %v1129 = vld [vmem:[#allocation5 + $0x38] sm:$0xff]
      %v1130 = vld [vmem:[#allocation5 + $0x40] sm:$0xff]
      %v1131 = vld [vmem:[#allocation5 + $0x48] sm:$0xff]
      %v1132 = vld [vmem:[#allocation5 + $0x50] sm:$0xff]
      %v1133 = vld [vmem:[#allocation5 + $0x58] sm:$0xff]
      %v1134 = vld [vmem:[#allocation5 + $0x60] sm:$0xff]
      %v1135 = vld [vmem:[#allocation5 + $0x68] sm:$0xff]
      %v1136 = vld [vmem:[#allocation5 + $0x70] sm:$0xff]
      %v1137 = vld [vmem:[#allocation5 + $0x78] sm:$0xff]
      %v1138 = vmul.f32 %v1106, %v1026
      %v1139 = vmul.f32 %v1107, %v1027
      %v1140 = vmul.f32 %v1108, %v1028
      %v1141 = vmul.f32 %v1109, %v1029
      %v1142 = vmul.f32 %v1110, %v1030
      %v1143 = vmul.f32 %v1111, %v1031
      %v1144 = vmul.f32 %v1112, %v1032
      %v1145 = vmul.f32 %v1113, %v1033
      %v1146 = vmul.f32 %v1114, %v1034
      %v1147 = vmul.f32 %v1115, %v1035
      %v1148 = vmul.f32 %v1116, %v1036
      %v1149 = vmul.f32 %v1117, %v1037
      %v1150 = vmul.f32 %v1118, %v1038
      %v1151 = vmul.f32 %v1119, %v1039
      %v1152 = vmul.f32 %v1120, %v1040
      %v1153 = vmul.f32 %v1121, %v1041
      %v1154 = vsub.f32 %v1122, %v1138
      %v1155 = vsub.f32 %v1123, %v1139
      %v1156 = vsub.f32 %v1124, %v1140
      %v1157 = vsub.f32 %v1125, %v1141
      %v1158 = vsub.f32 %v1126, %v1142
      %v1159 = vsub.f32 %v1127, %v1143
      %v1160 = vsub.f32 %v1128, %v1144
      %v1161 = vsub.f32 %v1129, %v1145
      %v1162 = vsub.f32 %v1130, %v1146
      %v1163 = vsub.f32 %v1131, %v1147
      %v1164 = vsub.f32 %v1132, %v1148
      %v1165 = vsub.f32 %v1133, %v1149
      %v1166 = vsub.f32 %v1134, %v1150
      %v1167 = vsub.f32 %v1135, %v1151
      %v1168 = vsub.f32 %v1136, %v1152
      %v1169 = vsub.f32 %v1137, %v1153
      %vm1170 = vcmp.gt.f32.partialorder %v1026, 0.0
      %vm1171 = vcmp.gt.f32.partialorder %v1027, 0.0
      %vm1172 = vcmp.gt.f32.partialorder %v1028, 0.0
      %vm1173 = vcmp.gt.f32.partialorder %v1029, 0.0
      %vm1174 = vcmp.gt.f32.partialorder %v1030, 0.0
      %vm1175 = vcmp.gt.f32.partialorder %v1031, 0.0
      %vm1176 = vcmp.gt.f32.partialorder %v1032, 0.0
      %vm1177 = vcmp.gt.f32.partialorder %v1033, 0.0
      %vm1178 = vcmp.gt.f32.partialorder %v1034, 0.0
      %vm1179 = vcmp.gt.f32.partialorder %v1035, 0.0
      %vm1180 = vcmp.gt.f32.partialorder %v1036, 0.0
      %vm1181 = vcmp.gt.f32.partialorder %v1037, 0.0
      %vm1182 = vcmp.gt.f32.partialorder %v1038, 0.0
      %vm1183 = vcmp.gt.f32.partialorder %v1039, 0.0
      %vm1184 = vcmp.gt.f32.partialorder %v1040, 0.0
      %vm1185 = vcmp.gt.f32.partialorder %v1041, 0.0
      %v1186 = vsel %vm1170, %v1026, 1.0
      %v1187 = vsel %vm1171, %v1027, 1.0
      %v1188 = vsel %vm1172, %v1028, 1.0
      %v1189 = vsel %vm1173, %v1029, 1.0
      %v1190 = vsel %vm1174, %v1030, 1.0
      %v1191 = vsel %vm1175, %v1031, 1.0
      %v1192 = vsel %vm1176, %v1032, 1.0
      %v1193 = vsel %vm1177, %v1033, 1.0
      %v1194 = vsel %vm1178, %v1034, 1.0
      %v1195 = vsel %vm1179, %v1035, 1.0
      %v1196 = vsel %vm1180, %v1036, 1.0
      %v1197 = vsel %vm1181, %v1037, 1.0
      %v1198 = vsel %vm1182, %v1038, 1.0
      %v1199 = vsel %vm1183, %v1039, 1.0
      %v1200 = vsel %vm1184, %v1040, 1.0
      %v1201 = vsel %vm1185, %v1041, 1.0
      %v1202 = vrcp.pop %v1186
      %v1203 = vrcp.pop %v1187
      %v1204 = vrcp.pop %v1188
      %v1205 = vrcp.pop %v1189
      %v1206 = vrcp.pop %v1190
      %v1207 = vrcp.pop %v1191
      %v1208 = vrcp.pop %v1192
      %v1209 = vrcp.pop %v1193
      %v1210 = vrcp.pop %v1194
      %v1211 = vrcp.pop %v1195
      %v1212 = vrcp.pop %v1196
      %v1213 = vrcp.pop %v1197
      %v1214 = vrcp.pop %v1198
      %v1215 = vrcp.pop %v1199
      %v1216 = vrcp.pop %v1200
      %v1217 = vrcp.pop %v1201
      %v1218 = vmul.f32 %v1186, %v1202
      %v1219 = vmul.f32 %v1187, %v1203
      %v1220 = vmul.f32 %v1188, %v1204
      %v1221 = vmul.f32 %v1189, %v1205
      %v1222 = vmul.f32 %v1190, %v1206
      %v1223 = vmul.f32 %v1191, %v1207
      %v1224 = vmul.f32 %v1192, %v1208
      %v1225 = vmul.f32 %v1193, %v1209
      %v1226 = vmul.f32 %v1194, %v1210
      %v1227 = vmul.f32 %v1195, %v1211
      %v1228 = vmul.f32 %v1196, %v1212
      %v1229 = vmul.f32 %v1197, %v1213
      %v1230 = vmul.f32 %v1198, %v1214
      %v1231 = vmul.f32 %v1199, %v1215
      %v1232 = vmul.f32 %v1200, %v1216
      %v1233 = vmul.f32 %v1201, %v1217
      %v1234 = vsub.f32 2.0, %v1218
      %v1235 = vsub.f32 2.0, %v1219
      %v1236 = vsub.f32 2.0, %v1220
      %v1237 = vsub.f32 2.0, %v1221
      %v1238 = vsub.f32 2.0, %v1222
      %v1239 = vsub.f32 2.0, %v1223
      %v1240 = vsub.f32 2.0, %v1224
      %v1241 = vsub.f32 2.0, %v1225
      %v1242 = vsub.f32 2.0, %v1226
      %v1243 = vsub.f32 2.0, %v1227
      %v1244 = vsub.f32 2.0, %v1228
      %v1245 = vsub.f32 2.0, %v1229
      %v1246 = vsub.f32 2.0, %v1230
      %v1247 = vsub.f32 2.0, %v1231
      %v1248 = vsub.f32 2.0, %v1232
      %v1249 = vsub.f32 2.0, %v1233
      %v1250 = vmul.f32 %v1202, %v1234
      %v1251 = vmul.f32 %v1203, %v1235
      %v1252 = vmul.f32 %v1204, %v1236
      %v1253 = vmul.f32 %v1205, %v1237
      %v1254 = vmul.f32 %v1206, %v1238
      %v1255 = vmul.f32 %v1207, %v1239
      %v1256 = vmul.f32 %v1208, %v1240
      %v1257 = vmul.f32 %v1209, %v1241
      %v1258 = vmul.f32 %v1210, %v1242
      %v1259 = vmul.f32 %v1211, %v1243
      %v1260 = vmul.f32 %v1212, %v1244
      %v1261 = vmul.f32 %v1213, %v1245
      %v1262 = vmul.f32 %v1214, %v1246
      %v1263 = vmul.f32 %v1215, %v1247
      %v1264 = vmul.f32 %v1216, %v1248
      %v1265 = vmul.f32 %v1217, %v1249
      %v1266 = vmul.f32 %v1154, -1.0
      %v1267 = vmul.f32 %v1155, -1.0
      %v1268 = vmul.f32 %v1156, -1.0
      %v1269 = vmul.f32 %v1157, -1.0
      %v1270 = vmul.f32 %v1158, -1.0
      %v1271 = vmul.f32 %v1159, -1.0
      %v1272 = vmul.f32 %v1160, -1.0
      %v1273 = vmul.f32 %v1161, -1.0
      %v1274 = vmul.f32 %v1162, -1.0
      %v1275 = vmul.f32 %v1163, -1.0
      %v1276 = vmul.f32 %v1164, -1.0
      %v1277 = vmul.f32 %v1165, -1.0
      %v1278 = vmul.f32 %v1166, -1.0
      %v1279 = vmul.f32 %v1167, -1.0
      %v1280 = vmul.f32 %v1168, -1.0
      %v1281 = vmul.f32 %v1169, -1.0
      %v1282 = vmul.f32 %v1266, %v1250
      %v1283 = vmul.f32 %v1267, %v1251
      %v1284 = vmul.f32 %v1268, %v1252
      %v1285 = vmul.f32 %v1269, %v1253
      %v1286 = vmul.f32 %v1270, %v1254
      %v1287 = vmul.f32 %v1271, %v1255
      %v1288 = vmul.f32 %v1272, %v1256
      %v1289 = vmul.f32 %v1273, %v1257
      %v1290 = vmul.f32 %v1274, %v1258
      %v1291 = vmul.f32 %v1275, %v1259
      %v1292 = vmul.f32 %v1276, %v1260
      %v1293 = vmul.f32 %v1277, %v1261
      %v1294 = vmul.f32 %v1278, %v1262
      %v1295 = vmul.f32 %v1279, %v1263
      %v1296 = vmul.f32 %v1280, %v1264
      %v1297 = vmul.f32 %v1281, %v1265
      %vm1298 = vcmp.lt.s32.totalorder %v301, 16
      %vm1299 = vcmp.lt.s32.totalorder %v302, 16
      %vm1300 = vcmp.lt.s32.totalorder %v303, 16
      %vm1301 = vcmp.lt.s32.totalorder %v304, 16
      %vm1302 = vcmp.lt.s32.totalorder %v305, 16
      %vm1303 = vcmp.lt.s32.totalorder %v306, 16
      %vm1304 = vcmp.lt.s32.totalorder %v307, 16
      %vm1305 = vcmp.lt.s32.totalorder %v308, 16
      %vm1306 = vcmp.lt.s32.totalorder %v309, 16
      %vm1307 = vcmp.lt.s32.totalorder %v310, 16
      %vm1308 = vcmp.lt.s32.totalorder %v311, 16
      %vm1309 = vcmp.lt.s32.totalorder %v312, 16
      %vm1310 = vcmp.lt.s32.totalorder %v313, 16
      %vm1311 = vcmp.lt.s32.totalorder %v314, 16
      %vm1312 = vcmp.lt.s32.totalorder %v315, 16
      %vm1313 = vcmp.lt.s32.totalorder %v316, 16
      %vm1314 = vmand %vm1170, %vm1298
      %vm1315 = vmand %vm1171, %vm1299
      %vm1316 = vmand %vm1172, %vm1300
      %vm1317 = vmand %vm1173, %vm1301
      %vm1318 = vmand %vm1174, %vm1302
      %vm1319 = vmand %vm1175, %vm1303
      %vm1320 = vmand %vm1176, %vm1304
      %vm1321 = vmand %vm1177, %vm1305
      %vm1322 = vmand %vm1178, %vm1306
      %vm1323 = vmand %vm1179, %vm1307
      %vm1324 = vmand %vm1180, %vm1308
      %vm1325 = vmand %vm1181, %vm1309
      %vm1326 = vmand %vm1182, %vm1310
      %vm1327 = vmand %vm1183, %vm1311
      %vm1328 = vmand %vm1184, %vm1312
      %vm1329 = vmand %vm1185, %vm1313
      %v1330 = vsel %vm1314, %v1282, 0.0
      %v1331 = vsel %vm1315, %v1283, 0.0
      %v1332 = vsel %vm1316, %v1284, 0.0
      %v1333 = vsel %vm1317, %v1285, 0.0
      %v1334 = vsel %vm1318, %v1286, 0.0
      %v1335 = vsel %vm1319, %v1287, 0.0
      %v1336 = vsel %vm1320, %v1288, 0.0
      %v1337 = vsel %vm1321, %v1289, 0.0
      %v1338 = vsel %vm1322, %v1290, 0.0
      %v1339 = vsel %vm1323, %v1291, 0.0
      %v1340 = vsel %vm1324, %v1292, 0.0
      %v1341 = vsel %vm1325, %v1293, 0.0
      %v1342 = vsel %vm1326, %v1294, 0.0
      %v1343 = vsel %vm1327, %v1295, 0.0
      %v1344 = vsel %vm1328, %v1296, 0.0
      %v1345 = vsel %vm1329, %v1297, 0.0
      %1346 = vst.msk [vmem:[%s5] sm:$0xff] %vm798, %v1330
      %1347 = vst.msk [vmem:[%s5 + $0x8] sm:$0xff] %vm798, %v1331
      %1348 = vst.msk [vmem:[%s5 + $0x10] sm:$0xff] %vm798, %v1332
      %1349 = vst.msk [vmem:[%s5 + $0x18] sm:$0xff] %vm798, %v1333
      %1350 = vst.msk [vmem:[%s5 + $0x20] sm:$0xff] %vm798, %v1334
      %1351 = vst.msk [vmem:[%s5 + $0x28] sm:$0xff] %vm798, %v1335
      %1352 = vst.msk [vmem:[%s5 + $0x30] sm:$0xff] %vm798, %v1336
      %1353 = vst.msk [vmem:[%s5 + $0x38] sm:$0xff] %vm798, %v1337
      %1354 = vst.msk [vmem:[%s5 + $0x40] sm:$0xff] %vm798, %v1338
      %1355 = vst.msk [vmem:[%s5 + $0x48] sm:$0xff] %vm798, %v1339
      %1356 = vst.msk [vmem:[%s5 + $0x50] sm:$0xff] %vm798, %v1340
      %1357 = vst.msk [vmem:[%s5 + $0x58] sm:$0xff] %vm798, %v1341
      %1358 = vst.msk [vmem:[%s5 + $0x60] sm:$0xff] %vm798, %v1342
      %1359 = vst.msk [vmem:[%s5 + $0x68] sm:$0xff] %vm798, %v1343
      %1360 = vst.msk [vmem:[%s5 + $0x70] sm:$0xff] %vm798, %v1344
      %1361 = vst.msk [vmem:[%s5 + $0x78] sm:$0xff] %vm798, %v1345
    $region33: #{tpu_custom_call.1} parent=1 // pred_fallthru
      _
    // Predicated region
    $region34: #{tpu_custom_call.1} parent=1 // pred_check
      _
    $region35: #{tpu_custom_call.1} parent=1 // pred_check_branch
      %1363 = sbr.rel (0) target = $region37
    $region36: #{tpu_custom_call.1} parent=1 // pred_region
      _
    $region37: #{tpu_custom_call.1} parent=1 // pred_fallthru
      _
    // Predicated region
    $region38: #{tpu_custom_call.1} parent=1 // pred_check
      _
    $region39: #{tpu_custom_call.1} parent=1 // pred_check_branch
      %1365 = sbr.rel (0) target = $region41
    $region40: #{tpu_custom_call.1} parent=1 // pred_region
      _
    $region41: #{tpu_custom_call.1} parent=1 // pred_fallthru
      _
    %1366 = vsyncpa [#allocation7], 1

// kernel: tpu_custom_call.1
$region0: #{tpu_custom_call.1}
  #allocation0 [shape = 'u32[]', space=smem, size = 0x4, offset = 0x4, fixed_abs, tag = 'smem constant byte address 0x4 - core index']
  #allocation1 [shape = 'u32[144,128]{1,0:T(1,128)}', space=vmem, size = 0x12000, scoped, tag = 'internal scratch']
  #allocation2 [shape = 'f32[128,1]{1,0:T(8,128)}', space=vmem, size = 0x10000, scoped, tag = 'scratch operand']
  #allocation3 [shape = 'f32[128,1]{1,0:T(8,128)}', space=vmem, size = 0x10000, scoped, tag = 'scratch operand']
  #allocation4 [shape = 'f32[128,1]{1,0:T(8,128)}', space=vmem, size = 0x10000, scoped, tag = 'scratch operand']
  #allocation5 [shape = 'f32[128,1]{1,0:T(8,128)}', space=vmem, size = 0x10000, scoped, tag = 'scratch operand']
  %s0 = inlined_call_operand.vmem [shape: s32[128,1], index: 0, kind: input, shape index: {}]
  %s1 = inlined_call_operand.vmem [shape: s32[1,128], index: 1, kind: input, shape index: {}]
  %s2 = inlined_call_operand.vmem [shape: s32[1,128], index: 2, kind: input, shape index: {}]
  %s3 = inlined_call_operand.vmem [shape: f32[128,128], index: 3, kind: input, shape index: {}]
  %s4 = inlined_call_operand.hbm [shape: f32[1,128,128], index: 4, kind: input, shape index: {}]
  %s5 = inlined_call_operand.vmem [shape: f32[128,1], index: 5, kind: output, shape index: {}]
  %s6 = sld [smem:[#allocation0]]
  $region42: #{tpu_custom_call.1} parent=0
    _
  %s8 = ssub.s32 1, %s6
  %s9 = scalar_select 0, %s8, %s6
  $region1: #{tpu_custom_call.1} parent=0
    #allocation6 [shape = 'u8[65536]{0}', space=vmem, size = 0x10000, scoped, tag = 'input window, operand 4, single buffered']
    #allocation7 [shape = 's32[1]{0}', space=sflag, size = 0x4, scoped, tag = 'scoped memory for tpu_custom_call.1']
    %10 = vsyncpa [#allocation7], 0
    // Predicated region
    $region2: #{tpu_custom_call.1} parent=1 // pred_check
      _
    $region3: #{tpu_custom_call.1} parent=1 // pred_check_branch
      %12 = sbr.rel (0) target = $region5
    $region4: #{tpu_custom_call.1} parent=1 // pred_region
      _
    $region5: #{tpu_custom_call.1} parent=1 // pred_fallthru
      _
    // Predicated region
    $region6: #{tpu_custom_call.1} parent=1 // pred_check
      _
    $region7: #{tpu_custom_call.1} parent=1 // pred_check_branch
      %14 = sbr.rel (0) target = $region9
    $region8: #{tpu_custom_call.1} parent=1 // pred_region
      _
    $region9: #{tpu_custom_call.1} parent=1 // pred_fallthru
      _
    // Predicated region
    $region10: #{tpu_custom_call.1} parent=1 // pred_check
      _
    $region11: #{tpu_custom_call.1} parent=1 // pred_check_branch
      %16 = sbr.rel (0) target = $region13
    $region12: #{tpu_custom_call.1} parent=1 // pred_region
      _
    $region13: #{tpu_custom_call.1} parent=1 // pred_fallthru
      _
    // Predicated region
    $region14: #{tpu_custom_call.1} parent=1 // pred_check
      _
    $region15: #{tpu_custom_call.1} parent=1 // pred_check_branch
      %18 = sbr.rel (0) target = $region17
    $region16: #{tpu_custom_call.1} parent=1 // pred_region
      _
    $region17: #{tpu_custom_call.1} parent=1 // pred_fallthru
      _
    // Predicated region
    $region18: #{tpu_custom_call.1} parent=1 // pred_check
      _
    $region19: #{tpu_custom_call.1} parent=1 // pred_check_branch
      %20 = sbr.rel (0) target = $region21
    $region20: #{tpu_custom_call.1} parent=1 // pred_region
      %s22 = ssub.s32 2048, 2048
      %23 = vsyncadd [#allocation7], %s22
      %s24 = sshll.u32 [#allocation6], 4
      %s25 = int_to_ptr.vmem [resolvable:$true] %s24
      %30 = dma.hbm_to_vmem [thread:$0]  %s4, 2048, %s25, [#allocation7], 128, 128, 8
    $region21: #{tpu_custom_call.1} parent=1 // pred_fallthru
      _
    // Predicated region
    $region22: #{tpu_custom_call.1} parent=1 // pred_check
      _
    $region23: #{tpu_custom_call.1} parent=1 // pred_check_branch
      %32 = sbr.rel (0) target = $region25
    $region24: #{tpu_custom_call.1} parent=1 // pred_region
      %33 = dma.done [#allocation7], 2048
    $region25: #{tpu_custom_call.1} parent=1 // pred_fallthru
      _
    %p34 = scmp.eq.s32.totalorder 0, 0
    // Predicated region
    $region26: #{tpu_custom_call.1} parent=1 // pred_check
      %p35 = pneg %p34
    $region27: #{tpu_custom_call.1} parent=1 // pred_check_branch
      %37 = sbr.rel (%p35) target = $region29
    $region28: #{tpu_custom_call.1} parent=1 // pred_region
      %vm38 = vcmask 7168
      %39 = vst.msk [vmem:[#allocation2] sm:$0xff] %vm38, -1e+30
      %40 = vst.msk [vmem:[#allocation2 + $0x8] sm:$0xff] %vm38, -1e+30
      %41 = vst.msk [vmem:[#allocation2 + $0x10] sm:$0xff] %vm38, -1e+30
      %42 = vst.msk [vmem:[#allocation2 + $0x18] sm:$0xff] %vm38, -1e+30
      %43 = vst.msk [vmem:[#allocation2 + $0x20] sm:$0xff] %vm38, -1e+30
      %44 = vst.msk [vmem:[#allocation2 + $0x28] sm:$0xff] %vm38, -1e+30
      %45 = vst.msk [vmem:[#allocation2 + $0x30] sm:$0xff] %vm38, -1e+30
      %46 = vst.msk [vmem:[#allocation2 + $0x38] sm:$0xff] %vm38, -1e+30
      %47 = vst.msk [vmem:[#allocation2 + $0x40] sm:$0xff] %vm38, -1e+30
      %48 = vst.msk [vmem:[#allocation2 + $0x48] sm:$0xff] %vm38, -1e+30
      %49 = vst.msk [vmem:[#allocation2 + $0x50] sm:$0xff] %vm38, -1e+30
      %50 = vst.msk [vmem:[#allocation2 + $0x58] sm:$0xff] %vm38, -1e+30
      %51 = vst.msk [vmem:[#allocation2 + $0x60] sm:$0xff] %vm38, -1e+30
      %52 = vst.msk [vmem:[#allocation2 + $0x68] sm:$0xff] %vm38, -1e+30
      %53 = vst.msk [vmem:[#allocation2 + $0x70] sm:$0xff] %vm38, -1e+30
      %54 = vst.msk [vmem:[#allocation2 + $0x78] sm:$0xff] %vm38, -1e+30
      %55 = vst.msk [vmem:[#allocation3] sm:$0xff] %vm38, 0.0
      %56 = vst.msk [vmem:[#allocation3 + $0x8] sm:$0xff] %vm38, 0.0
      %57 = vst.msk [vmem:[#allocation3 + $0x10] sm:$0xff] %vm38, 0.0
      %58 = vst.msk [vmem:[#allocation3 + $0x18] sm:$0xff] %vm38, 0.0
      %59 = vst.msk [vmem:[#allocation3 + $0x20] sm:$0xff] %vm38, 0.0
      %60 = vst.msk [vmem:[#allocation3 + $0x28] sm:$0xff] %vm38, 0.0
      %61 = vst.msk [vmem:[#allocation3 + $0x30] sm:$0xff] %vm38, 0.0
      %62 = vst.msk [vmem:[#allocation3 + $0x38] sm:$0xff] %vm38, 0.0
      %63 = vst.msk [vmem:[#allocation3 + $0x40] sm:$0xff] %vm38, 0.0
      %64 = vst.msk [vmem:[#allocation3 + $0x48] sm:$0xff] %vm38, 0.0
      %65 = vst.msk [vmem:[#allocation3 + $0x50] sm:$0xff] %vm38, 0.0
      %66 = vst.msk [vmem:[#allocation3 + $0x58] sm:$0xff] %vm38, 0.0
      %67 = vst.msk [vmem:[#allocation3 + $0x60] sm:$0xff] %vm38, 0.0
      %68 = vst.msk [vmem:[#allocation3 + $0x68] sm:$0xff] %vm38, 0.0
      %69 = vst.msk [vmem:[#allocation3 + $0x70] sm:$0xff] %vm38, 0.0
      %70 = vst.msk [vmem:[#allocation3 + $0x78] sm:$0xff] %vm38, 0.0
      %71 = vst.msk [vmem:[#allocation4] sm:$0xff] %vm38, 0.0
      %72 = vst.msk [vmem:[#allocation4 + $0x8] sm:$0xff] %vm38, 0.0
      %73 = vst.msk [vmem:[#allocation4 + $0x10] sm:$0xff] %vm38, 0.0
      %74 = vst.msk [vmem:[#allocation4 + $0x18] sm:$0xff] %vm38, 0.0
      %75 = vst.msk [vmem:[#allocation4 + $0x20] sm:$0xff] %vm38, 0.0
      %76 = vst.msk [vmem:[#allocation4 + $0x28] sm:$0xff] %vm38, 0.0
      %77 = vst.msk [vmem:[#allocation4 + $0x30] sm:$0xff] %vm38, 0.0
      %78 = vst.msk [vmem:[#allocation4 + $0x38] sm:$0xff] %vm38, 0.0
      %79 = vst.msk [vmem:[#allocation4 + $0x40] sm:$0xff] %vm38, 0.0
      %80 = vst.msk [vmem:[#allocation4 + $0x48] sm:$0xff] %vm38, 0.0
      %81 = vst.msk [vmem:[#allocation4 + $0x50] sm:$0xff] %vm38, 0.0
      %82 = vst.msk [vmem:[#allocation4 + $0x58] sm:$0xff] %vm38, 0.0
      %83 = vst.msk [vmem:[#allocation4 + $0x60] sm:$0xff] %vm38, 0.0
      %84 = vst.msk [vmem:[#allocation4 + $0x68] sm:$0xff] %vm38, 0.0
      %85 = vst.msk [vmem:[#allocation4 + $0x70] sm:$0xff] %vm38, 0.0
      %86 = vst.msk [vmem:[#allocation4 + $0x78] sm:$0xff] %vm38, 0.0
      %87 = vst.msk [vmem:[#allocation5] sm:$0xff] %vm38, 0.0
      %88 = vst.msk [vmem:[#allocation5 + $0x8] sm:$0xff] %vm38, 0.0
      %89 = vst.msk [vmem:[#allocation5 + $0x10] sm:$0xff] %vm38, 0.0
      %90 = vst.msk [vmem:[#allocation5 + $0x18] sm:$0xff] %vm38, 0.0
      %91 = vst.msk [vmem:[#allocation5 + $0x20] sm:$0xff] %vm38, 0.0
      %92 = vst.msk [vmem:[#allocation5 + $0x28] sm:$0xff] %vm38, 0.0
      %93 = vst.msk [vmem:[#allocation5 + $0x30] sm:$0xff] %vm38, 0.0
      %94 = vst.msk [vmem:[#allocation5 + $0x38] sm:$0xff] %vm38, 0.0
      %95 = vst.msk [vmem:[#allocation5 + $0x40] sm:$0xff] %vm38, 0.0
      %96 = vst.msk [vmem:[#allocation5 + $0x48] sm:$0xff] %vm38, 0.0
      %97 = vst.msk [vmem:[#allocation5 + $0x50] sm:$0xff] %vm38, 0.0
      %98 = vst.msk [vmem:[#allocation5 + $0x58] sm:$0xff] %vm38, 0.0
      %99 = vst.msk [vmem:[#allocation5 + $0x60] sm:$0xff] %vm38, 0.0
      %100 = vst.msk [vmem:[#allocation5 + $0x68] sm:$0xff] %vm38, 0.0
      %101 = vst.msk [vmem:[#allocation5 + $0x70] sm:$0xff] %vm38, 0.0
      %102 = vst.msk [vmem:[#allocation5 + $0x78] sm:$0xff] %vm38, 0.0
    $region29: #{tpu_custom_call.1} parent=1 // pred_fallthru
      _
    %v103 = vld [vmem:[%s3] sm:$0xff]
    %v104 = vld [vmem:[%s3 + $0x8] sm:$0xff]
    %v105 = vld [vmem:[%s3 + $0x10] sm:$0xff]
    %v106 = vld [vmem:[%s3 + $0x18] sm:$0xff]
    %v107 = vld [vmem:[%s3 + $0x20] sm:$0xff]
    %v108 = vld [vmem:[%s3 + $0x28] sm:$0xff]
    %v109 = vld [vmem:[%s3 + $0x30] sm:$0xff]
    %v110 = vld [vmem:[%s3 + $0x38] sm:$0xff]
    %v111 = vld [vmem:[%s3 + $0x40] sm:$0xff]
    %v112 = vld [vmem:[%s3 + $0x48] sm:$0xff]
    %v113 = vld [vmem:[%s3 + $0x50] sm:$0xff]
    %v114 = vld [vmem:[%s3 + $0x58] sm:$0xff]
    %v115 = vld [vmem:[%s3 + $0x60] sm:$0xff]
    %v116 = vld [vmem:[%s3 + $0x68] sm:$0xff]
    %v117 = vld [vmem:[%s3 + $0x70] sm:$0xff]
    %v118 = vld [vmem:[%s3 + $0x78] sm:$0xff]
    %s119 = smul.u32 0, 128
    %s120 = scalar_lea.vmem [#allocation6], %s119
    %v121 = vld [vmem:[%s120] sm:$0xff]
    %v122 = vld [vmem:[%s120 + $0x8] sm:$0xff]
    %v123 = vld [vmem:[%s120 + $0x10] sm:$0xff]
    %v124 = vld [vmem:[%s120 + $0x18] sm:$0xff]
    %v125 = vld [vmem:[%s120 + $0x20] sm:$0xff]
    %v126 = vld [vmem:[%s120 + $0x28] sm:$0xff]
    %v127 = vld [vmem:[%s120 + $0x30] sm:$0xff]
    %v128 = vld [vmem:[%s120 + $0x38] sm:$0xff]
    %v129 = vld [vmem:[%s120 + $0x40] sm:$0xff]
    %v130 = vld [vmem:[%s120 + $0x48] sm:$0xff]
    %v131 = vld [vmem:[%s120 + $0x50] sm:$0xff]
    %v132 = vld [vmem:[%s120 + $0x58] sm:$0xff]
    %v133 = vld [vmem:[%s120 + $0x60] sm:$0xff]
    %v134 = vld [vmem:[%s120 + $0x68] sm:$0xff]
    %v135 = vld [vmem:[%s120 + $0x70] sm:$0xff]
    %v136 = vld [vmem:[%s120 + $0x78] sm:$0xff]
    %137 = vmatprep.subr.mxu0 0.0
    %138 = vmatpush1.msra.mxu0 %v121
    %139 = vmatprep.subr.mxu0 0.0
    %140 = vmatpush1.msra.mxu0 %v122
    %141 = vmatprep.subr.mxu0 0.0
    %142 = vmatpush1.msra.mxu0 %v123
    %143 = vmatprep.subr.mxu0 0.0
    %144 = vmatpush1.msra.mxu0 %v124
    %145 = vmatprep.subr.mxu0 0.0
    %146 = vmatpush1.msra.mxu0 %v125
    %147 = vmatprep.subr.mxu0 0.0
    %148 = vmatpush1.msra.mxu0 %v126
    %149 = vmatprep.subr.mxu0 0.0
    %150 = vmatpush1.msra.mxu0 %v127
    %151 = vmatprep.subr.mxu0 0.0
    %152 = vmatpush1.msra.mxu0 %v128
    %153 = vmatprep.subr.mxu0 0.0
    %154 = vmatpush1.msra.mxu0 %v129
    %155 = vmatprep.subr.mxu0 0.0
    %156 = vmatpush1.msra.mxu0 %v130
    %157 = vmatprep.subr.mxu0 0.0
    %158 = vmatpush1.msra.mxu0 %v131
    %159 = vmatprep.subr.mxu0 0.0
    %160 = vmatpush1.msra.mxu0 %v132
    %161 = vmatprep.subr.mxu0 0.0
    %162 = vmatpush1.msra.mxu0 %v133
    %163 = vmatprep.subr.mxu0 0.0
    %164 = vmatpush1.msra.mxu0 %v134
    %165 = vmatprep.subr.mxu0 0.0
    %166 = vmatpush1.msra.mxu0 %v135
    %167 = vmatprep.subr.mxu0 0.0
    %168 = vmatpush1.msra.mxu0 %v136
    %169 = vmatprep.subr.mxu0 0.0
    %170 = vmatpush1.msra.mxu0 0.0
    %171 = vmatprep.subr.mxu0 0.0
    %172 = vmatpush1.msra.mxu0 0.0
    %173 = vmatprep.subr.mxu0 0.0
    %174 = vmatpush1.msra.mxu0 0.0
    %175 = vmatprep.subr.mxu0 0.0
    %176 = vmatpush1.msra.mxu0 0.0
    %177 = vmatprep.subr.mxu0 0.0
    %178 = vmatpush1.msra.mxu0 0.0
    %179 = vmatprep.subr.mxu0 0.0
    %180 = vmatpush1.msra.mxu0 0.0
    %181 = vmatprep.subr.mxu0 0.0
    %182 = vmatpush1.msra.mxu0 0.0
    %183 = vmatprep.subr.mxu0 0.0
    %184 = vmatpush1.msra.mxu0 0.0
    %185 = vmatprep.subr.mxu0 0.0
    %186 = vmatpush1.msra.mxu0 0.0
    %187 = vmatprep.subr.mxu0 0.0
    %188 = vmatpush1.msra.mxu0 0.0
    %189 = vmatprep.subr.mxu0 0.0
    %190 = vmatpush1.msra.mxu0 0.0
    %191 = vmatprep.subr.mxu0 0.0
    %192 = vmatpush1.msra.mxu0 0.0
    %193 = vmatprep.subr.mxu0 0.0
    %194 = vmatpush1.msra.mxu0 0.0
    %195 = vmatprep.subr.mxu0 0.0
    %196 = vmatpush1.msra.mxu0 0.0
    %197 = vmatprep.subr.mxu0 0.0
    %198 = vmatpush1.msra.mxu0 0.0
    %199 = vmatprep.subr.mxu0 0.0
    %200 = vmatpush1.msra.mxu0 0.0
    %201 = vmatprep.mubr.f32.mxu0 0.0
    %202 = vmatmul.mubr.f32.gmra.mrb[0].mxu0 %v103
    %v203 = vpop.f32.mrb[0].mxu0
    %v204 = vadd.f32 0.0, %v203
    %v205 = vpop.f32.mrb[0].mxu0
    %206 = vmatprep.mubr.f32.mxu0 0.0
    %207 = vmatmul.mubr.f32.gmra.mrb[0].mxu0 %v104
    %v208 = vpop.f32.mrb[0].mxu0
    %v209 = vadd.f32 0.0, %v208
    %v210 = vpop.f32.mrb[0].mxu0
    %211 = vmatprep.mubr.f32.mxu0 0.0
    %212 = vmatmul.mubr.f32.gmra.mrb[0].mxu0 %v105
    %v213 = vpop.f32.mrb[0].mxu0
    %v214 = vadd.f32 0.0, %v213
    %v215 = vpop.f32.mrb[0].mxu0
    %216 = vmatprep.mubr.f32.mxu0 0.0
    %217 = vmatmul.mubr.f32.gmra.mrb[0].mxu0 %v106
    %v218 = vpop.f32.mrb[0].mxu0
    %v219 = vadd.f32 0.0, %v218
    %v220 = vpop.f32.mrb[0].mxu0
    %221 = vmatprep.mubr.f32.mxu0 0.0
    %222 = vmatmul.mubr.f32.gmra.mrb[0].mxu0 %v107
    %v223 = vpop.f32.mrb[0].mxu0
    %v224 = vadd.f32 0.0, %v223
    %v225 = vpop.f32.mrb[0].mxu0
    %226 = vmatprep.mubr.f32.mxu0 0.0
    %227 = vmatmul.mubr.f32.gmra.mrb[0].mxu0 %v108
    %v228 = vpop.f32.mrb[0].mxu0
    %v229 = vadd.f32 0.0, %v228
    %v230 = vpop.f32.mrb[0].mxu0
    %231 = vmatprep.mubr.f32.mxu0 0.0
    %232 = vmatmul.mubr.f32.gmra.mrb[0].mxu0 %v109
    %v233 = vpop.f32.mrb[0].mxu0
    %v234 = vadd.f32 0.0, %v233
    %v235 = vpop.f32.mrb[0].mxu0
    %236 = vmatprep.mubr.f32.mxu0 0.0
    %237 = vmatmul.mubr.f32.gmra.mrb[0].mxu0 %v110
    %v238 = vpop.f32.mrb[0].mxu0
    %v239 = vadd.f32 0.0, %v238
    %v240 = vpop.f32.mrb[0].mxu0
    %241 = vmatprep.mubr.f32.mxu0 0.0
    %242 = vmatmul.mubr.f32.gmra.mrb[0].mxu0 %v111
    %v243 = vpop.f32.mrb[0].mxu0
    %v244 = vadd.f32 0.0, %v243
    %v245 = vpop.f32.mrb[0].mxu0
    %246 = vmatprep.mubr.f32.mxu0 0.0
    %247 = vmatmul.mubr.f32.gmra.mrb[0].mxu0 %v112
    %v248 = vpop.f32.mrb[0].mxu0
    %v249 = vadd.f32 0.0, %v248
    %v250 = vpop.f32.mrb[0].mxu0
    %251 = vmatprep.mubr.f32.mxu0 0.0
    %252 = vmatmul.mubr.f32.gmra.mrb[0].mxu0 %v113
    %v253 = vpop.f32.mrb[0].mxu0
    %v254 = vadd.f32 0.0, %v253
    %v255 = vpop.f32.mrb[0].mxu0
    %256 = vmatprep.mubr.f32.mxu0 0.0
    %257 = vmatmul.mubr.f32.gmra.mrb[0].mxu0 %v114
    %v258 = vpop.f32.mrb[0].mxu0
    %v259 = vadd.f32 0.0, %v258
    %v260 = vpop.f32.mrb[0].mxu0
    %261 = vmatprep.mubr.f32.mxu0 0.0
    %262 = vmatmul.mubr.f32.gmra.mrb[0].mxu0 %v115
    %v263 = vpop.f32.mrb[0].mxu0
    %v264 = vadd.f32 0.0, %v263
    %v265 = vpop.f32.mrb[0].mxu0
    %266 = vmatprep.mubr.f32.mxu0 0.0
    %267 = vmatmul.mubr.f32.gmra.mrb[0].mxu0 %v116
    %v268 = vpop.f32.mrb[0].mxu0
    %v269 = vadd.f32 0.0, %v268
    %v270 = vpop.f32.mrb[0].mxu0
    %271 = vmatprep.mubr.f32.mxu0 0.0
    %272 = vmatmul.mubr.f32.gmra.mrb[0].mxu0 %v117
    %v273 = vpop.f32.mrb[0].mxu0
    %v274 = vadd.f32 0.0, %v273
    %v275 = vpop.f32.mrb[0].mxu0
    %276 = vmatprep.mubr.f32.mxu0 0.0
    %277 = vmatmul.mubr.f32.gmra.mrb[0].mxu0 %v118
    %v278 = vpop.f32.mrb[0].mxu0
    %v279 = vadd.f32 0.0, %v278
    %v280 = vpop.f32.mrb[0].mxu0
    %281 = vdwg.mxu0
    %s282 = smul.u32 0, 128
    %v283 = vlaneseq
    %v284 = vshrl.u32 %v283, 7
    %v285 = vadd.s32 %v284, 8
    %v286 = vadd.s32 %v284, 16
    %v287 = vadd.s32 %v284, 24
    %v288 = vadd.s32 %v284, 32
    %v289 = vadd.s32 %v284, 40
    %v290 = vadd.s32 %v284, 48
    %v291 = vadd.s32 %v284, 56
    %v292 = vadd.s32 %v284, 64
    %v293 = vadd.s32 %v284, 72
    %v294 = vadd.s32 %v284, 80
    %v295 = vadd.s32 %v284, 88
    %v296 = vadd.s32 %v284, 96
    %v297 = vadd.s32 %v284, 104
    %v298 = vadd.s32 %v284, 112
    %v299 = vadd.s32 %v284, 120
    %v300 = vstv %s282
    %v301 = vadd.s32 %v300, %v284
    %v302 = vadd.s32 %v300, %v285
    %v303 = vadd.s32 %v300, %v286
    %v304 = vadd.s32 %v300, %v287
    %v305 = vadd.s32 %v300, %v288
    %v306 = vadd.s32 %v300, %v289
    %v307 = vadd.s32 %v300, %v290
    %v308 = vadd.s32 %v300, %v291
    %v309 = vadd.s32 %v300, %v292
    %v310 = vadd.s32 %v300, %v293
    %v311 = vadd.s32 %v300, %v294
    %v312 = vadd.s32 %v300, %v295
    %v313 = vadd.s32 %v300, %v296
    %v314 = vadd.s32 %v300, %v297
    %v315 = vadd.s32 %v300, %v298
    %v316 = vadd.s32 %v300, %v299
    %v317 = vld [vmem:[%s2] sm:$0x1]
    %v318 = vlaneseq
    %v319 = vshrl.u32 %v318, 7
    %v320 = vsub.s32 0, %v319
    %v321 = vrot.slane %v317, %v320
    %vm322 = vcmp.ne.s32.totalorder %v321, %v301
    %vm323 = vcmp.ne.s32.totalorder %v321, %v302
    %vm324 = vcmp.ne.s32.totalorder %v321, %v303
    %vm325 = vcmp.ne.s32.totalorder %v321, %v304
    %vm326 = vcmp.ne.s32.totalorder %v321, %v305
    %vm327 = vcmp.ne.s32.totalorder %v321, %v306
    %vm328 = vcmp.ne.s32.totalorder %v321, %v307
    %vm329 = vcmp.ne.s32.totalorder %v321, %v308
    %vm330 = vcmp.ne.s32.totalorder %v321, %v309
    %vm331 = vcmp.ne.s32.totalorder %v321, %v310
    %vm332 = vcmp.ne.s32.totalorder %v321, %v311
    %vm333 = vcmp.ne.s32.totalorder %v321, %v312
    %vm334 = vcmp.ne.s32.totalorder %v321, %v313
    %vm335 = vcmp.ne.s32.totalorder %v321, %v314
    %vm336 = vcmp.ne.s32.totalorder %v321, %v315
    %vm337 = vcmp.ne.s32.totalorder %v321, %v316
    %vm338 = vcmp.lt.s32.totalorder %v317, 16
    %v339 = vsel %vm338, 1, 0
    %v340 = vlaneseq
    %v341 = vshrl.u32 %v340, 7
    %v342 = vsub.s32 0, %v341
    %v343 = vrot.slane %v339, %v342
    %vm344 = vcmp.eq.s32.totalorder %v343, 1
    %vm345 = vmand %vm322, %vm344
    %vm346 = vmand %vm323, %vm344
    %vm347 = vmand %vm324, %vm344
    %vm348 = vmand %vm325, %vm344
    %vm349 = vmand %vm326, %vm344
    %vm350 = vmand %vm327, %vm344
    %vm351 = vmand %vm328, %vm344
    %vm352 = vmand %vm329, %vm344
    %vm353 = vmand %vm330, %vm344
    %vm354 = vmand %vm331, %vm344
    %vm355 = vmand %vm332, %vm344
    %vm356 = vmand %vm333, %vm344
    %vm357 = vmand %vm334, %vm344
    %vm358 = vmand %vm335, %vm344
    %vm359 = vmand %vm336, %vm344
    %vm360 = vmand %vm337, %vm344
    %v361 = vld [vmem:[%s1] sm:$0x1]
    %v362 = vld [vmem:[%s0] sm:$0xff]
    %v363 = vld [vmem:[%s0 + $0x8] sm:$0xff]
    %v364 = vld [vmem:[%s0 + $0x10] sm:$0xff]
    %v365 = vld [vmem:[%s0 + $0x18] sm:$0xff]
    %v366 = vld [vmem:[%s0 + $0x20] sm:$0xff]
    %v367 = vld [vmem:[%s0 + $0x28] sm:$0xff]
    %v368 = vld [vmem:[%s0 + $0x30] sm:$0xff]
    %v369 = vld [vmem:[%s0 + $0x38] sm:$0xff]
    %v370 = vld [vmem:[%s0 + $0x40] sm:$0xff]
    %v371 = vld [vmem:[%s0 + $0x48] sm:$0xff]
    %v372 = vld [vmem:[%s0 + $0x50] sm:$0xff]
    %v373 = vld [vmem:[%s0 + $0x58] sm:$0xff]
    %v374 = vld [vmem:[%s0 + $0x60] sm:$0xff]
    %v375 = vld [vmem:[%s0 + $0x68] sm:$0xff]
    %v376 = vld [vmem:[%s0 + $0x70] sm:$0xff]
    %v377 = vld [vmem:[%s0 + $0x78] sm:$0xff]
    %v378 = vlaneseq
    %v379 = vshrl.u32 %v378, 7
    %v380 = vsub.s32 0, %v379
    %v381 = vrot.slane %v361, %v380
    %382 = vset.pattern.permute.xlu0 0
    %383 = vperm.xlu0 %382, %v362
    %v384 = vpop.permute.xlu0 %383
    %385 = vset.pattern.permute.xlu0 0
    %386 = vperm.xlu0 %385, %v363
    %v387 = vpop.permute.xlu0 %386
    %388 = vset.pattern.permute.xlu0 0
    %389 = vperm.xlu0 %388, %v364
    %v390 = vpop.permute.xlu0 %389
    %391 = vset.pattern.permute.xlu0 0
    %392 = vperm.xlu0 %391, %v365
    %v393 = vpop.permute.xlu0 %392
    %394 = vset.pattern.permute.xlu0 0
    %395 = vperm.xlu0 %394, %v366
    %v396 = vpop.permute.xlu0 %395
    %397 = vset.pattern.permute.xlu0 0
    %398 = vperm.xlu0 %397, %v367
    %v399 = vpop.permute.xlu0 %398
    %400 = vset.pattern.permute.xlu0 0
    %401 = vperm.xlu0 %400, %v368
    %v402 = vpop.permute.xlu0 %401
    %403 = vset.pattern.permute.xlu0 0
    %404 = vperm.xlu0 %403, %v369
    %v405 = vpop.permute.xlu0 %404
    %406 = vset.pattern.permute.xlu0 0
    %407 = vperm.xlu0 %406, %v370
    %v408 = vpop.permute.xlu0 %407
    %409 = vset.pattern.permute.xlu0 0
    %410 = vperm.xlu0 %409, %v371
    %v411 = vpop.permute.xlu0 %410
    %412 = vset.pattern.permute.xlu0 0
    %413 = vperm.xlu0 %412, %v372
    %v414 = vpop.permute.xlu0 %413
    %415 = vset.pattern.permute.xlu0 0
    %416 = vperm.xlu0 %415, %v373
    %v417 = vpop.permute.xlu0 %416
    %418 = vset.pattern.permute.xlu0 0
    %419 = vperm.xlu0 %418, %v374
    %v420 = vpop.permute.xlu0 %419
    %421 = vset.pattern.permute.xlu0 0
    %422 = vperm.xlu0 %421, %v375
    %v423 = vpop.permute.xlu0 %422
    %424 = vset.pattern.permute.xlu0 0
    %425 = vperm.xlu0 %424, %v376
    %v426 = vpop.permute.xlu0 %425
    %427 = vset.pattern.permute.xlu0 0
    %428 = vperm.xlu0 %427, %v377
    %v429 = vpop.permute.xlu0 %428
    %vm430 = vcmp.eq.s32.totalorder %v381, %v384
    %vm431 = vcmp.eq.s32.totalorder %v381, %v387
    %vm432 = vcmp.eq.s32.totalorder %v381, %v390
    %vm433 = vcmp.eq.s32.totalorder %v381, %v393
    %vm434 = vcmp.eq.s32.totalorder %v381, %v396
    %vm435 = vcmp.eq.s32.totalorder %v381, %v399
    %vm436 = vcmp.eq.s32.totalorder %v381, %v402
    %vm437 = vcmp.eq.s32.totalorder %v381, %v405
    %vm438 = vcmp.eq.s32.totalorder %v381, %v408
    %vm439 = vcmp.eq.s32.totalorder %v381, %v411
    %vm440 = vcmp.eq.s32.totalorder %v381, %v414
    %vm441 = vcmp.eq.s32.totalorder %v381, %v417
    %vm442 = vcmp.eq.s32.totalorder %v381, %v420
    %vm443 = vcmp.eq.s32.totalorder %v381, %v423
    %vm444 = vcmp.eq.s32.totalorder %v381, %v426
    %vm445 = vcmp.eq.s32.totalorder %v381, %v429
    %vm446 = vmand %vm430, %vm345
    %vm447 = vmand %vm431, %vm346
    %vm448 = vmand %vm432, %vm347
    %vm449 = vmand %vm433, %vm348
    %vm450 = vmand %vm434, %vm349
    %vm451 = vmand %vm435, %vm350
    %vm452 = vmand %vm436, %vm351
    %vm453 = vmand %vm437, %vm352
    %vm454 = vmand %vm438, %vm353
    %vm455 = vmand %vm439, %vm354
    %vm456 = vmand %vm440, %vm355
    %vm457 = vmand %vm441, %vm356
    %vm458 = vmand %vm442, %vm357
    %vm459 = vmand %vm443, %vm358
    %vm460 = vmand %vm444, %vm359
    %vm461 = vmand %vm445, %vm360
    %v462 = vsel %vm345, %v204, -1e+30
    %v463 = vsel %vm346, %v209, -1e+30
    %v464 = vsel %vm347, %v214, -1e+30
    %v465 = vsel %vm348, %v219, -1e+30
    %v466 = vsel %vm349, %v224, -1e+30
    %v467 = vsel %vm350, %v229, -1e+30
    %v468 = vsel %vm351, %v234, -1e+30
    %v469 = vsel %vm352, %v239, -1e+30
    %v470 = vsel %vm353, %v244, -1e+30
    %v471 = vsel %vm354, %v249, -1e+30
    %v472 = vsel %vm355, %v254, -1e+30
    %v473 = vsel %vm356, %v259, -1e+30
    %v474 = vsel %vm357, %v264, -1e+30
    %v475 = vsel %vm358, %v269, -1e+30
    %v476 = vsel %vm359, %v274, -1e+30
    %v477 = vsel %vm360, %v279, -1e+30
    %v478 = vld [vmem:[#allocation2] sm:$0xff]
    %v479 = vld [vmem:[#allocation2 + $0x8] sm:$0xff]
    %v480 = vld [vmem:[#allocation2 + $0x10] sm:$0xff]
    %v481 = vld [vmem:[#allocation2 + $0x18] sm:$0xff]
    %v482 = vld [vmem:[#allocation2 + $0x20] sm:$0xff]
    %v483 = vld [vmem:[#allocation2 + $0x28] sm:$0xff]
    %v484 = vld [vmem:[#allocation2 + $0x30] sm:$0xff]
    %v485 = vld [vmem:[#allocation2 + $0x38] sm:$0xff]
    %v486 = vld [vmem:[#allocation2 + $0x40] sm:$0xff]
    %v487 = vld [vmem:[#allocation2 + $0x48] sm:$0xff]
    %v488 = vld [vmem:[#allocation2 + $0x50] sm:$0xff]
    %v489 = vld [vmem:[#allocation2 + $0x58] sm:$0xff]
    %v490 = vld [vmem:[#allocation2 + $0x60] sm:$0xff]
    %v491 = vld [vmem:[#allocation2 + $0x68] sm:$0xff]
    %v492 = vld [vmem:[#allocation2 + $0x70] sm:$0xff]
    %v493 = vld [vmem:[#allocation2 + $0x78] sm:$0xff]
    %494 = vmax.xlane.f32.xlu0 %v462
    %v495 = vpop.xlane.xlu0 %494
    %496 = vmax.xlane.f32.xlu0 %v463
    %v497 = vpop.xlane.xlu0 %496
    %498 = vmax.xlane.f32.xlu0 %v464
    %v499 = vpop.xlane.xlu0 %498
    %500 = vmax.xlane.f32.xlu0 %v465
    %v501 = vpop.xlane.xlu0 %500
    %502 = vmax.xlane.f32.xlu0 %v466
    %v503 = vpop.xlane.xlu0 %502
    %504 = vmax.xlane.f32.xlu0 %v467
    %v505 = vpop.xlane.xlu0 %504
    %506 = vmax.xlane.f32.xlu0 %v468
    %v507 = vpop.xlane.xlu0 %506
    %508 = vmax.xlane.f32.xlu0 %v469
    %v509 = vpop.xlane.xlu0 %508
    %510 = vmax.xlane.f32.xlu0 %v470
    %v511 = vpop.xlane.xlu0 %510
    %512 = vmax.xlane.f32.xlu0 %v471
    %v513 = vpop.xlane.xlu0 %512
    %514 = vmax.xlane.f32.xlu0 %v472
    %v515 = vpop.xlane.xlu0 %514
    %516 = vmax.xlane.f32.xlu0 %v473
    %v517 = vpop.xlane.xlu0 %516
    %518 = vmax.xlane.f32.xlu0 %v474
    %v519 = vpop.xlane.xlu0 %518
    %520 = vmax.xlane.f32.xlu0 %v475
    %v521 = vpop.xlane.xlu0 %520
    %522 = vmax.xlane.f32.xlu0 %v476
    %v523 = vpop.xlane.xlu0 %522
    %524 = vmax.xlane.f32.xlu0 %v477
    %v525 = vpop.xlane.xlu0 %524
    %v526 = vmax.f32 %v478, %v495
    %v527 = vmax.f32 %v479, %v497
    %v528 = vmax.f32 %v480, %v499
    %v529 = vmax.f32 %v481, %v501
    %v530 = vmax.f32 %v482, %v503
    %v531 = vmax.f32 %v483, %v505
    %v532 = vmax.f32 %v484, %v507
    %v533 = vmax.f32 %v485, %v509
    %v534 = vmax.f32 %v486, %v511
    %v535 = vmax.f32 %v487, %v513
    %v536 = vmax.f32 %v488, %v515
    %v537 = vmax.f32 %v489, %v517
    %v538 = vmax.f32 %v490, %v519
    %v539 = vmax.f32 %v491, %v521
    %v540 = vmax.f32 %v492, %v523
    %v541 = vmax.f32 %v493, %v525
    %v542 = vsub.f32 %v478, %v526
    %v543 = vsub.f32 %v479, %v527
    %v544 = vsub.f32 %v480, %v528
    %v545 = vsub.f32 %v481, %v529
    %v546 = vsub.f32 %v482, %v530
    %v547 = vsub.f32 %v483, %v531
    %v548 = vsub.f32 %v484, %v532
    %v549 = vsub.f32 %v485, %v533
    %v550 = vsub.f32 %v486, %v534
    %v551 = vsub.f32 %v487, %v535
    %v552 = vsub.f32 %v488, %v536
    %v553 = vsub.f32 %v489, %v537
    %v554 = vsub.f32 %v490, %v538
    %v555 = vsub.f32 %v491, %v539
    %v556 = vsub.f32 %v492, %v540
    %v557 = vsub.f32 %v493, %v541
    %v558 = vmul.f32 %v542, 1.442695
    %v559 = vpow.pop %v558
    %v560 = vmul.f32 %v543, 1.442695
    %v561 = vpow.pop %v560
    %v562 = vmul.f32 %v544, 1.442695
    %v563 = vpow.pop %v562
    %v564 = vmul.f32 %v545, 1.442695
    %v565 = vpow.pop %v564
    %v566 = vmul.f32 %v546, 1.442695
    %v567 = vpow.pop %v566
    %v568 = vmul.f32 %v547, 1.442695
    %v569 = vpow.pop %v568
    %v570 = vmul.f32 %v548, 1.442695
    %v571 = vpow.pop %v570
    %v572 = vmul.f32 %v549, 1.442695
    %v573 = vpow.pop %v572
    %v574 = vmul.f32 %v550, 1.442695
    %v575 = vpow.pop %v574
    %v576 = vmul.f32 %v551, 1.442695
    %v577 = vpow.pop %v576
    %v578 = vmul.f32 %v552, 1.442695
    %v579 = vpow.pop %v578
    %v580 = vmul.f32 %v553, 1.442695
    %v581 = vpow.pop %v580
    %v582 = vmul.f32 %v554, 1.442695
    %v583 = vpow.pop %v582
    %v584 = vmul.f32 %v555, 1.442695
    %v585 = vpow.pop %v584
    %v586 = vmul.f32 %v556, 1.442695
    %v587 = vpow.pop %v586
    %v588 = vmul.f32 %v557, 1.442695
    %v589 = vpow.pop %v588
    %v590 = vld [vmem:[#allocation3] sm:$0xff]
    %v591 = vld [vmem:[#allocation3 + $0x8] sm:$0xff]
    %v592 = vld [vmem:[#allocation3 + $0x10] sm:$0xff]
    %v593 = vld [vmem:[#allocation3 + $0x18] sm:$0xff]
    %v594 = vld [vmem:[#allocation3 + $0x20] sm:$0xff]
    %v595 = vld [vmem:[#allocation3 + $0x28] sm:$0xff]
    %v596 = vld [vmem:[#allocation3 + $0x30] sm:$0xff]
    %v597 = vld [vmem:[#allocation3 + $0x38] sm:$0xff]
    %v598 = vld [vmem:[#allocation3 + $0x40] sm:$0xff]
    %v599 = vld [vmem:[#allocation3 + $0x48] sm:$0xff]
    %v600 = vld [vmem:[#allocation3 + $0x50] sm:$0xff]
    %v601 = vld [vmem:[#allocation3 + $0x58] sm:$0xff]
    %v602 = vld [vmem:[#allocation3 + $0x60] sm:$0xff]
    %v603 = vld [vmem:[#allocation3 + $0x68] sm:$0xff]
    %v604 = vld [vmem:[#allocation3 + $0x70] sm:$0xff]
    %v605 = vld [vmem:[#allocation3 + $0x78] sm:$0xff]
    %v606 = vmul.f32 %v559, %v590
    %v607 = vmul.f32 %v561, %v591
    %v608 = vmul.f32 %v563, %v592
    %v609 = vmul.f32 %v565, %v593
    %v610 = vmul.f32 %v567, %v594
    %v611 = vmul.f32 %v569, %v595
    %v612 = vmul.f32 %v571, %v596
    %v613 = vmul.f32 %v573, %v597
    %v614 = vmul.f32 %v575, %v598
    %v615 = vmul.f32 %v577, %v599
    %v616 = vmul.f32 %v579, %v600
    %v617 = vmul.f32 %v581, %v601
    %v618 = vmul.f32 %v583, %v602
    %v619 = vmul.f32 %v585, %v603
    %v620 = vmul.f32 %v587, %v604
    %v621 = vmul.f32 %v589, %v605
    %623 = vset.pattern.permute.xlu0 0
    %624 = vperm.xlu0 %623, %v526
    %v625 = vpop.permute.xlu0 %624
    %628 = vset.pattern.permute.xlu0 0
    %629 = vperm.xlu0 %628, %v527
    %v630 = vpop.permute.xlu0 %629
    %633 = vset.pattern.permute.xlu0 0
    %634 = vperm.xlu0 %633, %v528
    %v635 = vpop.permute.xlu0 %634
    %638 = vset.pattern.permute.xlu0 0
    %639 = vperm.xlu0 %638, %v529
    %v640 = vpop.permute.xlu0 %639
    %643 = vset.pattern.permute.xlu0 0
    %644 = vperm.xlu0 %643, %v530
    %v645 = vpop.permute.xlu0 %644
    %648 = vset.pattern.permute.xlu0 0
    %649 = vperm.xlu0 %648, %v531
    %v650 = vpop.permute.xlu0 %649
    %653 = vset.pattern.permute.xlu0 0
    %654 = vperm.xlu0 %653, %v532
    %v655 = vpop.permute.xlu0 %654
    %658 = vset.pattern.permute.xlu0 0
    %659 = vperm.xlu0 %658, %v533
    %v660 = vpop.permute.xlu0 %659
    %663 = vset.pattern.permute.xlu0 0
    %664 = vperm.xlu0 %663, %v534
    %v665 = vpop.permute.xlu0 %664
    %668 = vset.pattern.permute.xlu0 0
    %669 = vperm.xlu0 %668, %v535
    %v670 = vpop.permute.xlu0 %669
    %673 = vset.pattern.permute.xlu0 0
    %674 = vperm.xlu0 %673, %v536
    %v675 = vpop.permute.xlu0 %674
    %678 = vset.pattern.permute.xlu0 0
    %679 = vperm.xlu0 %678, %v537
    %v680 = vpop.permute.xlu0 %679
    %683 = vset.pattern.permute.xlu0 0
    %684 = vperm.xlu0 %683, %v538
    %v685 = vpop.permute.xlu0 %684
    %688 = vset.pattern.permute.xlu0 0
    %689 = vperm.xlu0 %688, %v539
    %v690 = vpop.permute.xlu0 %689
    %693 = vset.pattern.permute.xlu0 0
    %694 = vperm.xlu0 %693, %v540
    %v695 = vpop.permute.xlu0 %694
    %698 = vset.pattern.permute.xlu0 0
    %699 = vperm.xlu0 %698, %v541
    %v700 = vpop.permute.xlu0 %699
    %v702 = vsub.f32 %v462, %v625
    %v703 = vsub.f32 %v463, %v630
    %v704 = vsub.f32 %v464, %v635
    %v705 = vsub.f32 %v465, %v640
    %v706 = vsub.f32 %v466, %v645
    %v707 = vsub.f32 %v467, %v650
    %v708 = vsub.f32 %v468, %v655
    %v709 = vsub.f32 %v469, %v660
    %v710 = vsub.f32 %v470, %v665
    %v711 = vsub.f32 %v471, %v670
    %v712 = vsub.f32 %v472, %v675
    %v713 = vsub.f32 %v473, %v680
    %v714 = vsub.f32 %v474, %v685
    %v715 = vsub.f32 %v475, %v690
    %v716 = vsub.f32 %v476, %v695
    %v717 = vsub.f32 %v477, %v700
    %v718 = vmul.f32 %v702, 1.442695
    %v719 = vpow.pop %v718
    %v720 = vmul.f32 %v703, 1.442695
    %v721 = vpow.pop %v720
    %v722 = vmul.f32 %v704, 1.442695
    %v723 = vpow.pop %v722
    %v724 = vmul.f32 %v705, 1.442695
    %v725 = vpow.pop %v724
    %v726 = vmul.f32 %v706, 1.442695
    %v727 = vpow.pop %v726
    %v728 = vmul.f32 %v707, 1.442695
    %v729 = vpow.pop %v728
    %v730 = vmul.f32 %v708, 1.442695
    %v731 = vpow.pop %v730
    %v732 = vmul.f32 %v709, 1.442695
    %v733 = vpow.pop %v732
    %v734 = vmul.f32 %v710, 1.442695
    %v735 = vpow.pop %v734
    %v736 = vmul.f32 %v711, 1.442695
    %v737 = vpow.pop %v736
    %v738 = vmul.f32 %v712, 1.442695
    %v739 = vpow.pop %v738
    %v740 = vmul.f32 %v713, 1.442695
    %v741 = vpow.pop %v740
    %v742 = vmul.f32 %v714, 1.442695
    %v743 = vpow.pop %v742
    %v744 = vmul.f32 %v715, 1.442695
    %v745 = vpow.pop %v744
    %v746 = vmul.f32 %v716, 1.442695
    %v747 = vpow.pop %v746
    %v748 = vmul.f32 %v717, 1.442695
    %v749 = vpow.pop %v748
    %750 = vadd.xlane.f32.xlu0 %v719
    %v751 = vpop.xlane.xlu0 %750
    %752 = vadd.xlane.f32.xlu0 %v721
    %v753 = vpop.xlane.xlu0 %752
    %754 = vadd.xlane.f32.xlu0 %v723
    %v755 = vpop.xlane.xlu0 %754
    %756 = vadd.xlane.f32.xlu0 %v725
    %v757 = vpop.xlane.xlu0 %756
    %758 = vadd.xlane.f32.xlu0 %v727
    %v759 = vpop.xlane.xlu0 %758
    %760 = vadd.xlane.f32.xlu0 %v729
    %v761 = vpop.xlane.xlu0 %760
    %762 = vadd.xlane.f32.xlu0 %v731
    %v763 = vpop.xlane.xlu0 %762
    %764 = vadd.xlane.f32.xlu0 %v733
    %v765 = vpop.xlane.xlu0 %764
    %766 = vadd.xlane.f32.xlu0 %v735
    %v767 = vpop.xlane.xlu0 %766
    %768 = vadd.xlane.f32.xlu0 %v737
    %v769 = vpop.xlane.xlu0 %768
    %770 = vadd.xlane.f32.xlu0 %v739
    %v771 = vpop.xlane.xlu0 %770
    %772 = vadd.xlane.f32.xlu0 %v741
    %v773 = vpop.xlane.xlu0 %772
    %774 = vadd.xlane.f32.xlu0 %v743
    %v775 = vpop.xlane.xlu0 %774
    %776 = vadd.xlane.f32.xlu0 %v745
    %v777 = vpop.xlane.xlu0 %776
    %778 = vadd.xlane.f32.xlu0 %v747
    %v779 = vpop.xlane.xlu0 %778
    %780 = vadd.xlane.f32.xlu0 %v749
    %v781 = vpop.xlane.xlu0 %780
    %v782 = vadd.f32 %v606, %v751
    %v783 = vadd.f32 %v607, %v753
    %v784 = vadd.f32 %v608, %v755
    %v785 = vadd.f32 %v609, %v757
    %v786 = vadd.f32 %v610, %v759
    %v787 = vadd.f32 %v611, %v761
    %v788 = vadd.f32 %v612, %v763
    %v789 = vadd.f32 %v613, %v765
    %v790 = vadd.f32 %v614, %v767
    %v791 = vadd.f32 %v615, %v769
    %v792 = vadd.f32 %v616, %v771
    %v793 = vadd.f32 %v617, %v773
    %v794 = vadd.f32 %v618, %v775
    %v795 = vadd.f32 %v619, %v777
    %v796 = vadd.f32 %v620, %v779
    %v797 = vadd.f32 %v621, %v781
    %vm798 = vcmask 7168
    %799 = vst.msk [vmem:[#allocation3] sm:$0xff] %vm798, %v782
    %800 = vst.msk [vmem:[#allocation3 + $0x8] sm:$0xff] %vm798, %v783
    %801 = vst.msk [vmem:[#allocation3 + $0x10] sm:$0xff] %vm798, %v784
    %802 = vst.msk [vmem:[#allocation3 + $0x18] sm:$0xff] %vm798, %v785
    %803 = vst.msk [vmem:[#allocation3 + $0x20] sm:$0xff] %vm798, %v786
    %804 = vst.msk [vmem:[#allocation3 + $0x28] sm:$0xff] %vm798, %v787
    %805 = vst.msk [vmem:[#allocation3 + $0x30] sm:$0xff] %vm798, %v788
    %806 = vst.msk [vmem:[#allocation3 + $0x38] sm:$0xff] %vm798, %v789
    %807 = vst.msk [vmem:[#allocation3 + $0x40] sm:$0xff] %vm798, %v790
    %808 = vst.msk [vmem:[#allocation3 + $0x48] sm:$0xff] %vm798, %v791
    %809 = vst.msk [vmem:[#allocation3 + $0x50] sm:$0xff] %vm798, %v792
    %810 = vst.msk [vmem:[#allocation3 + $0x58] sm:$0xff] %vm798, %v793
    %811 = vst.msk [vmem:[#allocation3 + $0x60] sm:$0xff] %vm798, %v794
    %812 = vst.msk [vmem:[#allocation3 + $0x68] sm:$0xff] %vm798, %v795
    %813 = vst.msk [vmem:[#allocation3 + $0x70] sm:$0xff] %vm798, %v796
    %814 = vst.msk [vmem:[#allocation3 + $0x78] sm:$0xff] %vm798, %v797
    %815 = vst.msk [vmem:[#allocation2] sm:$0xff] %vm798, %v526
    %816 = vst.msk [vmem:[#allocation2 + $0x8] sm:$0xff] %vm798, %v527
    %817 = vst.msk [vmem:[#allocation2 + $0x10] sm:$0xff] %vm798, %v528
    %818 = vst.msk [vmem:[#allocation2 + $0x18] sm:$0xff] %vm798, %v529
    %819 = vst.msk [vmem:[#allocation2 + $0x20] sm:$0xff] %vm798, %v530
    %820 = vst.msk [vmem:[#allocation2 + $0x28] sm:$0xff] %vm798, %v531
    %821 = vst.msk [vmem:[#allocation2 + $0x30] sm:$0xff] %vm798, %v532
    %822 = vst.msk [vmem:[#allocation2 + $0x38] sm:$0xff] %vm798, %v533
    %823 = vst.msk [vmem:[#allocation2 + $0x40] sm:$0xff] %vm798, %v534
    %824 = vst.msk [vmem:[#allocation2 + $0x48] sm:$0xff] %vm798, %v535
    %825 = vst.msk [vmem:[#allocation2 + $0x50] sm:$0xff] %vm798, %v536
    %826 = vst.msk [vmem:[#allocation2 + $0x58] sm:$0xff] %vm798, %v537
    %827 = vst.msk [vmem:[#allocation2 + $0x60] sm:$0xff] %vm798, %v538
    %828 = vst.msk [vmem:[#allocation2 + $0x68] sm:$0xff] %vm798, %v539
    %829 = vst.msk [vmem:[#allocation2 + $0x70] sm:$0xff] %vm798, %v540
    %830 = vst.msk [vmem:[#allocation2 + $0x78] sm:$0xff] %vm798, %v541
    %v831 = vld [vmem:[#allocation4] sm:$0xff]
    %v832 = vld [vmem:[#allocation4 + $0x8] sm:$0xff]
    %v833 = vld [vmem:[#allocation4 + $0x10] sm:$0xff]
    %v834 = vld [vmem:[#allocation4 + $0x18] sm:$0xff]
    %v835 = vld [vmem:[#allocation4 + $0x20] sm:$0xff]
    %v836 = vld [vmem:[#allocation4 + $0x28] sm:$0xff]
    %v837 = vld [vmem:[#allocation4 + $0x30] sm:$0xff]
    %v838 = vld [vmem:[#allocation4 + $0x38] sm:$0xff]
    %v839 = vld [vmem:[#allocation4 + $0x40] sm:$0xff]
    %v840 = vld [vmem:[#allocation4 + $0x48] sm:$0xff]
    %v841 = vld [vmem:[#allocation4 + $0x50] sm:$0xff]
    %v842 = vld [vmem:[#allocation4 + $0x58] sm:$0xff]
    %v843 = vld [vmem:[#allocation4 + $0x60] sm:$0xff]
    %v844 = vld [vmem:[#allocation4 + $0x68] sm:$0xff]
    %v845 = vld [vmem:[#allocation4 + $0x70] sm:$0xff]
    %v846 = vld [vmem:[#allocation4 + $0x78] sm:$0xff]
    %v847 = vsel %vm446, 1.0, 0.0
    %v848 = vsel %vm447, 1.0, 0.0
    %v849 = vsel %vm448, 1.0, 0.0
    %v850 = vsel %vm449, 1.0, 0.0
    %v851 = vsel %vm450, 1.0, 0.0
    %v852 = vsel %vm451, 1.0, 0.0
    %v853 = vsel %vm452, 1.0, 0.0
    %v854 = vsel %vm453, 1.0, 0.0
    %v855 = vsel %vm454, 1.0, 0.0
    %v856 = vsel %vm455, 1.0, 0.0
    %v857 = vsel %vm456, 1.0, 0.0
    %v858 = vsel %vm457, 1.0, 0.0
    %v859 = vsel %vm458, 1.0, 0.0
    %v860 = vsel %vm459, 1.0, 0.0
    %v861 = vsel %vm460, 1.0, 0.0
    %v862 = vsel %vm461, 1.0, 0.0
    %863 = vadd.xlane.f32.xlu0 %v847
    %v864 = vpop.xlane.xlu0 %863
    %865 = vadd.xlane.f32.xlu0 %v848
    %v866 = vpop.xlane.xlu0 %865
    %867 = vadd.xlane.f32.xlu0 %v849
    %v868 = vpop.xlane.xlu0 %867
    %869 = vadd.xlane.f32.xlu0 %v850
    %v870 = vpop.xlane.xlu0 %869
    %871 = vadd.xlane.f32.xlu0 %v851
    %v872 = vpop.xlane.xlu0 %871
    %873 = vadd.xlane.f32.xlu0 %v852
    %v874 = vpop.xlane.xlu0 %873
    %875 = vadd.xlane.f32.xlu0 %v853
    %v876 = vpop.xlane.xlu0 %875
    %877 = vadd.xlane.f32.xlu0 %v854
    %v878 = vpop.xlane.xlu0 %877
    %879 = vadd.xlane.f32.xlu0 %v855
    %v880 = vpop.xlane.xlu0 %879
    %881 = vadd.xlane.f32.xlu0 %v856
    %v882 = vpop.xlane.xlu0 %881
    %883 = vadd.xlane.f32.xlu0 %v857
    %v884 = vpop.xlane.xlu0 %883
    %885 = vadd.xlane.f32.xlu0 %v858
    %v886 = vpop.xlane.xlu0 %885
    %887 = vadd.xlane.f32.xlu0 %v859
    %v888 = vpop.xlane.xlu0 %887
    %889 = vadd.xlane.f32.xlu0 %v860
    %v890 = vpop.xlane.xlu0 %889
    %891 = vadd.xlane.f32.xlu0 %v861
    %v892 = vpop.xlane.xlu0 %891
    %893 = vadd.xlane.f32.xlu0 %v862
    %v894 = vpop.xlane.xlu0 %893
    %v895 = vadd.f32 %v831, %v864
    %v896 = vadd.f32 %v832, %v866
    %v897 = vadd.f32 %v833, %v868
    %v898 = vadd.f32 %v834, %v870
    %v899 = vadd.f32 %v835, %v872
    %v900 = vadd.f32 %v836, %v874
    %v901 = vadd.f32 %v837, %v876
    %v902 = vadd.f32 %v838, %v878
    %v903 = vadd.f32 %v839, %v880
    %v904 = vadd.f32 %v840, %v882
    %v905 = vadd.f32 %v841, %v884
    %v906 = vadd.f32 %v842, %v886
    %v907 = vadd.f32 %v843, %v888
    %v908 = vadd.f32 %v844, %v890
    %v909 = vadd.f32 %v845, %v892
    %v910 = vadd.f32 %v846, %v894
    %911 = vst.msk [vmem:[#allocation4] sm:$0xff] %vm798, %v895
    %912 = vst.msk [vmem:[#allocation4 + $0x8] sm:$0xff] %vm798, %v896
    %913 = vst.msk [vmem:[#allocation4 + $0x10] sm:$0xff] %vm798, %v897
    %914 = vst.msk [vmem:[#allocation4 + $0x18] sm:$0xff] %vm798, %v898
    %915 = vst.msk [vmem:[#allocation4 + $0x20] sm:$0xff] %vm798, %v899
    %916 = vst.msk [vmem:[#allocation4 + $0x28] sm:$0xff] %vm798, %v900
    %917 = vst.msk [vmem:[#allocation4 + $0x30] sm:$0xff] %vm798, %v901
    %918 = vst.msk [vmem:[#allocation4 + $0x38] sm:$0xff] %vm798, %v902
    %919 = vst.msk [vmem:[#allocation4 + $0x40] sm:$0xff] %vm798, %v903
    %920 = vst.msk [vmem:[#allocation4 + $0x48] sm:$0xff] %vm798, %v904
    %921 = vst.msk [vmem:[#allocation4 + $0x50] sm:$0xff] %vm798, %v905
    %922 = vst.msk [vmem:[#allocation4 + $0x58] sm:$0xff] %vm798, %v906
    %923 = vst.msk [vmem:[#allocation4 + $0x60] sm:$0xff] %vm798, %v907
    %924 = vst.msk [vmem:[#allocation4 + $0x68] sm:$0xff] %vm798, %v908
    %925 = vst.msk [vmem:[#allocation4 + $0x70] sm:$0xff] %vm798, %v909
    %926 = vst.msk [vmem:[#allocation4 + $0x78] sm:$0xff] %vm798, %v910
    %v927 = vld [vmem:[#allocation5] sm:$0xff]
    %v928 = vld [vmem:[#allocation5 + $0x8] sm:$0xff]
    %v929 = vld [vmem:[#allocation5 + $0x10] sm:$0xff]
    %v930 = vld [vmem:[#allocation5 + $0x18] sm:$0xff]
    %v931 = vld [vmem:[#allocation5 + $0x20] sm:$0xff]
    %v932 = vld [vmem:[#allocation5 + $0x28] sm:$0xff]
    %v933 = vld [vmem:[#allocation5 + $0x30] sm:$0xff]
    %v934 = vld [vmem:[#allocation5 + $0x38] sm:$0xff]
    %v935 = vld [vmem:[#allocation5 + $0x40] sm:$0xff]
    %v936 = vld [vmem:[#allocation5 + $0x48] sm:$0xff]
    %v937 = vld [vmem:[#allocation5 + $0x50] sm:$0xff]
    %v938 = vld [vmem:[#allocation5 + $0x58] sm:$0xff]
    %v939 = vld [vmem:[#allocation5 + $0x60] sm:$0xff]
    %v940 = vld [vmem:[#allocation5 + $0x68] sm:$0xff]
    %v941 = vld [vmem:[#allocation5 + $0x70] sm:$0xff]
    %v942 = vld [vmem:[#allocation5 + $0x78] sm:$0xff]
    %v943 = vsel %vm446, %v204, 0.0
    %v944 = vsel %vm447, %v209, 0.0
    %v945 = vsel %vm448, %v214, 0.0
    %v946 = vsel %vm449, %v219, 0.0
    %v947 = vsel %vm450, %v224, 0.0
    %v948 = vsel %vm451, %v229, 0.0
    %v949 = vsel %vm452, %v234, 0.0
    %v950 = vsel %vm453, %v239, 0.0
    %v951 = vsel %vm454, %v244, 0.0
    %v952 = vsel %vm455, %v249, 0.0
    %v953 = vsel %vm456, %v254, 0.0
    %v954 = vsel %vm457, %v259, 0.0
    %v955 = vsel %vm458, %v264, 0.0
    %v956 = vsel %vm459, %v269, 0.0
    %v957 = vsel %vm460, %v274, 0.0
    %v958 = vsel %vm461, %v279, 0.0
    %959 = vadd.xlane.f32.xlu0 %v943
    %v960 = vpop.xlane.xlu0 %959
    %961 = vadd.xlane.f32.xlu0 %v944
    %v962 = vpop.xlane.xlu0 %961
    %963 = vadd.xlane.f32.xlu0 %v945
    %v964 = vpop.xlane.xlu0 %963
    %965 = vadd.xlane.f32.xlu0 %v946
    %v966 = vpop.xlane.xlu0 %965
    %967 = vadd.xlane.f32.xlu0 %v947
    %v968 = vpop.xlane.xlu0 %967
    %969 = vadd.xlane.f32.xlu0 %v948
    %v970 = vpop.xlane.xlu0 %969
    %971 = vadd.xlane.f32.xlu0 %v949
    %v972 = vpop.xlane.xlu0 %971
    %973 = vadd.xlane.f32.xlu0 %v950
    %v974 = vpop.xlane.xlu0 %973
    %975 = vadd.xlane.f32.xlu0 %v951
    %v976 = vpop.xlane.xlu0 %975
    %977 = vadd.xlane.f32.xlu0 %v952
    %v978 = vpop.xlane.xlu0 %977
    %979 = vadd.xlane.f32.xlu0 %v953
    %v980 = vpop.xlane.xlu0 %979
    %981 = vadd.xlane.f32.xlu0 %v954
    %v982 = vpop.xlane.xlu0 %981
    %983 = vadd.xlane.f32.xlu0 %v955
    %v984 = vpop.xlane.xlu0 %983
    %985 = vadd.xlane.f32.xlu0 %v956
    %v986 = vpop.xlane.xlu0 %985
    %987 = vadd.xlane.f32.xlu0 %v957
    %v988 = vpop.xlane.xlu0 %987
    %989 = vadd.xlane.f32.xlu0 %v958
    %v990 = vpop.xlane.xlu0 %989
    %v991 = vadd.f32 %v927, %v960
    %v992 = vadd.f32 %v928, %v962
    %v993 = vadd.f32 %v929, %v964
    %v994 = vadd.f32 %v930, %v966
    %v995 = vadd.f32 %v931, %v968
    %v996 = vadd.f32 %v932, %v970
    %v997 = vadd.f32 %v933, %v972
    %v998 = vadd.f32 %v934, %v974
    %v999 = vadd.f32 %v935, %v976
    %v1000 = vadd.f32 %v936, %v978
    %v1001 = vadd.f32 %v937, %v980
    %v1002 = vadd.f32 %v938, %v982
    %v1003 = vadd.f32 %v939, %v984
    %v1004 = vadd.f32 %v940, %v986
    %v1005 = vadd.f32 %v941, %v988
    %v1006 = vadd.f32 %v942, %v990
    %1007 = vst.msk [vmem:[#allocation5] sm:$0xff] %vm798, %v991
    %1008 = vst.msk [vmem:[#allocation5 + $0x8] sm:$0xff] %vm798, %v992
    %1009 = vst.msk [vmem:[#allocation5 + $0x10] sm:$0xff] %vm798, %v993
    %1010 = vst.msk [vmem:[#allocation5 + $0x18] sm:$0xff] %vm798, %v994
    %1011 = vst.msk [vmem:[#allocation5 + $0x20] sm:$0xff] %vm798, %v995
    %1012 = vst.msk [vmem:[#allocation5 + $0x28] sm:$0xff] %vm798, %v996
    %1013 = vst.msk [vmem:[#allocation5 + $0x30] sm:$0xff] %vm798, %v997
    %1014 = vst.msk [vmem:[#allocation5 + $0x38] sm:$0xff] %vm798, %v998
    %1015 = vst.msk [vmem:[#allocation5 + $0x40] sm:$0xff] %vm798, %v999
    %1016 = vst.msk [vmem:[#allocation5 + $0x48] sm:$0xff] %vm798, %v1000
    %1017 = vst.msk [vmem:[#allocation5 + $0x50] sm:$0xff] %vm798, %v1001
    %1018 = vst.msk [vmem:[#allocation5 + $0x58] sm:$0xff] %vm798, %v1002
    %1019 = vst.msk [vmem:[#allocation5 + $0x60] sm:$0xff] %vm798, %v1003
    %1020 = vst.msk [vmem:[#allocation5 + $0x68] sm:$0xff] %vm798, %v1004
    %1021 = vst.msk [vmem:[#allocation5 + $0x70] sm:$0xff] %vm798, %v1005
    %1022 = vst.msk [vmem:[#allocation5 + $0x78] sm:$0xff] %vm798, %v1006
    // Predicated region
    $region30: #{tpu_custom_call.1} parent=1 // pred_check
      %p1023 = pneg %p34
    $region31: #{tpu_custom_call.1} parent=1 // pred_check_branch
      %1025 = sbr.rel (%p1023) target = $region33
    $region32: #{tpu_custom_call.1} parent=1 // pred_region
      %v1026 = vld [vmem:[#allocation4] sm:$0xff]
      %v1027 = vld [vmem:[#allocation4 + $0x8] sm:$0xff]
      %v1028 = vld [vmem:[#allocation4 + $0x10] sm:$0xff]
      %v1029 = vld [vmem:[#allocation4 + $0x18] sm:$0xff]
      %v1030 = vld [vmem:[#allocation4 + $0x20] sm:$0xff]
      %v1031 = vld [vmem:[#allocation4 + $0x28] sm:$0xff]
      %v1032 = vld [vmem:[#allocation4 + $0x30] sm:$0xff]
      %v1033 = vld [vmem:[#allocation4 + $0x38] sm:$0xff]
      %v1034 = vld [vmem:[#allocation4 + $0x40] sm:$0xff]
      %v1035 = vld [vmem:[#allocation4 + $0x48] sm:$0xff]
      %v1036 = vld [vmem:[#allocation4 + $0x50] sm:$0xff]
      %v1037 = vld [vmem:[#allocation4 + $0x58] sm:$0xff]
      %v1038 = vld [vmem:[#allocation4 + $0x60] sm:$0xff]
      %v1039 = vld [vmem:[#allocation4 + $0x68] sm:$0xff]
      %v1040 = vld [vmem:[#allocation4 + $0x70] sm:$0xff]
      %v1041 = vld [vmem:[#allocation4 + $0x78] sm:$0xff]
      %v1042 = vld [vmem:[#allocation2] sm:$0xff]
      %v1043 = vld [vmem:[#allocation2 + $0x8] sm:$0xff]
      %v1044 = vld [vmem:[#allocation2 + $0x10] sm:$0xff]
      %v1045 = vld [vmem:[#allocation2 + $0x18] sm:$0xff]
      %v1046 = vld [vmem:[#allocation2 + $0x20] sm:$0xff]
      %v1047 = vld [vmem:[#allocation2 + $0x28] sm:$0xff]
      %v1048 = vld [vmem:[#allocation2 + $0x30] sm:$0xff]
      %v1049 = vld [vmem:[#allocation2 + $0x38] sm:$0xff]
      %v1050 = vld [vmem:[#allocation2 + $0x40] sm:$0xff]
      %v1051 = vld [vmem:[#allocation2 + $0x48] sm:$0xff]
      %v1052 = vld [vmem:[#allocation2 + $0x50] sm:$0xff]
      %v1053 = vld [vmem:[#allocation2 + $0x58] sm:$0xff]
      %v1054 = vld [vmem:[#allocation2 + $0x60] sm:$0xff]
      %v1055 = vld [vmem:[#allocation2 + $0x68] sm:$0xff]
      %v1056 = vld [vmem:[#allocation2 + $0x70] sm:$0xff]
      %v1057 = vld [vmem:[#allocation2 + $0x78] sm:$0xff]
      %v1058 = vld [vmem:[#allocation3] sm:$0xff]
      %v1059 = vld [vmem:[#allocation3 + $0x8] sm:$0xff]
      %v1060 = vld [vmem:[#allocation3 + $0x10] sm:$0xff]
      %v1061 = vld [vmem:[#allocation3 + $0x18] sm:$0xff]
      %v1062 = vld [vmem:[#allocation3 + $0x20] sm:$0xff]
      %v1063 = vld [vmem:[#allocation3 + $0x28] sm:$0xff]
      %v1064 = vld [vmem:[#allocation3 + $0x30] sm:$0xff]
      %v1065 = vld [vmem:[#allocation3 + $0x38] sm:$0xff]
      %v1066 = vld [vmem:[#allocation3 + $0x40] sm:$0xff]
      %v1067 = vld [vmem:[#allocation3 + $0x48] sm:$0xff]
      %v1068 = vld [vmem:[#allocation3 + $0x50] sm:$0xff]
      %v1069 = vld [vmem:[#allocation3 + $0x58] sm:$0xff]
      %v1070 = vld [vmem:[#allocation3 + $0x60] sm:$0xff]
      %v1071 = vld [vmem:[#allocation3 + $0x68] sm:$0xff]
      %v1072 = vld [vmem:[#allocation3 + $0x70] sm:$0xff]
      %v1073 = vld [vmem:[#allocation3 + $0x78] sm:$0xff]
      %v1074 = vlog2.pop %v1058
      %v1075 = vmul.f32 %v1074, 0.6931472
      %v1076 = vlog2.pop %v1059
      %v1077 = vmul.f32 %v1076, 0.6931472
      %v1078 = vlog2.pop %v1060
      %v1079 = vmul.f32 %v1078, 0.6931472
      %v1080 = vlog2.pop %v1061
      %v1081 = vmul.f32 %v1080, 0.6931472
      %v1082 = vlog2.pop %v1062
      %v1083 = vmul.f32 %v1082, 0.6931472
      %v1084 = vlog2.pop %v1063
      %v1085 = vmul.f32 %v1084, 0.6931472
      %v1086 = vlog2.pop %v1064
      %v1087 = vmul.f32 %v1086, 0.6931472
      %v1088 = vlog2.pop %v1065
      %v1089 = vmul.f32 %v1088, 0.6931472
      %v1090 = vlog2.pop %v1066
      %v1091 = vmul.f32 %v1090, 0.6931472
      %v1092 = vlog2.pop %v1067
      %v1093 = vmul.f32 %v1092, 0.6931472
      %v1094 = vlog2.pop %v1068
      %v1095 = vmul.f32 %v1094, 0.6931472
      %v1096 = vlog2.pop %v1069
      %v1097 = vmul.f32 %v1096, 0.6931472
      %v1098 = vlog2.pop %v1070
      %v1099 = vmul.f32 %v1098, 0.6931472
      %v1100 = vlog2.pop %v1071
      %v1101 = vmul.f32 %v1100, 0.6931472
      %v1102 = vlog2.pop %v1072
      %v1103 = vmul.f32 %v1102, 0.6931472
      %v1104 = vlog2.pop %v1073
      %v1105 = vmul.f32 %v1104, 0.6931472
      %v1106 = vadd.f32 %v1042, %v1075
      %v1107 = vadd.f32 %v1043, %v1077
      %v1108 = vadd.f32 %v1044, %v1079
      %v1109 = vadd.f32 %v1045, %v1081
      %v1110 = vadd.f32 %v1046, %v1083
      %v1111 = vadd.f32 %v1047, %v1085
      %v1112 = vadd.f32 %v1048, %v1087
      %v1113 = vadd.f32 %v1049, %v1089
      %v1114 = vadd.f32 %v1050, %v1091
      %v1115 = vadd.f32 %v1051, %v1093
      %v1116 = vadd.f32 %v1052, %v1095
      %v1117 = vadd.f32 %v1053, %v1097
      %v1118 = vadd.f32 %v1054, %v1099
      %v1119 = vadd.f32 %v1055, %v1101
      %v1120 = vadd.f32 %v1056, %v1103
      %v1121 = vadd.f32 %v1057, %v1105
      %v1122 = vld [vmem:[#allocation5] sm:$0xff]
      %v1123 = vld [vmem:[#allocation5 + $0x8] sm:$0xff]
      %v1124 = vld [vmem:[#allocation5 + $0x10] sm:$0xff]
      %v1125 = vld [vmem:[#allocation5 + $0x18] sm:$0xff]
      %v1126 = vld [vmem:[#allocation5 + $0x20] sm:$0xff]
      %v1127 = vld [vmem:[#allocation5 + $0x28] sm:$0xff]
      %v1128 = vld [vmem:[#allocation5 + $0x30] sm:$0xff]
      %v1129 = vld [vmem:[#allocation5 + $0x38] sm:$0xff]
      %v1130 = vld [vmem:[#allocation5 + $0x40] sm:$0xff]
      %v1131 = vld [vmem:[#allocation5 + $0x48] sm:$0xff]
      %v1132 = vld [vmem:[#allocation5 + $0x50] sm:$0xff]
      %v1133 = vld [vmem:[#allocation5 + $0x58] sm:$0xff]
      %v1134 = vld [vmem:[#allocation5 + $0x60] sm:$0xff]
      %v1135 = vld [vmem:[#allocation5 + $0x68] sm:$0xff]
      %v1136 = vld [vmem:[#allocation5 + $0x70] sm:$0xff]
      %v1137 = vld [vmem:[#allocation5 + $0x78] sm:$0xff]
      %v1138 = vmul.f32 %v1106, %v1026
      %v1139 = vmul.f32 %v1107, %v1027
      %v1140 = vmul.f32 %v1108, %v1028
      %v1141 = vmul.f32 %v1109, %v1029
      %v1142 = vmul.f32 %v1110, %v1030
      %v1143 = vmul.f32 %v1111, %v1031
      %v1144 = vmul.f32 %v1112, %v1032
      %v1145 = vmul.f32 %v1113, %v1033
      %v1146 = vmul.f32 %v1114, %v1034
      %v1147 = vmul.f32 %v1115, %v1035
      %v1148 = vmul.f32 %v1116, %v1036
      %v1149 = vmul.f32 %v1117, %v1037
      %v1150 = vmul.f32 %v1118, %v1038
      %v1151 = vmul.f32 %v1119, %v1039
      %v1152 = vmul.f32 %v1120, %v1040
      %v1153 = vmul.f32 %v1121, %v1041
      %v1154 = vsub.f32 %v1122, %v1138
      %v1155 = vsub.f32 %v1123, %v1139
      %v1156 = vsub.f32 %v1124, %v1140
      %v1157 = vsub.f32 %v1125, %v1141
      %v1158 = vsub.f32 %v1126, %v1142
      %v1159 = vsub.f32 %v1127, %v1143
      %v1160 = vsub.f32 %v1128, %v1144
      %v1161 = vsub.f32 %v1129, %v1145
      %v1162 = vsub.f32 %v1130, %v1146
      %v1163 = vsub.f32 %v1131, %v1147
      %v1164 = vsub.f32 %v1132, %v1148
      %v1165 = vsub.f32 %v1133, %v1149
      %v1166 = vsub.f32 %v1134, %v1150
      %v1167 = vsub.f32 %v1135, %v1151
      %v1168 = vsub.f32 %v1136, %v1152
      %v1169 = vsub.f32 %v1137, %v1153
      %vm1170 = vcmp.gt.f32.partialorder %v1026, 0.0
      %vm1171 = vcmp.gt.f32.partialorder %v1027, 0.0
      %vm1172 = vcmp.gt.f32.partialorder %v1028, 0.0
      %vm1173 = vcmp.gt.f32.partialorder %v1029, 0.0
      %vm1174 = vcmp.gt.f32.partialorder %v1030, 0.0
      %vm1175 = vcmp.gt.f32.partialorder %v1031, 0.0
      %vm1176 = vcmp.gt.f32.partialorder %v1032, 0.0
      %vm1177 = vcmp.gt.f32.partialorder %v1033, 0.0
      %vm1178 = vcmp.gt.f32.partialorder %v1034, 0.0
      %vm1179 = vcmp.gt.f32.partialorder %v1035, 0.0
      %vm1180 = vcmp.gt.f32.partialorder %v1036, 0.0
      %vm1181 = vcmp.gt.f32.partialorder %v1037, 0.0
      %vm1182 = vcmp.gt.f32.partialorder %v1038, 0.0
      %vm1183 = vcmp.gt.f32.partialorder %v1039, 0.0
      %vm1184 = vcmp.gt.f32.partialorder %v1040, 0.0
      %vm1185 = vcmp.gt.f32.partialorder %v1041, 0.0
      %v1186 = vsel %vm1170, %v1026, 1.0
      %v1187 = vsel %vm1171, %v1027, 1.0
      %v1188 = vsel %vm1172, %v1028, 1.0
      %v1189 = vsel %vm1173, %v1029, 1.0
      %v1190 = vsel %vm1174, %v1030, 1.0
      %v1191 = vsel %vm1175, %v1031, 1.0
      %v1192 = vsel %vm1176, %v1032, 1.0
      %v1193 = vsel %vm1177, %v1033, 1.0
      %v1194 = vsel %vm1178, %v1034, 1.0
      %v1195 = vsel %vm1179, %v1035, 1.0
      %v1196 = vsel %vm1180, %v1036, 1.0
      %v1197 = vsel %vm1181, %v1037, 1.0
      %v1198 = vsel %vm1182, %v1038, 1.0
      %v1199 = vsel %vm1183, %v1039, 1.0
      %v1200 = vsel %vm1184, %v1040, 1.0
      %v1201 = vsel %vm1185, %v1041, 1.0
      %v1202 = vrcp.pop %v1186
      %v1203 = vrcp.pop %v1187
      %v1204 = vrcp.pop %v1188
      %v1205 = vrcp.pop %v1189
      %v1206 = vrcp.pop %v1190
      %v1207 = vrcp.pop %v1191
      %v1208 = vrcp.pop %v1192
      %v1209 = vrcp.pop %v1193
      %v1210 = vrcp.pop %v1194
      %v1211 = vrcp.pop %v1195
      %v1212 = vrcp.pop %v1196
      %v1213 = vrcp.pop %v1197
      %v1214 = vrcp.pop %v1198
      %v1215 = vrcp.pop %v1199
      %v1216 = vrcp.pop %v1200
      %v1217 = vrcp.pop %v1201
      %v1218 = vmul.f32 %v1186, %v1202
      %v1219 = vmul.f32 %v1187, %v1203
      %v1220 = vmul.f32 %v1188, %v1204
      %v1221 = vmul.f32 %v1189, %v1205
      %v1222 = vmul.f32 %v1190, %v1206
      %v1223 = vmul.f32 %v1191, %v1207
      %v1224 = vmul.f32 %v1192, %v1208
      %v1225 = vmul.f32 %v1193, %v1209
      %v1226 = vmul.f32 %v1194, %v1210
      %v1227 = vmul.f32 %v1195, %v1211
      %v1228 = vmul.f32 %v1196, %v1212
      %v1229 = vmul.f32 %v1197, %v1213
      %v1230 = vmul.f32 %v1198, %v1214
      %v1231 = vmul.f32 %v1199, %v1215
      %v1232 = vmul.f32 %v1200, %v1216
      %v1233 = vmul.f32 %v1201, %v1217
      %v1234 = vsub.f32 2.0, %v1218
      %v1235 = vsub.f32 2.0, %v1219
      %v1236 = vsub.f32 2.0, %v1220
      %v1237 = vsub.f32 2.0, %v1221
      %v1238 = vsub.f32 2.0, %v1222
      %v1239 = vsub.f32 2.0, %v1223
      %v1240 = vsub.f32 2.0, %v1224
      %v1241 = vsub.f32 2.0, %v1225
      %v1242 = vsub.f32 2.0, %v1226
      %v1243 = vsub.f32 2.0, %v1227
      %v1244 = vsub.f32 2.0, %v1228
      %v1245 = vsub.f32 2.0, %v1229
      %v1246 = vsub.f32 2.0, %v1230
      %v1247 = vsub.f32 2.0, %v1231
      %v1248 = vsub.f32 2.0, %v1232
      %v1249 = vsub.f32 2.0, %v1233
      %v1250 = vmul.f32 %v1202, %v1234
      %v1251 = vmul.f32 %v1203, %v1235
      %v1252 = vmul.f32 %v1204, %v1236
      %v1253 = vmul.f32 %v1205, %v1237
      %v1254 = vmul.f32 %v1206, %v1238
      %v1255 = vmul.f32 %v1207, %v1239
      %v1256 = vmul.f32 %v1208, %v1240
      %v1257 = vmul.f32 %v1209, %v1241
      %v1258 = vmul.f32 %v1210, %v1242
      %v1259 = vmul.f32 %v1211, %v1243
      %v1260 = vmul.f32 %v1212, %v1244
      %v1261 = vmul.f32 %v1213, %v1245
      %v1262 = vmul.f32 %v1214, %v1246
      %v1263 = vmul.f32 %v1215, %v1247
      %v1264 = vmul.f32 %v1216, %v1248
      %v1265 = vmul.f32 %v1217, %v1249
      %v1266 = vmul.f32 %v1154, -1.0
      %v1267 = vmul.f32 %v1155, -1.0
      %v1268 = vmul.f32 %v1156, -1.0
      %v1269 = vmul.f32 %v1157, -1.0
      %v1270 = vmul.f32 %v1158, -1.0
      %v1271 = vmul.f32 %v1159, -1.0
      %v1272 = vmul.f32 %v1160, -1.0
      %v1273 = vmul.f32 %v1161, -1.0
      %v1274 = vmul.f32 %v1162, -1.0
      %v1275 = vmul.f32 %v1163, -1.0
      %v1276 = vmul.f32 %v1164, -1.0
      %v1277 = vmul.f32 %v1165, -1.0
      %v1278 = vmul.f32 %v1166, -1.0
      %v1279 = vmul.f32 %v1167, -1.0
      %v1280 = vmul.f32 %v1168, -1.0
      %v1281 = vmul.f32 %v1169, -1.0
      %v1282 = vmul.f32 %v1266, %v1250
      %v1283 = vmul.f32 %v1267, %v1251
      %v1284 = vmul.f32 %v1268, %v1252
      %v1285 = vmul.f32 %v1269, %v1253
      %v1286 = vmul.f32 %v1270, %v1254
      %v1287 = vmul.f32 %v1271, %v1255
      %v1288 = vmul.f32 %v1272, %v1256
      %v1289 = vmul.f32 %v1273, %v1257
      %v1290 = vmul.f32 %v1274, %v1258
      %v1291 = vmul.f32 %v1275, %v1259
      %v1292 = vmul.f32 %v1276, %v1260
      %v1293 = vmul.f32 %v1277, %v1261
      %v1294 = vmul.f32 %v1278, %v1262
      %v1295 = vmul.f32 %v1279, %v1263
      %v1296 = vmul.f32 %v1280, %v1264
      %v1297 = vmul.f32 %v1281, %v1265
      %vm1298 = vcmp.lt.s32.totalorder %v301, 16
      %vm1299 = vcmp.lt.s32.totalorder %v302, 16
      %vm1300 = vcmp.lt.s32.totalorder %v303, 16
      %vm1301 = vcmp.lt.s32.totalorder %v304, 16
      %vm1302 = vcmp.lt.s32.totalorder %v305, 16
      %vm1303 = vcmp.lt.s32.totalorder %v306, 16
      %vm1304 = vcmp.lt.s32.totalorder %v307, 16
      %vm1305 = vcmp.lt.s32.totalorder %v308, 16
      %vm1306 = vcmp.lt.s32.totalorder %v309, 16
      %vm1307 = vcmp.lt.s32.totalorder %v310, 16
      %vm1308 = vcmp.lt.s32.totalorder %v311, 16
      %vm1309 = vcmp.lt.s32.totalorder %v312, 16
      %vm1310 = vcmp.lt.s32.totalorder %v313, 16
      %vm1311 = vcmp.lt.s32.totalorder %v314, 16
      %vm1312 = vcmp.lt.s32.totalorder %v315, 16
      %vm1313 = vcmp.lt.s32.totalorder %v316, 16
      %vm1314 = vmand %vm1170, %vm1298
      %vm1315 = vmand %vm1171, %vm1299
      %vm1316 = vmand %vm1172, %vm1300
      %vm1317 = vmand %vm1173, %vm1301
      %vm1318 = vmand %vm1174, %vm1302
      %vm1319 = vmand %vm1175, %vm1303
      %vm1320 = vmand %vm1176, %vm1304
      %vm1321 = vmand %vm1177, %vm1305
      %vm1322 = vmand %vm1178, %vm1306
      %vm1323 = vmand %vm1179, %vm1307
      %vm1324 = vmand %vm1180, %vm1308
      %vm1325 = vmand %vm1181, %vm1309
      %vm1326 = vmand %vm1182, %vm1310
      %vm1327 = vmand %vm1183, %vm1311
      %vm1328 = vmand %vm1184, %vm1312
      %vm1329 = vmand %vm1185, %vm1313
      %v1330 = vsel %vm1314, %v1282, 0.0
      %v1331 = vsel %vm1315, %v1283, 0.0
      %v1332 = vsel %vm1316, %v1284, 0.0
      %v1333 = vsel %vm1317, %v1285, 0.0
      %v1334 = vsel %vm1318, %v1286, 0.0
      %v1335 = vsel %vm1319, %v1287, 0.0
      %v1336 = vsel %vm1320, %v1288, 0.0
      %v1337 = vsel %vm1321, %v1289, 0.0
      %v1338 = vsel %vm1322, %v1290, 0.0
      %v1339 = vsel %vm1323, %v1291, 0.0
      %v1340 = vsel %vm1324, %v1292, 0.0
      %v1341 = vsel %vm1325, %v1293, 0.0
      %v1342 = vsel %vm1326, %v1294, 0.0
      %v1343 = vsel %vm1327, %v1295, 0.0
      %v1344 = vsel %vm1328, %v1296, 0.0
      %v1345 = vsel %vm1329, %v1297, 0.0
      %1346 = vst.msk [vmem:[%s5] sm:$0xff] %vm798, %v1330
      %1347 = vst.msk [vmem:[%s5 + $0x8] sm:$0xff] %vm798, %v1331
      %1348 = vst.msk [vmem:[%s5 + $0x10] sm:$0xff] %vm798, %v1332
      %1349 = vst.msk [vmem:[%s5 + $0x18] sm:$0xff] %vm798, %v1333
      %1350 = vst.msk [vmem:[%s5 + $0x20] sm:$0xff] %vm798, %v1334
      %1351 = vst.msk [vmem:[%s5 + $0x28] sm:$0xff] %vm798, %v1335
      %1352 = vst.msk [vmem:[%s5 + $0x30] sm:$0xff] %vm798, %v1336
      %1353 = vst.msk [vmem:[%s5 + $0x38] sm:$0xff] %vm798, %v1337
      %1354 = vst.msk [vmem:[%s5 + $0x40] sm:$0xff] %vm798, %v1338
      %1355 = vst.msk [vmem:[%s5 + $0x48] sm:$0xff] %vm798, %v1339
      %1356 = vst.msk [vmem:[%s5 + $0x50] sm:$0xff] %vm798, %v1340
      %1357 = vst.msk [vmem:[%s5 + $0x58] sm:$0xff] %vm798, %v1341
      %1358 = vst.msk [vmem:[%s5 + $0x60] sm:$0xff] %vm798, %v1342
      %1359 = vst.msk [vmem:[%s5 + $0x68] sm:$0xff] %vm798, %v1343
      %1360 = vst.msk [vmem:[%s5 + $0x70] sm:$0xff] %vm798, %v1344
      %1361 = vst.msk [vmem:[%s5 + $0x78] sm:$0xff] %vm798, %v1345
    $region33: #{tpu_custom_call.1} parent=1 // pred_fallthru
      _
    // Predicated region
    $region34: #{tpu_custom_call.1} parent=1 // pred_check
      _
    $region35: #{tpu_custom_call.1} parent=1 // pred_check_branch
      %1363 = sbr.rel (0) target = $region37
    $region36: #{tpu_custom_call.1} parent=1 // pred_region
      _
    $region37: #{tpu_custom_call.1} parent=1 // pred_fallthru
      _
    // Predicated region
    $region38: #{tpu_custom_call.1} parent=1 // pred_check
      _
    $region39: #{tpu_custom_call.1} parent=1 // pred_check_branch
      %1365 = sbr.rel (0) target = $region41
    $region40: #{tpu_custom_call.1} parent=1 // pred_region
      _
    $region41: #{tpu_custom_call.1} parent=1 // pred_fallthru
      _
    %1366 = vsyncpa [#allocation7], 1

</llo_original>
